<compile_context>
chip_gen: v7x
topology: tpu7x:2x2x1
jax: 0.10.0
libtpu: 0.0.40
codegen_flags: <defaults>
</compile_context>

<pallas_src>
import functools

import jax
import jax.numpy as jnp
from jax.experimental import pallas as pl
from jax.experimental.pallas import tpu as pltpu


# --------------------------------------------------------------------------- #
# Helpers
# --------------------------------------------------------------------------- #
def _round_up(x, m):
    return ((x + m - 1) // m) * m


_MIN_SCOPED_VMEM = 16 * 2**20   # most conservative scoped-VMEM default (v5e)
_MAX_VMEM_LIMIT = 64 * 2**20    # v7x physical per-TensorCore VMEM


def _vmem_limit_bytes(tm, tk, f_in, f_out, out_bytes):
    """Rough double-buffered VMEM footprint; only override the compiler default
    when the requested tiles would not fit the smallest (v5e) scoped budget."""
    adj = 2 * tm * tk * 2            # bf16 adjacency tile, double-buffered
    x = 2 * tk * f_in * 2            # bf16 feature tile, double-buffered
    w = 2 * f_in * f_out * 2         # resident bf16 weight (conservative x2)
    b = 2 * f_out * 4                # f32 bias
    out = 2 * tm * f_out * out_bytes # output tile, double-buffered
    acc = tm * f_out * 4             # f32 accumulator scratch
    need = 2 * (adj + x + w + b + out + acc) + (2 << 20)
    if need <= _MIN_SCOPED_VMEM:
        return None
    return int(min(need, _MAX_VMEM_LIMIT))


# --------------------------------------------------------------------------- #
# Fused GCN layer kernel:  out[i] = act( sum_k A[i,k] @ (x[k] @ W) + b )
# --------------------------------------------------------------------------- #
def _fused_gcn_kernel(adj_ref, x_ref, w_ref, b_ref, out_ref, acc_ref, *, apply_relu):
    k = pl.program_id(1)

    @pl.when(k == 0)
    def _():
        acc_ref[...] = jnp.zeros_like(acc_ref)

    # Tiny projection fused into the reduction loop (W is VMEM-resident).
    xw = jnp.dot(x_ref[...], w_ref[...], preferred_element_type=jnp.float32)

    # Dominant adjacency matmul, accumulated in f32.
    acc_ref[...] += jnp.dot(
        adj_ref[...], xw.astype(jnp.bfloat16), preferred_element_type=jnp.float32
    )

    @pl.when(k == pl.num_programs(1) - 1)
    def _():
        r = acc_ref[...] + b_ref[...]
        if apply_relu:
            r = jnp.maximum(r, 0.0)
        out_ref[...] = r.astype(out_ref.dtype)


def _gcn_layer(adj_p, x_p, w_p, b_p, *, apply_relu, out_dtype, tm, tk):
    """Fused GCNConv: A_hat @ (X @ W) + b (optional ReLU), tiled (row, reduction)."""
    n_pad = adj_p.shape[0]
    f_in = x_p.shape[1]
    f_out = w_p.shape[1]

    kernel = functools.partial(_fused_gcn_kernel, apply_relu=apply_relu)
    cp_kwargs = dict(dimension_semantics=("parallel", "arbitrary"))
    vlim = _vmem_limit_bytes(tm, tk, f_in, f_out, jnp.dtype(out_dtype).itemsize)
    if vlim is not None:
        cp_kwargs["vmem_limit_bytes"] = vlim

    return pl.pallas_call(
        kernel,
        out_shape=jax.ShapeDtypeStruct((n_pad, f_out), out_dtype),
        grid=(n_pad // tm, n_pad // tk),
        in_specs=[
            pl.BlockSpec((tm, tk), lambda i, k: (i, k)),       # adjacency tile
            pl.BlockSpec((tk, f_in), lambda i, k: (k, 0)),     # raw feature tile
            pl.BlockSpec((f_in, f_out), lambda i, k: (0, 0)),  # resident weight
            pl.BlockSpec((1, f_out), lambda i, k: (0, 0)),     # bias (lane-dense)
        ],
        out_specs=pl.BlockSpec((tm, f_out), lambda i, k: (i, 0)),
        scratch_shapes=[pltpu.VMEM((tm, f_out), jnp.float32)],
        compiler_params=pltpu.CompilerParams(**cp_kwargs),
    )(adj_p, x_p, w_p, b_p)


# --------------------------------------------------------------------------- #
# One-time (per-graph / per-model) preparation: hoisted out of the forward path
# --------------------------------------------------------------------------- #
def prepare_graph(adj_hat, *, tile_cap=1024):
    """Cast A_hat to bf16 FIRST, then pad N up to a multiple of the tile, so no
    n_pad^2 f32 intermediate is materialized and tiles never degrade."""
    n = adj_hat.shape[0]
    n_128 = _round_up(n, 128)
    tm = min(int(tile_cap), n_128)           # tile_cap must be a multiple of 128
    n_pad = _round_up(n, tm)
    adj_bf = adj_hat.astype(jnp.bfloat16)
    adj_p = jnp.pad(adj_bf, ((0, n_pad - n), (0, n_pad - n)))
    return adj_p, tm


def prepare_features(x, n_pad):
    """bf16 node features, zero-padded to [n_pad, Fp] (Fp multiple of 16)."""
    n, f = x.shape
    fp = _round_up(f, 16)
    x_p = jnp.zeros((n_pad, fp), jnp.bfloat16).at[:n, :f].set(x.astype(jnp.bfloat16))
    return x_p


def prepare_params(w1, b1, w2, b2):
    """Zero-pad weights/biases so every kernel output is lane-dense (mult. of 128)."""
    f, h = w1.shape
    c = w2.shape[1]
    fp = _round_up(f, 16)
    hp = _round_up(h, 128)
    cp = _round_up(c, 128)
    b1 = jnp.asarray(b1, jnp.float32).reshape(1, -1)
    b2 = jnp.asarray(b2, jnp.float32).reshape(1, -1)
    w1_p = jnp.zeros((fp, hp), jnp.bfloat16).at[:f, :h].set(w1.astype(jnp.bfloat16))
    b1_p = jnp.zeros((1, hp), jnp.float32).at[:, :h].set(b1)
    w2_p = jnp.zeros((hp, cp), jnp.bfloat16).at[:h, :c].set(w2.astype(jnp.bfloat16))
    b2_p = jnp.zeros((1, cp), jnp.float32).at[:, :c].set(b2)
    return (w1_p, b1_p, w2_p, b2_p)


def gnn_forward_prepared(adj_p, x_p, params, *, tm):
    """Forward on already-padded/cast inputs (the hot path: 2 pallas_calls)."""
    w1_p, b1_p, w2_p, b2_p = params
    tk = tm
    # GCN layer 1: h = relu(A_hat @ (X @ W1) + b1)
    h = _gcn_layer(adj_p, x_p, w1_p, b1_p,
                   apply_relu=True, out_dtype=jnp.bfloat16, tm=tm, tk=tk)
    # Dropout(p=0.5): identity in eval mode.
    # GCN layer 2: out = A_hat @ (h @ W2) + b2
    out = _gcn_layer(adj_p, h, w2_p, b2_p,
                     apply_relu=False, out_dtype=jnp.float32, tm=tm, tk=tk)
    return out


def gnn_forward(adj_hat, x, w1, b1, w2, b2, *, tile_cap=1024):
    """Convenience wrapper: prep (ideally done once per graph) + forward + slice."""
    n, _ = x.shape
    c = w2.shape[1]
    adj_p, tm = prepare_graph(adj_hat, tile_cap=tile_cap)
    x_p = prepare_features(x, adj_p.shape[0])
    params = prepare_params(w1, b1, w2, b2)
    out_p = gnn_forward_prepared(adj_p, x_p, params, tm=tm)
    return out_p[:n, :c]


# --------------------------------------------------------------------------- #
# Host-side graph preprocessing (matches PyG GCNConv gcn_norm semantics)
# --------------------------------------------------------------------------- #
def build_normalized_adjacency(edge_index, num_nodes):
    """Dense A_hat = D^-1/2 (A + I) D^-1/2 with scatter-add edge weights and
    remaining self-loops (PyG GCNConv defaults)."""
    src = edge_index[0]
    dst = edge_index[1]
    A = jnp.zeros((num_nodes, num_nodes), dtype=jnp.float32)
    A = A.at[dst, src].add(1.0)                       # duplicates sum
    diag = jnp.diag(A)
    A = A + jnp.diag(jnp.where(diag > 0, 0.0, 1.0))   # add *remaining* self loops
    deg = jnp.sum(A, axis=1)
    dinv = jnp.where(deg > 0, 1.0 / jnp.sqrt(deg), 0.0)
    return dinv[:, None] * A * dinv[None, :]


# --------------------------------------------------------------------------- #
# Demo / correctness check
# --------------------------------------------------------------------------- #
if __name__ == "__main__":
    # Small synthetic "Cora-like" problem.
    N = 700         # number of nodes
    F = 16          # num_features
    H = 32          # hidden_channels
    C = 8           # num_classes
    E = 4000        # number of directed edges

    key = jax.random.PRNGKey(0)
    k_x, k_e1, k_e2, k_w1, k_b1, k_w2, k_b2 = jax.random.split(key, 7)

    # Node features (row-normalized like NormalizeFeatures()).
    x = jax.random.uniform(k_x, (N, F), dtype=jnp.float32)
    x = x / jnp.maximum(jnp.sum(x, axis=1, keepdims=True), 1e-12)

    # Deterministic random edge_index [2, E].
    src = jax.random.randint(k_e1, (E,), 0, N)
    dst = jax.random.randint(k_e2, (E,), 0, N)
    edge_index = jnp.stack([src, dst], axis=0)

    adj_hat = build_normalized_adjacency(edge_index, N)

    # Parameter init (glorot-style weights, small biases).
    w1 = jax.random.normal(k_w1, (F, H), dtype=jnp.float32) * (2.0 / (F + H)) ** 0.5
    b1 = jax.random.normal(k_b1, (1, H), dtype=jnp.float32) * 0.05
    w2 = jax.random.normal(k_w2, (H, C), dtype=jnp.float32) * (2.0 / (H + C)) ** 0.5
    b2 = jax.random.normal(k_b2, (1, C), dtype=jnp.float32) * 0.05

    # Pure-JAX reference with the same bf16-operand / f32-accumulate precision.
    def _bf(a):
        return a.astype(jnp.bfloat16)

    xw1_r = jnp.dot(_bf(x), _bf(w1), preferred_element_type=jnp.float32)
    h_r = jnp.dot(_bf(adj_hat), _bf(xw1_r), preferred_element_type=jnp.float32) + b1
    h_r = jnp.maximum(h_r, 0.0)
    hw2_r = jnp.dot(_bf(h_r), _bf(w2), preferred_element_type=jnp.float32)
    ref = jnp.dot(_bf(adj_hat), _bf(hw2_r), preferred_element_type=jnp.float32) + b2

    # Default (large-tile) path: N=700 -> n_pad=768, single (768,768) tile.
    out = gnn_forward(adj_hat, x, w1, b1, w2, b2)
    jax.block_until_ready(out)
    assert out.shape == (N, C)
    assert jnp.allclose(out, ref, atol=1e-2, rtol=1e-2), float(
        jnp.max(jnp.abs(out - ref))
    )

    # Small-tile path: exercises the multi-tile reduction loop / accumulator
    # (n_pad=768, tm=tk=256 -> 3x3 grid).
    out_small = gnn_forward(adj_hat, x, w1, b1, w2, b2, tile_cap=256)
    jax.block_until_ready(out_small)
    assert jnp.allclose(out_small, ref, atol=1e-2, rtol=1e-2), float(
        jnp.max(jnp.abs(out_small - ref))
    )
    assert jnp.allclose(out, out_small, atol=1e-2, rtol=1e-2)

    print("KERNEL_OK")
</pallas_src>

<mosaic_0001>
module attributes {stable_mosaic.version = 11 : i64} {
  func.func @_fused_gcn_kernel(%arg0: i32, %arg1: i32, %arg2: memref<768x768xbf16, #tpu.memory_space<vmem>>, %arg3: memref<768x16xbf16, #tpu.memory_space<vmem>>, %arg4: memref<16x128xbf16, #tpu.memory_space<vmem>>, %arg5: memref<1x128xf32, #tpu.memory_space<vmem>>, %arg6: memref<768x128xbf16, #tpu.memory_space<vmem>>, %arg7: memref<768x128xf32, #tpu.memory_space<vmem>>) attributes {dimension_semantics = [#tpu.dimension_semantics<parallel>, #tpu.dimension_semantics<arbitrary>], iteration_bounds = array<i64: 1, 1>, scalar_prefetch = 0 : i64, scratch_operands = 1 : i64, tpu.core_type = #tpu.core_type<tc>, window_params = [{transform_indices = @transform_0, window_bounds = array<i64: 768, 768>}, {transform_indices = @transform_1, window_bounds = array<i64: 768, 16>}, {pipeline_mode = #tpu.pipeline_mode<synchronous>, transform_indices = @transform_2, window_bounds = array<i64: 16, 128>}, {pipeline_mode = #tpu.pipeline_mode<synchronous>, transform_indices = @transform_3, window_bounds = array<i64: 1, 128>}, {transform_indices = @transform_4, window_bounds = array<i64: 768, 128>}]} {
    %c0_i32 = arith.constant 0 : i32
    %0 = arith.cmpi eq, %arg1, %c0_i32 : i32
    %1 = arith.extui %0 : i1 to i32
    %c0_i32_0 = arith.constant 0 : i32
    %2 = arith.cmpi ne, %1, %c0_i32_0 : i32
    scf.if %2 {
      %cst_13 = arith.constant 0.000000e+00 : f32
      %15 = vector.broadcast %cst_13 : f32 to vector<768x128xf32>
      %c0_14 = arith.constant 0 : index
      %c0_15 = arith.constant 0 : index
      %16 = vector.load %arg7[%c0_14, %c0_15] : memref<768x128xf32, #tpu.memory_space<vmem>>, vector<768x128xf32>
      tpu.vector_store %arg7[%c0_14, %c0_15], %15 {strides = array<i32>} : memref<768x128xf32, #tpu.memory_space<vmem>>, vector<768x128xf32>,
    } else {
    }
    %c0 = arith.constant 0 : index
    %c0_1 = arith.constant 0 : index
    %3 = vector.load %arg3[%c0, %c0_1] : memref<768x16xbf16, #tpu.memory_space<vmem>>, vector<768x16xbf16>
    %c0_2 = arith.constant 0 : index
    %c0_3 = arith.constant 0 : index
    %4 = vector.load %arg4[%c0_2, %c0_3] : memref<16x128xbf16, #tpu.memory_space<vmem>>, vector<16x128xbf16>
    %cst = arith.constant dense<0.000000e+00> : vector<768x128xf32>
    %5 = tpu.matmul %3, %4, %cst {dimension_numbers = #tpu.dot_dimension_numbers<[1], [0], [0], [1], [0, 0, 1, 1], [], []>} : vector<768x16xbf16>, vector<16x128xbf16>, vector<768x128xf32> -> vector<768x128xf32>
    %c0_4 = arith.constant 0 : index
    %c0_5 = arith.constant 0 : index
    %6 = vector.load %arg7[%c0_4, %c0_5] : memref<768x128xf32, #tpu.memory_space<vmem>>, vector<768x128xf32>
    %c0_6 = arith.constant 0 : index
    %c0_7 = arith.constant 0 : index
    %7 = vector.load %arg2[%c0_6, %c0_7] : memref<768x768xbf16, #tpu.memory_space<vmem>>, vector<768x768xbf16>
    %8 = arith.truncf %5 : vector<768x128xf32> to vector<768x128xbf16>
    %cst_8 = arith.constant dense<0.000000e+00> : vector<768x128xf32>
    %9 = tpu.matmul %7, %8, %cst_8 {dimension_numbers = #tpu.dot_dimension_numbers<[1], [0], [0], [1], [0, 0, 1, 1], [], []>} : vector<768x768xbf16>, vector<768x128xbf16>, vector<768x128xf32> -> vector<768x128xf32>
    %10 = arith.addf %6, %9 : vector<768x128xf32>
    %c0_9 = arith.constant 0 : index
    %c0_10 = arith.constant 0 : index
    %11 = vector.load %arg7[%c0_9, %c0_10] : memref<768x128xf32, #tpu.memory_space<vmem>>, vector<768x128xf32>
    tpu.vector_store %arg7[%c0_9, %c0_10], %10 {strides = array<i32>} : memref<768x128xf32, #tpu.memory_space<vmem>>, vector<768x128xf32>,
    %c0_i32_11 = arith.constant 0 : i32
    %12 = arith.cmpi eq, %arg1, %c0_i32_11 : i32
    %13 = arith.extui %12 : i1 to i32
    %c0_i32_12 = arith.constant 0 : i32
    %14 = arith.cmpi ne, %13, %c0_i32_12 : i32
    scf.if %14 {
      %c0_13 = arith.constant 0 : index
      %c0_14 = arith.constant 0 : index
      %15 = vector.load %arg7[%c0_13, %c0_14] : memref<768x128xf32, #tpu.memory_space<vmem>>, vector<768x128xf32>
      %c0_15 = arith.constant 0 : index
      %c0_16 = arith.constant 0 : index
      %16 = vector.load %arg5[%c0_15, %c0_16] : memref<1x128xf32, #tpu.memory_space<vmem>>, vector<1x128xf32>
      %17 = vector.broadcast %16 : vector<1x128xf32> to vector<768x128xf32>
      %18 = arith.addf %15, %17 : vector<768x128xf32>
      %cst_17 = arith.constant 0.000000e+00 : f32
      %19 = vector.broadcast %cst_17 : f32 to vector<768x128xf32>
      %20 = arith.maximumf %18, %19 : vector<768x128xf32>
      %21 = arith.truncf %20 : vector<768x128xf32> to vector<768x128xbf16>
      %c0_18 = arith.constant 0 : index
      %c0_19 = arith.constant 0 : index
      %22 = vector.load %arg6[%c0_18, %c0_19] : memref<768x128xbf16, #tpu.memory_space<vmem>>, vector<768x128xbf16>
      tpu.vector_store %arg6[%c0_18, %c0_19], %21 {strides = array<i32>} : memref<768x128xbf16, #tpu.memory_space<vmem>>, vector<768x128xbf16>,
    } else {
    }
    return
  }
  func.func @transform_0(%arg0: i32, %arg1: i32) -> (i32, i32) {
    %c0_i32 = arith.constant 0 : i32
    return %arg0, %arg1 : i32, i32
  }
  func.func @transform_1(%arg0: i32, %arg1: i32) -> (i32, i32) {
    %c0_i32 = arith.constant 0 : i32
    %c0_i32_0 = arith.constant 0 : i32
    return %arg1, %c0_i32 : i32, i32
  }
  func.func @transform_2(%arg0: i32, %arg1: i32) -> (i32, i32) {
    %c0_i32 = arith.constant 0 : i32
    %c0_i32_0 = arith.constant 0 : i32
    %c0_i32_1 = arith.constant 0 : i32
    return %c0_i32, %c0_i32_0 : i32, i32
  }
  func.func @transform_3(%arg0: i32, %arg1: i32) -> (i32, i32) {
    %c0_i32 = arith.constant 0 : i32
    %c0_i32_0 = arith.constant 0 : i32
    %c0_i32_1 = arith.constant 0 : i32
    return %c0_i32, %c0_i32_0 : i32, i32
  }
  func.func @transform_4(%arg0: i32, %arg1: i32) -> (i32, i32) {
    %c0_i32 = arith.constant 0 : i32
    %c0_i32_0 = arith.constant 0 : i32
    return %arg0, %c0_i32 : i32, i32
  }
}

</mosaic_0001>

<llo_original>
// kernel: tpu_custom_call.1
$region0: #{tpu_custom_call.1}
  #allocation0 [shape = 'u32[]', space=smem, size = 0x4, offset = 0x4, fixed_abs, tag = 'smem constant byte address 0x4 - core index']
  #allocation1 [shape = 'u32[144,128]{1,0:T(1,128)}', space=vmem, size = 0x12000, scoped, tag = 'internal scratch']
  #allocation2 [shape = 'f32[768,128]{1,0:T(8,128)}', space=vmem, size = 0x60000, scoped, tag = 'scratch operand']
  %s0 = inlined_call_operand.hbm [shape: bf16[768,768], index: 0, kind: input, shape index: {}]
  %s1 = inlined_call_operand.vmem [shape: bf16[768,16], index: 1, kind: input, shape index: {}]
  %s2 = inlined_call_operand.hbm [shape: bf16[16,128], index: 2, kind: input, shape index: {}]
  %s3 = inlined_call_operand.hbm [shape: f32[1,128], index: 3, kind: input, shape index: {}]
  %s4 = inlined_call_operand.hbm [shape: bf16[768,128], index: 4, kind: output, shape index: {}]
  %s5 = sld [smem:[#allocation0]]
  $region46: #{tpu_custom_call.1} parent=0
    _
  %s7 = ssub.s32 1, %s5
  %s8 = scalar_select 0, %s7, %s5
  $region1: #{tpu_custom_call.1} parent=0
    #allocation3 [shape = 'u8[1179648]{0}', space=vmem, size = 0x120000, scoped, tag = 'input window, operand 0, single buffered']
    #allocation4 [shape = 's32[1]{0}', space=sflag, size = 0x4, scoped, tag = 'scoped memory for tpu_custom_call.1']
    #allocation5 [shape = 's32[1]{0}', space=sflag, size = 0x4, scoped, tag = 'scoped memory for tpu_custom_call.1']
    #allocation6 [shape = 'u8[4096]{0}', space=vmem, size = 0x1000, scoped, tag = 'input window, operand 2, single buffered']
    #allocation7 [shape = 's32[1]{0}', space=sflag, size = 0x4, scoped, tag = 'scoped memory for tpu_custom_call.1']
    #allocation8 [shape = 'u8[512]{0}', space=vmem, size = 0x400, scoped, tag = 'input window, operand 3, single buffered']
    #allocation9 [shape = 'u8[196608]{0}', space=vmem, size = 0x30000, scoped, tag = 'output window, operand 0, single buffered']
    %9 = vsyncpa [#allocation4], 0
    %10 = vsyncpa [#allocation7], 0
    %11 = vsyncpa [#allocation5], 0
    // Predicated region
    $region2: #{tpu_custom_call.1} parent=1 // pred_check
      _
    $region3: #{tpu_custom_call.1} parent=1 // pred_check_branch
      %13 = sbr.rel (0) target = $region5
    $region4: #{tpu_custom_call.1} parent=1 // pred_region
      %s15 = ssub.s32 36864, 36864
      %16 = vsyncadd [#allocation4], %s15
      %s17 = sshll.u32 [#allocation3], 4
      %s18 = int_to_ptr.vmem [resolvable:$true] %s17
      %23 = dma.hbm_to_vmem [thread:$0]  %s0, 36864, %s18, [#allocation4], 384, 384, 24
    $region5: #{tpu_custom_call.1} parent=1 // pred_fallthru
      _
    // Predicated region
    $region6: #{tpu_custom_call.1} parent=1 // pred_check
      _
    $region7: #{tpu_custom_call.1} parent=1 // pred_check_branch
      %25 = sbr.rel (0) target = $region9
    $region8: #{tpu_custom_call.1} parent=1 // pred_region
      _
    $region9: #{tpu_custom_call.1} parent=1 // pred_fallthru
      _
    // Predicated region
    $region10: #{tpu_custom_call.1} parent=1 // pred_check
      _
    $region11: #{tpu_custom_call.1} parent=1 // pred_check_branch
      %27 = sbr.rel (0) target = $region13
    $region12: #{tpu_custom_call.1} parent=1 // pred_region
      %s29 = ssub.s32 128, 128
      %30 = vsyncadd [#allocation7], %s29
      %s31 = sshll.u32 [#allocation6], 4
      %s32 = int_to_ptr.vmem [resolvable:$true] %s31
      %37 = dma.hbm_to_vmem [thread:$0]  %s2, 128, %s32, [#allocation7], 64, 64, 4
    $region13: #{tpu_custom_call.1} parent=1 // pred_fallthru
      _
    // Predicated region
    $region14: #{tpu_custom_call.1} parent=1 // pred_check
      _
    $region15: #{tpu_custom_call.1} parent=1 // pred_check_branch
      %39 = sbr.rel (0) target = $region17
    $region16: #{tpu_custom_call.1} parent=1 // pred_region
      %s41 = ssub.s32 16, 16
      %42 = vsyncadd [#allocation7], %s41
      %s44 = sshll.u32 [#allocation8], 4
      %s45 = int_to_ptr.vmem [resolvable:$true] %s44
      %47 = dma.hbm_to_vmem [thread:$0]  %s3, 16, %s45, [#allocation7]
    $region17: #{tpu_custom_call.1} parent=1 // pred_fallthru
      _
    // Predicated region
    $region18: #{tpu_custom_call.1} parent=1 // pred_check
      _
    $region19: #{tpu_custom_call.1} parent=1 // pred_check_branch
      %49 = sbr.rel (0) target = $region21
    $region20: #{tpu_custom_call.1} parent=1 // pred_region
      %50 = dma.done [#allocation4], 36864
    $region21: #{tpu_custom_call.1} parent=1 // pred_fallthru
      _
    // Predicated region
    $region22: #{tpu_custom_call.1} parent=1 // pred_check
      _
    $region23: #{tpu_custom_call.1} parent=1 // pred_check_branch
      %52 = sbr.rel (0) target = $region25
    $region24: #{tpu_custom_call.1} parent=1 // pred_region
      %53 = dma.done [#allocation7], 128
    $region25: #{tpu_custom_call.1} parent=1 // pred_fallthru
      _
    // Predicated region
    $region26: #{tpu_custom_call.1} parent=1 // pred_check
      _
    $region27: #{tpu_custom_call.1} parent=1 // pred_check_branch
      %55 = sbr.rel (0) target = $region29
    $region28: #{tpu_custom_call.1} parent=1 // pred_region
      %56 = dma.done [#allocation7], 16
    $region29: #{tpu_custom_call.1} parent=1 // pred_fallthru
      _
    %p58 = scmp.eq.s32.totalorder 0, 0
    // Predicated region
    $region30: #{tpu_custom_call.1} parent=1 // pred_check
      %p59 = pneg %p58
    $region31: #{tpu_custom_call.1} parent=1 // pred_check_branch
      %61 = sbr.rel (%p59) target = $region33
    $region32: #{tpu_custom_call.1} parent=1 // pred_region
      %62 = vst [vmem:[#allocation2] sm:$0xff] 0.0
      %63 = vst [vmem:[#allocation2 + $0x8] sm:$0xff] 0.0
      %64 = vst [vmem:[#allocation2 + $0x10] sm:$0xff] 0.0
      %65 = vst [vmem:[#allocation2 + $0x18] sm:$0xff] 0.0
      %66 = vst [vmem:[#allocation2 + $0x20] sm:$0xff] 0.0
      %67 = vst [vmem:[#allocation2 + $0x28] sm:$0xff] 0.0
      %68 = vst [vmem:[#allocation2 + $0x30] sm:$0xff] 0.0
      %69 = vst [vmem:[#allocation2 + $0x38] sm:$0xff] 0.0
      %70 = vst [vmem:[#allocation2 + $0x40] sm:$0xff] 0.0
      %71 = vst [vmem:[#allocation2 + $0x48] sm:$0xff] 0.0
      %72 = vst [vmem:[#allocation2 + $0x50] sm:$0xff] 0.0
      %73 = vst [vmem:[#allocation2 + $0x58] sm:$0xff] 0.0
      %74 = vst [vmem:[#allocation2 + $0x60] sm:$0xff] 0.0
      %75 = vst [vmem:[#allocation2 + $0x68] sm:$0xff] 0.0
      %76 = vst [vmem:[#allocation2 + $0x70] sm:$0xff] 0.0
      %77 = vst [vmem:[#allocation2 + $0x78] sm:$0xff] 0.0
      %78 = vst [vmem:[#allocation2 + $0x80] sm:$0xff] 0.0
      %79 = vst [vmem:[#allocation2 + $0x88] sm:$0xff] 0.0
      %80 = vst [vmem:[#allocation2 + $0x90] sm:$0xff] 0.0
      %81 = vst [vmem:[#allocation2 + $0x98] sm:$0xff] 0.0
      %82 = vst [vmem:[#allocation2 + $0xa0] sm:$0xff] 0.0
      %83 = vst [vmem:[#allocation2 + $0xa8] sm:$0xff] 0.0
      %84 = vst [vmem:[#allocation2 + $0xb0] sm:$0xff] 0.0
      %85 = vst [vmem:[#allocation2 + $0xb8] sm:$0xff] 0.0
      %86 = vst [vmem:[#allocation2 + $0xc0] sm:$0xff] 0.0
      %87 = vst [vmem:[#allocation2 + $0xc8] sm:$0xff] 0.0
      %88 = vst [vmem:[#allocation2 + $0xd0] sm:$0xff] 0.0
      %89 = vst [vmem:[#allocation2 + $0xd8] sm:$0xff] 0.0
      %90 = vst [vmem:[#allocation2 + $0xe0] sm:$0xff] 0.0
      %91 = vst [vmem:[#allocation2 + $0xe8] sm:$0xff] 0.0
      %92 = vst [vmem:[#allocation2 + $0xf0] sm:$0xff] 0.0
      %93 = vst [vmem:[#allocation2 + $0xf8] sm:$0xff] 0.0
      %94 = vst [vmem:[#allocation2 + $0x100] sm:$0xff] 0.0
      %95 = vst [vmem:[#allocation2 + $0x108] sm:$0xff] 0.0
      %96 = vst [vmem:[#allocation2 + $0x110] sm:$0xff] 0.0
      %97 = vst [vmem:[#allocation2 + $0x118] sm:$0xff] 0.0
      %98 = vst [vmem:[#allocation2 + $0x120] sm:$0xff] 0.0
      %99 = vst [vmem:[#allocation2 + $0x128] sm:$0xff] 0.0
      %100 = vst [vmem:[#allocation2 + $0x130] sm:$0xff] 0.0
      %101 = vst [vmem:[#allocation2 + $0x138] sm:$0xff] 0.0
      %102 = vst [vmem:[#allocation2 + $0x140] sm:$0xff] 0.0
      %103 = vst [vmem:[#allocation2 + $0x148] sm:$0xff] 0.0
      %104 = vst [vmem:[#allocation2 + $0x150] sm:$0xff] 0.0
      %105 = vst [vmem:[#allocation2 + $0x158] sm:$0xff] 0.0
      %106 = vst [vmem:[#allocation2 + $0x160] sm:$0xff] 0.0
      %107 = vst [vmem:[#allocation2 + $0x168] sm:$0xff] 0.0
      %108 = vst [vmem:[#allocation2 + $0x170] sm:$0xff] 0.0
      %109 = vst [vmem:[#allocation2 + $0x178] sm:$0xff] 0.0
      %110 = vst [vmem:[#allocation2 + $0x180] sm:$0xff] 0.0
      %111 = vst [vmem:[#allocation2 + $0x188] sm:$0xff] 0.0
      %112 = vst [vmem:[#allocation2 + $0x190] sm:$0xff] 0.0
      %113 = vst [vmem:[#allocation2 + $0x198] sm:$0xff] 0.0
      %114 = vst [vmem:[#allocation2 + $0x1a0] sm:$0xff] 0.0
      %115 = vst [vmem:[#allocation2 + $0x1a8] sm:$0xff] 0.0
      %116 = vst [vmem:[#allocation2 + $0x1b0] sm:$0xff] 0.0
      %117 = vst [vmem:[#allocation2 + $0x1b8] sm:$0xff] 0.0
      %118 = vst [vmem:[#allocation2 + $0x1c0] sm:$0xff] 0.0
      %119 = vst [vmem:[#allocation2 + $0x1c8] sm:$0xff] 0.0
      %120 = vst [vmem:[#allocation2 + $0x1d0] sm:$0xff] 0.0
      %121 = vst [vmem:[#allocation2 + $0x1d8] sm:$0xff] 0.0
      %122 = vst [vmem:[#allocation2 + $0x1e0] sm:$0xff] 0.0
      %123 = vst [vmem:[#allocation2 + $0x1e8] sm:$0xff] 0.0
      %124 = vst [vmem:[#allocation2 + $0x1f0] sm:$0xff] 0.0
      %125 = vst [vmem:[#allocation2 + $0x1f8] sm:$0xff] 0.0
      %126 = vst [vmem:[#allocation2 + $0x200] sm:$0xff] 0.0
      %127 = vst [vmem:[#allocation2 + $0x208] sm:$0xff] 0.0
      %128 = vst [vmem:[#allocation2 + $0x210] sm:$0xff] 0.0
      %129 = vst [vmem:[#allocation2 + $0x218] sm:$0xff] 0.0
      %130 = vst [vmem:[#allocation2 + $0x220] sm:$0xff] 0.0
      %131 = vst [vmem:[#allocation2 + $0x228] sm:$0xff] 0.0
      %132 = vst [vmem:[#allocation2 + $0x230] sm:$0xff] 0.0
      %133 = vst [vmem:[#allocation2 + $0x238] sm:$0xff] 0.0
      %134 = vst [vmem:[#allocation2 + $0x240] sm:$0xff] 0.0
      %135 = vst [vmem:[#allocation2 + $0x248] sm:$0xff] 0.0
      %136 = vst [vmem:[#allocation2 + $0x250] sm:$0xff] 0.0
      %137 = vst [vmem:[#allocation2 + $0x258] sm:$0xff] 0.0
      %138 = vst [vmem:[#allocation2 + $0x260] sm:$0xff] 0.0
      %139 = vst [vmem:[#allocation2 + $0x268] sm:$0xff] 0.0
      %140 = vst [vmem:[#allocation2 + $0x270] sm:$0xff] 0.0
      %141 = vst [vmem:[#allocation2 + $0x278] sm:$0xff] 0.0
      %142 = vst [vmem:[#allocation2 + $0x280] sm:$0xff] 0.0
      %143 = vst [vmem:[#allocation2 + $0x288] sm:$0xff] 0.0
      %144 = vst [vmem:[#allocation2 + $0x290] sm:$0xff] 0.0
      %145 = vst [vmem:[#allocation2 + $0x298] sm:$0xff] 0.0
      %146 = vst [vmem:[#allocation2 + $0x2a0] sm:$0xff] 0.0
      %147 = vst [vmem:[#allocation2 + $0x2a8] sm:$0xff] 0.0
      %148 = vst [vmem:[#allocation2 + $0x2b0] sm:$0xff] 0.0
      %149 = vst [vmem:[#allocation2 + $0x2b8] sm:$0xff] 0.0
      %150 = vst [vmem:[#allocation2 + $0x2c0] sm:$0xff] 0.0
      %151 = vst [vmem:[#allocation2 + $0x2c8] sm:$0xff] 0.0
      %152 = vst [vmem:[#allocation2 + $0x2d0] sm:$0xff] 0.0
      %153 = vst [vmem:[#allocation2 + $0x2d8] sm:$0xff] 0.0
      %154 = vst [vmem:[#allocation2 + $0x2e0] sm:$0xff] 0.0
      %155 = vst [vmem:[#allocation2 + $0x2e8] sm:$0xff] 0.0
      %156 = vst [vmem:[#allocation2 + $0x2f0] sm:$0xff] 0.0
      %157 = vst [vmem:[#allocation2 + $0x2f8] sm:$0xff] 0.0
    $region33: #{tpu_custom_call.1} parent=1 // pred_fallthru
      _
    %v158 = vld [vmem:[%s1] sm:$0xf]
    %v159 = vld [vmem:[%s1 + $0x4] sm:$0xf]
    %v160 = vld [vmem:[%s1 + $0x8] sm:$0xf]
    %v161 = vld [vmem:[%s1 + $0xc] sm:$0xf]
    %v162 = vld [vmem:[%s1 + $0x10] sm:$0xf]
    %v163 = vld [vmem:[%s1 + $0x14] sm:$0xf]
    %v164 = vld [vmem:[%s1 + $0x18] sm:$0xf]
    %v165 = vld [vmem:[%s1 + $0x1c] sm:$0xf]
    %v166 = vld [vmem:[%s1 + $0x20] sm:$0xf]
    %v167 = vld [vmem:[%s1 + $0x24] sm:$0xf]
    %v168 = vld [vmem:[%s1 + $0x28] sm:$0xf]
    %v169 = vld [vmem:[%s1 + $0x2c] sm:$0xf]
    %v170 = vld [vmem:[%s1 + $0x30] sm:$0xf]
    %v171 = vld [vmem:[%s1 + $0x34] sm:$0xf]
    %v172 = vld [vmem:[%s1 + $0x38] sm:$0xf]
    %v173 = vld [vmem:[%s1 + $0x3c] sm:$0xf]
    %v174 = vld [vmem:[%s1 + $0x40] sm:$0xf]
    %v175 = vld [vmem:[%s1 + $0x44] sm:$0xf]
    %v176 = vld [vmem:[%s1 + $0x48] sm:$0xf]
    %v177 = vld [vmem:[%s1 + $0x4c] sm:$0xf]
    %v178 = vld [vmem:[%s1 + $0x50] sm:$0xf]
    %v179 = vld [vmem:[%s1 + $0x54] sm:$0xf]
    %v180 = vld [vmem:[%s1 + $0x58] sm:$0xf]
    %v181 = vld [vmem:[%s1 + $0x5c] sm:$0xf]
    %v182 = vld [vmem:[%s1 + $0x60] sm:$0xf]
    %v183 = vld [vmem:[%s1 + $0x64] sm:$0xf]
    %v184 = vld [vmem:[%s1 + $0x68] sm:$0xf]
    %v185 = vld [vmem:[%s1 + $0x6c] sm:$0xf]
    %v186 = vld [vmem:[%s1 + $0x70] sm:$0xf]
    %v187 = vld [vmem:[%s1 + $0x74] sm:$0xf]
    %v188 = vld [vmem:[%s1 + $0x78] sm:$0xf]
    %v189 = vld [vmem:[%s1 + $0x7c] sm:$0xf]
    %v190 = vld [vmem:[%s1 + $0x80] sm:$0xf]
    %v191 = vld [vmem:[%s1 + $0x84] sm:$0xf]
    %v192 = vld [vmem:[%s1 + $0x88] sm:$0xf]
    %v193 = vld [vmem:[%s1 + $0x8c] sm:$0xf]
    %v194 = vld [vmem:[%s1 + $0x90] sm:$0xf]
    %v195 = vld [vmem:[%s1 + $0x94] sm:$0xf]
    %v196 = vld [vmem:[%s1 + $0x98] sm:$0xf]
    %v197 = vld [vmem:[%s1 + $0x9c] sm:$0xf]
    %v198 = vld [vmem:[%s1 + $0xa0] sm:$0xf]
    %v199 = vld [vmem:[%s1 + $0xa4] sm:$0xf]
    %v200 = vld [vmem:[%s1 + $0xa8] sm:$0xf]
    %v201 = vld [vmem:[%s1 + $0xac] sm:$0xf]
    %v202 = vld [vmem:[%s1 + $0xb0] sm:$0xf]
    %v203 = vld [vmem:[%s1 + $0xb4] sm:$0xf]
    %v204 = vld [vmem:[%s1 + $0xb8] sm:$0xf]
    %v205 = vld [vmem:[%s1 + $0xbc] sm:$0xf]
    %v206 = vld [vmem:[%s1 + $0xc0] sm:$0xf]
    %v207 = vld [vmem:[%s1 + $0xc4] sm:$0xf]
    %v208 = vld [vmem:[%s1 + $0xc8] sm:$0xf]
    %v209 = vld [vmem:[%s1 + $0xcc] sm:$0xf]
    %v210 = vld [vmem:[%s1 + $0xd0] sm:$0xf]
    %v211 = vld [vmem:[%s1 + $0xd4] sm:$0xf]
    %v212 = vld [vmem:[%s1 + $0xd8] sm:$0xf]
    %v213 = vld [vmem:[%s1 + $0xdc] sm:$0xf]
    %v214 = vld [vmem:[%s1 + $0xe0] sm:$0xf]
    %v215 = vld [vmem:[%s1 + $0xe4] sm:$0xf]
    %v216 = vld [vmem:[%s1 + $0xe8] sm:$0xf]
    %v217 = vld [vmem:[%s1 + $0xec] sm:$0xf]
    %v218 = vld [vmem:[%s1 + $0xf0] sm:$0xf]
    %v219 = vld [vmem:[%s1 + $0xf4] sm:$0xf]
    %v220 = vld [vmem:[%s1 + $0xf8] sm:$0xf]
    %v221 = vld [vmem:[%s1 + $0xfc] sm:$0xf]
    %v222 = vld [vmem:[%s1 + $0x100] sm:$0xf]
    %v223 = vld [vmem:[%s1 + $0x104] sm:$0xf]
    %v224 = vld [vmem:[%s1 + $0x108] sm:$0xf]
    %v225 = vld [vmem:[%s1 + $0x10c] sm:$0xf]
    %v226 = vld [vmem:[%s1 + $0x110] sm:$0xf]
    %v227 = vld [vmem:[%s1 + $0x114] sm:$0xf]
    %v228 = vld [vmem:[%s1 + $0x118] sm:$0xf]
    %v229 = vld [vmem:[%s1 + $0x11c] sm:$0xf]
    %v230 = vld [vmem:[%s1 + $0x120] sm:$0xf]
    %v231 = vld [vmem:[%s1 + $0x124] sm:$0xf]
    %v232 = vld [vmem:[%s1 + $0x128] sm:$0xf]
    %v233 = vld [vmem:[%s1 + $0x12c] sm:$0xf]
    %v234 = vld [vmem:[%s1 + $0x130] sm:$0xf]
    %v235 = vld [vmem:[%s1 + $0x134] sm:$0xf]
    %v236 = vld [vmem:[%s1 + $0x138] sm:$0xf]
    %v237 = vld [vmem:[%s1 + $0x13c] sm:$0xf]
    %v238 = vld [vmem:[%s1 + $0x140] sm:$0xf]
    %v239 = vld [vmem:[%s1 + $0x144] sm:$0xf]
    %v240 = vld [vmem:[%s1 + $0x148] sm:$0xf]
    %v241 = vld [vmem:[%s1 + $0x14c] sm:$0xf]
    %v242 = vld [vmem:[%s1 + $0x150] sm:$0xf]
    %v243 = vld [vmem:[%s1 + $0x154] sm:$0xf]
    %v244 = vld [vmem:[%s1 + $0x158] sm:$0xf]
    %v245 = vld [vmem:[%s1 + $0x15c] sm:$0xf]
    %v246 = vld [vmem:[%s1 + $0x160] sm:$0xf]
    %v247 = vld [vmem:[%s1 + $0x164] sm:$0xf]
    %v248 = vld [vmem:[%s1 + $0x168] sm:$0xf]
    %v249 = vld [vmem:[%s1 + $0x16c] sm:$0xf]
    %v250 = vld [vmem:[%s1 + $0x170] sm:$0xf]
    %v251 = vld [vmem:[%s1 + $0x174] sm:$0xf]
    %v252 = vld [vmem:[%s1 + $0x178] sm:$0xf]
    %v253 = vld [vmem:[%s1 + $0x17c] sm:$0xf]
    %v254 = vld [vmem:[#allocation6] sm:$0xf]
    %v255 = vld [vmem:[#allocation6 + $0x4] sm:$0xf]
    %v352 = vunpack.c.l.b16 %v158
    %v353 = vunpack.c.l.b16 %v159
    %v354 = vunpack.c.l.b16 %v160
    %v355 = vunpack.c.l.b16 %v161
    %v356 = vunpack.c.l.b16 %v162
    %v357 = vunpack.c.l.b16 %v163
    %v358 = vunpack.c.l.b16 %v164
    %v359 = vunpack.c.l.b16 %v165
    %v360 = vunpack.c.l.b16 %v166
    %v361 = vunpack.c.l.b16 %v167
    %v362 = vunpack.c.l.b16 %v168
    %v363 = vunpack.c.l.b16 %v169
    %v364 = vunpack.c.l.b16 %v170
    %v365 = vunpack.c.l.b16 %v171
    %v366 = vunpack.c.l.b16 %v172
    %v367 = vunpack.c.l.b16 %v173
    %v368 = vunpack.c.l.b16 %v174
    %v369 = vunpack.c.l.b16 %v175
    %v370 = vunpack.c.l.b16 %v176
    %v371 = vunpack.c.l.b16 %v177
    %v372 = vunpack.c.l.b16 %v178
    %v373 = vunpack.c.l.b16 %v179
    %v374 = vunpack.c.l.b16 %v180
    %v375 = vunpack.c.l.b16 %v181
    %v376 = vunpack.c.l.b16 %v182
    %v377 = vunpack.c.l.b16 %v183
    %v378 = vunpack.c.l.b16 %v184
    %v379 = vunpack.c.l.b16 %v185
    %v380 = vunpack.c.l.b16 %v186
    %v381 = vunpack.c.l.b16 %v187
    %v382 = vunpack.c.l.b16 %v188
    %v383 = vunpack.c.l.b16 %v189
    %v384 = vunpack.c.l.b16 %v190
    %v385 = vunpack.c.l.b16 %v191
    %v386 = vunpack.c.l.b16 %v192
    %v387 = vunpack.c.l.b16 %v193
    %v388 = vunpack.c.l.b16 %v194
    %v389 = vunpack.c.l.b16 %v195
    %v390 = vunpack.c.l.b16 %v196
    %v391 = vunpack.c.l.b16 %v197
    %v392 = vunpack.c.l.b16 %v198
    %v393 = vunpack.c.l.b16 %v199
    %v394 = vunpack.c.l.b16 %v200
    %v395 = vunpack.c.l.b16 %v201
    %v396 = vunpack.c.l.b16 %v202
    %v397 = vunpack.c.l.b16 %v203
    %v398 = vunpack.c.l.b16 %v204
    %v399 = vunpack.c.l.b16 %v205
    %v400 = vunpack.c.l.b16 %v206
    %v401 = vunpack.c.l.b16 %v207
    %v402 = vunpack.c.l.b16 %v208
    %v403 = vunpack.c.l.b16 %v209
    %v404 = vunpack.c.l.b16 %v210
    %v405 = vunpack.c.l.b16 %v211
    %v406 = vunpack.c.l.b16 %v212
    %v407 = vunpack.c.l.b16 %v213
    %v408 = vunpack.c.l.b16 %v214
    %v409 = vunpack.c.l.b16 %v215
    %v410 = vunpack.c.l.b16 %v216
    %v411 = vunpack.c.l.b16 %v217
    %v412 = vunpack.c.l.b16 %v218
    %v413 = vunpack.c.l.b16 %v219
    %v414 = vunpack.c.l.b16 %v220
    %v415 = vunpack.c.l.b16 %v221
    %v416 = vunpack.c.l.b16 %v222
    %v417 = vunpack.c.l.b16 %v223
    %v418 = vunpack.c.l.b16 %v224
    %v419 = vunpack.c.l.b16 %v225
    %v420 = vunpack.c.l.b16 %v226
    %v421 = vunpack.c.l.b16 %v227
    %v422 = vunpack.c.l.b16 %v228
    %v423 = vunpack.c.l.b16 %v229
    %v424 = vunpack.c.l.b16 %v230
    %v425 = vunpack.c.l.b16 %v231
    %v426 = vunpack.c.l.b16 %v232
    %v427 = vunpack.c.l.b16 %v233
    %v428 = vunpack.c.l.b16 %v234
    %v429 = vunpack.c.l.b16 %v235
    %v430 = vunpack.c.l.b16 %v236
    %v431 = vunpack.c.l.b16 %v237
    %v432 = vunpack.c.l.b16 %v238
    %v433 = vunpack.c.l.b16 %v239
    %v434 = vunpack.c.l.b16 %v240
    %v435 = vunpack.c.l.b16 %v241
    %v436 = vunpack.c.l.b16 %v242
    %v437 = vunpack.c.l.b16 %v243
    %v438 = vunpack.c.l.b16 %v244
    %v439 = vunpack.c.l.b16 %v245
    %v440 = vunpack.c.l.b16 %v246
    %v441 = vunpack.c.l.b16 %v247
    %v442 = vunpack.c.l.b16 %v248
    %v443 = vunpack.c.l.b16 %v249
    %v444 = vunpack.c.l.b16 %v250
    %v445 = vunpack.c.l.b16 %v251
    %v446 = vunpack.c.l.b16 %v252
    %v447 = vunpack.c.l.b16 %v253
    %v448 = vpack.c.b16 %v353, %v352
    %v449 = vpack.c.b16 %v355, %v354
    %v450 = vpack.c.b16 %v357, %v356
    %v451 = vpack.c.b16 %v359, %v358
    %v452 = vpack.c.b16 %v361, %v360
    %v453 = vpack.c.b16 %v363, %v362
    %v454 = vpack.c.b16 %v365, %v364
    %v455 = vpack.c.b16 %v367, %v366
    %v456 = vpack.c.b16 %v369, %v368
    %v457 = vpack.c.b16 %v371, %v370
    %v458 = vpack.c.b16 %v373, %v372
    %v459 = vpack.c.b16 %v375, %v374
    %v460 = vpack.c.b16 %v377, %v376
    %v461 = vpack.c.b16 %v379, %v378
    %v462 = vpack.c.b16 %v381, %v380
    %v463 = vpack.c.b16 %v383, %v382
    %v464 = vpack.c.b16 %v385, %v384
    %v465 = vpack.c.b16 %v387, %v386
    %v466 = vpack.c.b16 %v389, %v388
    %v467 = vpack.c.b16 %v391, %v390
    %v468 = vpack.c.b16 %v393, %v392
    %v469 = vpack.c.b16 %v395, %v394
    %v470 = vpack.c.b16 %v397, %v396
    %v471 = vpack.c.b16 %v399, %v398
    %v472 = vpack.c.b16 %v401, %v400
    %v473 = vpack.c.b16 %v403, %v402
    %v474 = vpack.c.b16 %v405, %v404
    %v475 = vpack.c.b16 %v407, %v406
    %v476 = vpack.c.b16 %v409, %v408
    %v477 = vpack.c.b16 %v411, %v410
    %v478 = vpack.c.b16 %v413, %v412
    %v479 = vpack.c.b16 %v415, %v414
    %v480 = vpack.c.b16 %v417, %v416
    %v481 = vpack.c.b16 %v419, %v418
    %v482 = vpack.c.b16 %v421, %v420
    %v483 = vpack.c.b16 %v423, %v422
    %v484 = vpack.c.b16 %v425, %v424
    %v485 = vpack.c.b16 %v427, %v426
    %v486 = vpack.c.b16 %v429, %v428
    %v487 = vpack.c.b16 %v431, %v430
    %v488 = vpack.c.b16 %v433, %v432
    %v489 = vpack.c.b16 %v435, %v434
    %v490 = vpack.c.b16 %v437, %v436
    %v491 = vpack.c.b16 %v439, %v438
    %v492 = vpack.c.b16 %v441, %v440
    %v493 = vpack.c.b16 %v443, %v442
    %v494 = vpack.c.b16 %v445, %v444
    %v495 = vpack.c.b16 %v447, %v446
    %v498 = vunpack.c.l.b16 %v254
    %v499 = vunpack.c.l.b16 %v255
    %v500 = vpack.c.b16 %v499, %v498
    %vm502 = vcmask 130048
    %v504 = vsel %vm502, %v448, 0
    %v507 = vsel %vm502, %v449, 0
    %v510 = vsel %vm502, %v450, 0
    %v513 = vsel %vm502, %v451, 0
    %v516 = vsel %vm502, %v452, 0
    %v519 = vsel %vm502, %v453, 0
    %v522 = vsel %vm502, %v454, 0
    %v525 = vsel %vm502, %v455, 0
    %v528 = vsel %vm502, %v456, 0
    %v531 = vsel %vm502, %v457, 0
    %v534 = vsel %vm502, %v458, 0
    %v537 = vsel %vm502, %v459, 0
    %v540 = vsel %vm502, %v460, 0
    %v543 = vsel %vm502, %v461, 0
    %v546 = vsel %vm502, %v462, 0
    %v549 = vsel %vm502, %v463, 0
    %v552 = vsel %vm502, %v464, 0
    %v555 = vsel %vm502, %v465, 0
    %v558 = vsel %vm502, %v466, 0
    %v561 = vsel %vm502, %v467, 0
    %v564 = vsel %vm502, %v468, 0
    %v567 = vsel %vm502, %v469, 0
    %v570 = vsel %vm502, %v470, 0
    %v573 = vsel %vm502, %v471, 0
    %v576 = vsel %vm502, %v472, 0
    %v579 = vsel %vm502, %v473, 0
    %v582 = vsel %vm502, %v474, 0
    %v585 = vsel %vm502, %v475, 0
    %v588 = vsel %vm502, %v476, 0
    %v591 = vsel %vm502, %v477, 0
    %v594 = vsel %vm502, %v478, 0
    %v597 = vsel %vm502, %v479, 0
    %v600 = vsel %vm502, %v480, 0
    %v603 = vsel %vm502, %v481, 0
    %v606 = vsel %vm502, %v482, 0
    %v609 = vsel %vm502, %v483, 0
    %v612 = vsel %vm502, %v484, 0
    %v615 = vsel %vm502, %v485, 0
    %v618 = vsel %vm502, %v486, 0
    %v621 = vsel %vm502, %v487, 0
    %v624 = vsel %vm502, %v488, 0
    %v627 = vsel %vm502, %v489, 0
    %v630 = vsel %vm502, %v490, 0
    %v633 = vsel %vm502, %v491, 0
    %v636 = vsel %vm502, %v492, 0
    %v639 = vsel %vm502, %v493, 0
    %v642 = vsel %vm502, %v494, 0
    %v645 = vsel %vm502, %v495, 0
    %647 = vmatprep.subr.bf16.mxu0 0
    %648 = vmatpush1.bf16.msra.mxu0 %v500
    %649 = vmatprep.subr.bf16.mxu0 0
    %650 = vmatpush1.bf16.msra.mxu0 0
    %651 = vmatprep.subr.bf16.mxu0 0
    %652 = vmatpush1.bf16.msra.mxu0 0
    %653 = vmatprep.subr.bf16.mxu0 0
    %654 = vmatpush1.bf16.msra.mxu0 0
    %655 = vmatprep.subr.bf16.mxu0 0
    %656 = vmatpush1.bf16.msra.mxu0 0
    %657 = vmatprep.subr.bf16.mxu0 0
    %658 = vmatpush1.bf16.msra.mxu0 0
    %659 = vmatprep.subr.bf16.mxu0 0
    %660 = vmatpush1.bf16.msra.mxu0 0
    %661 = vmatprep.subr.bf16.mxu0 0
    %662 = vmatpush1.bf16.msra.mxu0 0
    %663 = vmatprep.subr.bf16.mxu0 0
    %664 = vmatpush1.bf16.msra.mxu0 0
    %665 = vmatprep.subr.bf16.mxu0 0
    %666 = vmatpush1.bf16.msra.mxu0 0
    %667 = vmatprep.subr.bf16.mxu0 0
    %668 = vmatpush1.bf16.msra.mxu0 0
    %669 = vmatprep.subr.bf16.mxu0 0
    %670 = vmatpush1.bf16.msra.mxu0 0
    %671 = vmatprep.subr.bf16.mxu0 0
    %672 = vmatpush1.bf16.msra.mxu0 0
    %673 = vmatprep.subr.bf16.mxu0 0
    %674 = vmatpush1.bf16.msra.mxu0 0
    %675 = vmatprep.subr.bf16.mxu0 0
    %676 = vmatpush1.bf16.msra.mxu0 0
    %677 = vmatprep.subr.bf16.mxu0 0
    %678 = vmatpush1.bf16.msra.mxu0 0
    %679 = vmatprep.mubr.bf16.mxu0 0
    %680 = vmatmul.mubr.bf16.gmra.mrb[0].mxu0 %v504
    %v681 = vpop.f32.mrb[0].mxu0
    %v682 = vadd.f32 0.0, %v681
    %v683 = vpop.f32.mrb[0].mxu0
    %v684 = vpop.f32.mrb[0].mxu0
    %v685 = vadd.f32 0.0, %v684
    %v686 = vpop.f32.mrb[0].mxu0
    %687 = vmatprep.mubr.bf16.mxu0 0
    %688 = vmatmul.mubr.bf16.gmra.mrb[0].mxu0 %v507
    %v689 = vpop.f32.mrb[0].mxu0
    %v690 = vadd.f32 0.0, %v689
    %v691 = vpop.f32.mrb[0].mxu0
    %v692 = vpop.f32.mrb[0].mxu0
    %v693 = vadd.f32 0.0, %v692
    %v694 = vpop.f32.mrb[0].mxu0
    %695 = vmatprep.mubr.bf16.mxu0 0
    %696 = vmatmul.mubr.bf16.gmra.mrb[0].mxu0 %v510
    %v697 = vpop.f32.mrb[0].mxu0
    %v698 = vadd.f32 0.0, %v697
    %v699 = vpop.f32.mrb[0].mxu0
    %v700 = vpop.f32.mrb[0].mxu0
    %v701 = vadd.f32 0.0, %v700
    %v702 = vpop.f32.mrb[0].mxu0
    %703 = vmatprep.mubr.bf16.mxu0 0
    %704 = vmatmul.mubr.bf16.gmra.mrb[0].mxu0 %v513
    %v705 = vpop.f32.mrb[0].mxu0
    %v706 = vadd.f32 0.0, %v705
    %v707 = vpop.f32.mrb[0].mxu0
    %v708 = vpop.f32.mrb[0].mxu0
    %v709 = vadd.f32 0.0, %v708
    %v710 = vpop.f32.mrb[0].mxu0
    %711 = vmatprep.mubr.bf16.mxu0 0
    %712 = vmatmul.mubr.bf16.gmra.mrb[0].mxu0 %v516
    %v713 = vpop.f32.mrb[0].mxu0
    %v714 = vadd.f32 0.0, %v713
    %v715 = vpop.f32.mrb[0].mxu0
    %v716 = vpop.f32.mrb[0].mxu0
    %v717 = vadd.f32 0.0, %v716
    %v718 = vpop.f32.mrb[0].mxu0
    %719 = vmatprep.mubr.bf16.mxu0 0
    %720 = vmatmul.mubr.bf16.gmra.mrb[0].mxu0 %v519
    %v721 = vpop.f32.mrb[0].mxu0
    %v722 = vadd.f32 0.0, %v721
    %v723 = vpop.f32.mrb[0].mxu0
    %v724 = vpop.f32.mrb[0].mxu0
    %v725 = vadd.f32 0.0, %v724
    %v726 = vpop.f32.mrb[0].mxu0
    %727 = vmatprep.mubr.bf16.mxu0 0
    %728 = vmatmul.mubr.bf16.gmra.mrb[0].mxu0 %v522
    %v729 = vpop.f32.mrb[0].mxu0
    %v730 = vadd.f32 0.0, %v729
    %v731 = vpop.f32.mrb[0].mxu0
    %v732 = vpop.f32.mrb[0].mxu0
    %v733 = vadd.f32 0.0, %v732
    %v734 = vpop.f32.mrb[0].mxu0
    %735 = vmatprep.mubr.bf16.mxu0 0
    %736 = vmatmul.mubr.bf16.gmra.mrb[0].mxu0 %v525
    %v737 = vpop.f32.mrb[0].mxu0
    %v738 = vadd.f32 0.0, %v737
    %v739 = vpop.f32.mrb[0].mxu0
    %v740 = vpop.f32.mrb[0].mxu0
    %v741 = vadd.f32 0.0, %v740
    %v742 = vpop.f32.mrb[0].mxu0
    %743 = vmatprep.mubr.bf16.mxu0 0
    %744 = vmatmul.mubr.bf16.gmra.mrb[0].mxu0 %v528
    %v745 = vpop.f32.mrb[0].mxu0
    %v746 = vadd.f32 0.0, %v745
    %v747 = vpop.f32.mrb[0].mxu0
    %v748 = vpop.f32.mrb[0].mxu0
    %v749 = vadd.f32 0.0, %v748
    %v750 = vpop.f32.mrb[0].mxu0
    %751 = vmatprep.mubr.bf16.mxu0 0
    %752 = vmatmul.mubr.bf16.gmra.mrb[0].mxu0 %v531
    %v753 = vpop.f32.mrb[0].mxu0
    %v754 = vadd.f32 0.0, %v753
    %v755 = vpop.f32.mrb[0].mxu0
    %v756 = vpop.f32.mrb[0].mxu0
    %v757 = vadd.f32 0.0, %v756
    %v758 = vpop.f32.mrb[0].mxu0
    %759 = vmatprep.mubr.bf16.mxu0 0
    %760 = vmatmul.mubr.bf16.gmra.mrb[0].mxu0 %v534
    %v761 = vpop.f32.mrb[0].mxu0
    %v762 = vadd.f32 0.0, %v761
    %v763 = vpop.f32.mrb[0].mxu0
    %v764 = vpop.f32.mrb[0].mxu0
    %v765 = vadd.f32 0.0, %v764
    %v766 = vpop.f32.mrb[0].mxu0
    %767 = vmatprep.mubr.bf16.mxu0 0
    %768 = vmatmul.mubr.bf16.gmra.mrb[0].mxu0 %v537
    %v769 = vpop.f32.mrb[0].mxu0
    %v770 = vadd.f32 0.0, %v769
    %v771 = vpop.f32.mrb[0].mxu0
    %v772 = vpop.f32.mrb[0].mxu0
    %v773 = vadd.f32 0.0, %v772
    %v774 = vpop.f32.mrb[0].mxu0
    %775 = vmatprep.mubr.bf16.mxu0 0
    %776 = vmatmul.mubr.bf16.gmra.mrb[0].mxu0 %v540
    %v777 = vpop.f32.mrb[0].mxu0
    %v778 = vadd.f32 0.0, %v777
    %v779 = vpop.f32.mrb[0].mxu0
    %v780 = vpop.f32.mrb[0].mxu0
    %v781 = vadd.f32 0.0, %v780
    %v782 = vpop.f32.mrb[0].mxu0
    %783 = vmatprep.mubr.bf16.mxu0 0
    %784 = vmatmul.mubr.bf16.gmra.mrb[0].mxu0 %v543
    %v785 = vpop.f32.mrb[0].mxu0
    %v786 = vadd.f32 0.0, %v785
    %v787 = vpop.f32.mrb[0].mxu0
    %v788 = vpop.f32.mrb[0].mxu0
    %v789 = vadd.f32 0.0, %v788
    %v790 = vpop.f32.mrb[0].mxu0
    %791 = vmatprep.mubr.bf16.mxu0 0
    %792 = vmatmul.mubr.bf16.gmra.mrb[0].mxu0 %v546
    %v793 = vpop.f32.mrb[0].mxu0
    %v794 = vadd.f32 0.0, %v793
    %v795 = vpop.f32.mrb[0].mxu0
    %v796 = vpop.f32.mrb[0].mxu0
    %v797 = vadd.f32 0.0, %v796
    %v798 = vpop.f32.mrb[0].mxu0
    %799 = vmatprep.mubr.bf16.mxu0 0
    %800 = vmatmul.mubr.bf16.gmra.mrb[0].mxu0 %v549
    %v801 = vpop.f32.mrb[0].mxu0
    %v802 = vadd.f32 0.0, %v801
    %v803 = vpop.f32.mrb[0].mxu0
    %v804 = vpop.f32.mrb[0].mxu0
    %v805 = vadd.f32 0.0, %v804
    %v806 = vpop.f32.mrb[0].mxu0
    %807 = vmatprep.mubr.bf16.mxu0 0
    %808 = vmatmul.mubr.bf16.gmra.mrb[0].mxu0 %v552
    %v809 = vpop.f32.mrb[0].mxu0
    %v810 = vadd.f32 0.0, %v809
    %v811 = vpop.f32.mrb[0].mxu0
    %v812 = vpop.f32.mrb[0].mxu0
    %v813 = vadd.f32 0.0, %v812
    %v814 = vpop.f32.mrb[0].mxu0
    %815 = vmatprep.mubr.bf16.mxu0 0
    %816 = vmatmul.mubr.bf16.gmra.mrb[0].mxu0 %v555
    %v817 = vpop.f32.mrb[0].mxu0
    %v818 = vadd.f32 0.0, %v817
    %v819 = vpop.f32.mrb[0].mxu0
    %v820 = vpop.f32.mrb[0].mxu0
    %v821 = vadd.f32 0.0, %v820
    %v822 = vpop.f32.mrb[0].mxu0
    %823 = vmatprep.mubr.bf16.mxu0 0
    %824 = vmatmul.mubr.bf16.gmra.mrb[0].mxu0 %v558
    %v825 = vpop.f32.mrb[0].mxu0
    %v826 = vadd.f32 0.0, %v825
    %v827 = vpop.f32.mrb[0].mxu0
    %v828 = vpop.f32.mrb[0].mxu0
    %v829 = vadd.f32 0.0, %v828
    %v830 = vpop.f32.mrb[0].mxu0
    %831 = vmatprep.mubr.bf16.mxu0 0
    %832 = vmatmul.mubr.bf16.gmra.mrb[0].mxu0 %v561
    %v833 = vpop.f32.mrb[0].mxu0
    %v834 = vadd.f32 0.0, %v833
    %v835 = vpop.f32.mrb[0].mxu0
    %v836 = vpop.f32.mrb[0].mxu0
    %v837 = vadd.f32 0.0, %v836
    %v838 = vpop.f32.mrb[0].mxu0
    %839 = vmatprep.mubr.bf16.mxu0 0
    %840 = vmatmul.mubr.bf16.gmra.mrb[0].mxu0 %v564
    %v841 = vpop.f32.mrb[0].mxu0
    %v842 = vadd.f32 0.0, %v841
    %v843 = vpop.f32.mrb[0].mxu0
    %v844 = vpop.f32.mrb[0].mxu0
    %v845 = vadd.f32 0.0, %v844
    %v846 = vpop.f32.mrb[0].mxu0
    %847 = vmatprep.mubr.bf16.mxu0 0
    %848 = vmatmul.mubr.bf16.gmra.mrb[0].mxu0 %v567
    %v849 = vpop.f32.mrb[0].mxu0
    %v850 = vadd.f32 0.0, %v849
    %v851 = vpop.f32.mrb[0].mxu0
    %v852 = vpop.f32.mrb[0].mxu0
    %v853 = vadd.f32 0.0, %v852
    %v854 = vpop.f32.mrb[0].mxu0
    %855 = vmatprep.mubr.bf16.mxu0 0
    %856 = vmatmul.mubr.bf16.gmra.mrb[0].mxu0 %v570
    %v857 = vpop.f32.mrb[0].mxu0
    %v858 = vadd.f32 0.0, %v857
    %v859 = vpop.f32.mrb[0].mxu0
    %v860 = vpop.f32.mrb[0].mxu0
    %v861 = vadd.f32 0.0, %v860
    %v862 = vpop.f32.mrb[0].mxu0
    %863 = vmatprep.mubr.bf16.mxu0 0
    %864 = vmatmul.mubr.bf16.gmra.mrb[0].mxu0 %v573
    %v865 = vpop.f32.mrb[0].mxu0
    %v866 = vadd.f32 0.0, %v865
    %v867 = vpop.f32.mrb[0].mxu0
    %v868 = vpop.f32.mrb[0].mxu0
    %v869 = vadd.f32 0.0, %v868
    %v870 = vpop.f32.mrb[0].mxu0
    %871 = vmatprep.mubr.bf16.mxu0 0
    %872 = vmatmul.mubr.bf16.gmra.mrb[0].mxu0 %v576
    %v873 = vpop.f32.mrb[0].mxu0
    %v874 = vadd.f32 0.0, %v873
    %v875 = vpop.f32.mrb[0].mxu0
    %v876 = vpop.f32.mrb[0].mxu0
    %v877 = vadd.f32 0.0, %v876
    %v878 = vpop.f32.mrb[0].mxu0
    %879 = vmatprep.mubr.bf16.mxu0 0
    %880 = vmatmul.mubr.bf16.gmra.mrb[0].mxu0 %v579
    %v881 = vpop.f32.mrb[0].mxu0
    %v882 = vadd.f32 0.0, %v881
    %v883 = vpop.f32.mrb[0].mxu0
    %v884 = vpop.f32.mrb[0].mxu0
    %v885 = vadd.f32 0.0, %v884
    %v886 = vpop.f32.mrb[0].mxu0
    %887 = vmatprep.mubr.bf16.mxu0 0
    %888 = vmatmul.mubr.bf16.gmra.mrb[0].mxu0 %v582
    %v889 = vpop.f32.mrb[0].mxu0
    %v890 = vadd.f32 0.0, %v889
    %v891 = vpop.f32.mrb[0].mxu0
    %v892 = vpop.f32.mrb[0].mxu0
    %v893 = vadd.f32 0.0, %v892
    %v894 = vpop.f32.mrb[0].mxu0
    %895 = vmatprep.mubr.bf16.mxu0 0
    %896 = vmatmul.mubr.bf16.gmra.mrb[0].mxu0 %v585
    %v897 = vpop.f32.mrb[0].mxu0
    %v898 = vadd.f32 0.0, %v897
    %v899 = vpop.f32.mrb[0].mxu0
    %v900 = vpop.f32.mrb[0].mxu0
    %v901 = vadd.f32 0.0, %v900
    %v902 = vpop.f32.mrb[0].mxu0
    %903 = vmatprep.mubr.bf16.mxu0 0
    %904 = vmatmul.mubr.bf16.gmra.mrb[0].mxu0 %v588
    %v905 = vpop.f32.mrb[0].mxu0
    %v906 = vadd.f32 0.0, %v905
    %v907 = vpop.f32.mrb[0].mxu0
    %v908 = vpop.f32.mrb[0].mxu0
    %v909 = vadd.f32 0.0, %v908
    %v910 = vpop.f32.mrb[0].mxu0
    %911 = vmatprep.mubr.bf16.mxu0 0
    %912 = vmatmul.mubr.bf16.gmra.mrb[0].mxu0 %v591
    %v913 = vpop.f32.mrb[0].mxu0
    %v914 = vadd.f32 0.0, %v913
    %v915 = vpop.f32.mrb[0].mxu0
    %v916 = vpop.f32.mrb[0].mxu0
    %v917 = vadd.f32 0.0, %v916
    %v918 = vpop.f32.mrb[0].mxu0
    %919 = vmatprep.mubr.bf16.mxu0 0
    %920 = vmatmul.mubr.bf16.gmra.mrb[0].mxu0 %v594
    %v921 = vpop.f32.mrb[0].mxu0
    %v922 = vadd.f32 0.0, %v921
    %v923 = vpop.f32.mrb[0].mxu0
    %v924 = vpop.f32.mrb[0].mxu0
    %v925 = vadd.f32 0.0, %v924
    %v926 = vpop.f32.mrb[0].mxu0
    %927 = vmatprep.mubr.bf16.mxu0 0
    %928 = vmatmul.mubr.bf16.gmra.mrb[0].mxu0 %v597
    %v929 = vpop.f32.mrb[0].mxu0
    %v930 = vadd.f32 0.0, %v929
    %v931 = vpop.f32.mrb[0].mxu0
    %v932 = vpop.f32.mrb[0].mxu0
    %v933 = vadd.f32 0.0, %v932
    %v934 = vpop.f32.mrb[0].mxu0
    %935 = vmatprep.mubr.bf16.mxu0 0
    %936 = vmatmul.mubr.bf16.gmra.mrb[0].mxu0 %v600
    %v937 = vpop.f32.mrb[0].mxu0
    %v938 = vadd.f32 0.0, %v937
    %v939 = vpop.f32.mrb[0].mxu0
    %v940 = vpop.f32.mrb[0].mxu0
    %v941 = vadd.f32 0.0, %v940
    %v942 = vpop.f32.mrb[0].mxu0
    %943 = vmatprep.mubr.bf16.mxu0 0
    %944 = vmatmul.mubr.bf16.gmra.mrb[0].mxu0 %v603
    %v945 = vpop.f32.mrb[0].mxu0
    %v946 = vadd.f32 0.0, %v945
    %v947 = vpop.f32.mrb[0].mxu0
    %v948 = vpop.f32.mrb[0].mxu0
    %v949 = vadd.f32 0.0, %v948
    %v950 = vpop.f32.mrb[0].mxu0
    %951 = vmatprep.mubr.bf16.mxu0 0
    %952 = vmatmul.mubr.bf16.gmra.mrb[0].mxu0 %v606
    %v953 = vpop.f32.mrb[0].mxu0
    %v954 = vadd.f32 0.0, %v953
    %v955 = vpop.f32.mrb[0].mxu0
    %v956 = vpop.f32.mrb[0].mxu0
    %v957 = vadd.f32 0.0, %v956
    %v958 = vpop.f32.mrb[0].mxu0
    %959 = vmatprep.mubr.bf16.mxu0 0
    %960 = vmatmul.mubr.bf16.gmra.mrb[0].mxu0 %v609
    %v961 = vpop.f32.mrb[0].mxu0
    %v962 = vadd.f32 0.0, %v961
    %v963 = vpop.f32.mrb[0].mxu0
    %v964 = vpop.f32.mrb[0].mxu0
    %v965 = vadd.f32 0.0, %v964
    %v966 = vpop.f32.mrb[0].mxu0
    %967 = vmatprep.mubr.bf16.mxu0 0
    %968 = vmatmul.mubr.bf16.gmra.mrb[0].mxu0 %v612
    %v969 = vpop.f32.mrb[0].mxu0
    %v970 = vadd.f32 0.0, %v969
    %v971 = vpop.f32.mrb[0].mxu0
    %v972 = vpop.f32.mrb[0].mxu0
    %v973 = vadd.f32 0.0, %v972
    %v974 = vpop.f32.mrb[0].mxu0
    %975 = vmatprep.mubr.bf16.mxu0 0
    %976 = vmatmul.mubr.bf16.gmra.mrb[0].mxu0 %v615
    %v977 = vpop.f32.mrb[0].mxu0
    %v978 = vadd.f32 0.0, %v977
    %v979 = vpop.f32.mrb[0].mxu0
    %v980 = vpop.f32.mrb[0].mxu0
    %v981 = vadd.f32 0.0, %v980
    %v982 = vpop.f32.mrb[0].mxu0
    %983 = vmatprep.mubr.bf16.mxu0 0
    %984 = vmatmul.mubr.bf16.gmra.mrb[0].mxu0 %v618
    %v985 = vpop.f32.mrb[0].mxu0
    %v986 = vadd.f32 0.0, %v985
    %v987 = vpop.f32.mrb[0].mxu0
    %v988 = vpop.f32.mrb[0].mxu0
    %v989 = vadd.f32 0.0, %v988
    %v990 = vpop.f32.mrb[0].mxu0
    %991 = vmatprep.mubr.bf16.mxu0 0
    %992 = vmatmul.mubr.bf16.gmra.mrb[0].mxu0 %v621
    %v993 = vpop.f32.mrb[0].mxu0
    %v994 = vadd.f32 0.0, %v993
    %v995 = vpop.f32.mrb[0].mxu0
    %v996 = vpop.f32.mrb[0].mxu0
    %v997 = vadd.f32 0.0, %v996
    %v998 = vpop.f32.mrb[0].mxu0
    %999 = vmatprep.mubr.bf16.mxu0 0
    %1000 = vmatmul.mubr.bf16.gmra.mrb[0].mxu0 %v624
    %v1001 = vpop.f32.mrb[0].mxu0
    %v1002 = vadd.f32 0.0, %v1001
    %v1003 = vpop.f32.mrb[0].mxu0
    %v1004 = vpop.f32.mrb[0].mxu0
    %v1005 = vadd.f32 0.0, %v1004
    %v1006 = vpop.f32.mrb[0].mxu0
    %1007 = vmatprep.mubr.bf16.mxu0 0
    %1008 = vmatmul.mubr.bf16.gmra.mrb[0].mxu0 %v627
    %v1009 = vpop.f32.mrb[0].mxu0
    %v1010 = vadd.f32 0.0, %v1009
    %v1011 = vpop.f32.mrb[0].mxu0
    %v1012 = vpop.f32.mrb[0].mxu0
    %v1013 = vadd.f32 0.0, %v1012
    %v1014 = vpop.f32.mrb[0].mxu0
    %1015 = vmatprep.mubr.bf16.mxu0 0
    %1016 = vmatmul.mubr.bf16.gmra.mrb[0].mxu0 %v630
    %v1017 = vpop.f32.mrb[0].mxu0
    %v1018 = vadd.f32 0.0, %v1017
    %v1019 = vpop.f32.mrb[0].mxu0
    %v1020 = vpop.f32.mrb[0].mxu0
    %v1021 = vadd.f32 0.0, %v1020
    %v1022 = vpop.f32.mrb[0].mxu0
    %1023 = vmatprep.mubr.bf16.mxu0 0
    %1024 = vmatmul.mubr.bf16.gmra.mrb[0].mxu0 %v633
    %v1025 = vpop.f32.mrb[0].mxu0
    %v1026 = vadd.f32 0.0, %v1025
    %v1027 = vpop.f32.mrb[0].mxu0
    %v1028 = vpop.f32.mrb[0].mxu0
    %v1029 = vadd.f32 0.0, %v1028
    %v1030 = vpop.f32.mrb[0].mxu0
    %1031 = vmatprep.mubr.bf16.mxu0 0
    %1032 = vmatmul.mubr.bf16.gmra.mrb[0].mxu0 %v636
    %v1033 = vpop.f32.mrb[0].mxu0
    %v1034 = vadd.f32 0.0, %v1033
    %v1035 = vpop.f32.mrb[0].mxu0
    %v1036 = vpop.f32.mrb[0].mxu0
    %v1037 = vadd.f32 0.0, %v1036
    %v1038 = vpop.f32.mrb[0].mxu0
    %1039 = vmatprep.mubr.bf16.mxu0 0
    %1040 = vmatmul.mubr.bf16.gmra.mrb[0].mxu0 %v639
    %v1041 = vpop.f32.mrb[0].mxu0
    %v1042 = vadd.f32 0.0, %v1041
    %v1043 = vpop.f32.mrb[0].mxu0
    %v1044 = vpop.f32.mrb[0].mxu0
    %v1045 = vadd.f32 0.0, %v1044
    %v1046 = vpop.f32.mrb[0].mxu0
    %1047 = vmatprep.mubr.bf16.mxu0 0
    %1048 = vmatmul.mubr.bf16.gmra.mrb[0].mxu0 %v642
    %v1049 = vpop.f32.mrb[0].mxu0
    %v1050 = vadd.f32 0.0, %v1049
    %v1051 = vpop.f32.mrb[0].mxu0
    %v1052 = vpop.f32.mrb[0].mxu0
    %v1053 = vadd.f32 0.0, %v1052
    %v1054 = vpop.f32.mrb[0].mxu0
    %1055 = vmatprep.mubr.bf16.mxu0 0
    %1056 = vmatmul.mubr.bf16.gmra.mrb[0].mxu0 %v645
    %v1057 = vpop.f32.mrb[0].mxu0
    %v1058 = vadd.f32 0.0, %v1057
    %v1059 = vpop.f32.mrb[0].mxu0
    %v1060 = vpop.f32.mrb[0].mxu0
    %v1061 = vadd.f32 0.0, %v1060
    %v1062 = vpop.f32.mrb[0].mxu0
    %1063 = vdwg.mxu0
    %v1064 = vld [vmem:[#allocation2] sm:$0xff]
    %v1065 = vld [vmem:[#allocation2 + $0x8] sm:$0xff]
    %v1066 = vld [vmem:[#allocation2 + $0x10] sm:$0xff]
    %v1067 = vld [vmem:[#allocation2 + $0x18] sm:$0xff]
    %v1068 = vld [vmem:[#allocation2 + $0x20] sm:$0xff]
    %v1069 = vld [vmem:[#allocation2 + $0x28] sm:$0xff]
    %v1070 = vld [vmem:[#allocation2 + $0x30] sm:$0xff]
    %v1071 = vld [vmem:[#allocation2 + $0x38] sm:$0xff]
    %v1072 = vld [vmem:[#allocation2 + $0x40] sm:$0xff]
    %v1073 = vld [vmem:[#allocation2 + $0x48] sm:$0xff]
    %v1074 = vld [vmem:[#allocation2 + $0x50] sm:$0xff]
    %v1075 = vld [vmem:[#allocation2 + $0x58] sm:$0xff]
    %v1076 = vld [vmem:[#allocation2 + $0x60] sm:$0xff]
    %v1077 = vld [vmem:[#allocation2 + $0x68] sm:$0xff]
    %v1078 = vld [vmem:[#allocation2 + $0x70] sm:$0xff]
    %v1079 = vld [vmem:[#allocation2 + $0x78] sm:$0xff]
    %v1080 = vld [vmem:[#allocation2 + $0x80] sm:$0xff]
    %v1081 = vld [vmem:[#allocation2 + $0x88] sm:$0xff]
    %v1082 = vld [vmem:[#allocation2 + $0x90] sm:$0xff]
    %v1083 = vld [vmem:[#allocation2 + $0x98] sm:$0xff]
    %v1084 = vld [vmem:[#allocation2 + $0xa0] sm:$0xff]
    %v1085 = vld [vmem:[#allocation2 + $0xa8] sm:$0xff]
    %v1086 = vld [vmem:[#allocation2 + $0xb0] sm:$0xff]
    %v1087 = vld [vmem:[#allocation2 + $0xb8] sm:$0xff]
    %v1088 = vld [vmem:[#allocation2 + $0xc0] sm:$0xff]
    %v1089 = vld [vmem:[#allocation2 + $0xc8] sm:$0xff]
    %v1090 = vld [vmem:[#allocation2 + $0xd0] sm:$0xff]
    %v1091 = vld [vmem:[#allocation2 + $0xd8] sm:$0xff]
    %v1092 = vld [vmem:[#allocation2 + $0xe0] sm:$0xff]
    %v1093 = vld [vmem:[#allocation2 + $0xe8] sm:$0xff]
    %v1094 = vld [vmem:[#allocation2 + $0xf0] sm:$0xff]
    %v1095 = vld [vmem:[#allocation2 + $0xf8] sm:$0xff]
    %v1096 = vld [vmem:[#allocation2 + $0x100] sm:$0xff]
    %v1097 = vld [vmem:[#allocation2 + $0x108] sm:$0xff]
    %v1098 = vld [vmem:[#allocation2 + $0x110] sm:$0xff]
    %v1099 = vld [vmem:[#allocation2 + $0x118] sm:$0xff]
    %v1100 = vld [vmem:[#allocation2 + $0x120] sm:$0xff]
    %v1101 = vld [vmem:[#allocation2 + $0x128] sm:$0xff]
    %v1102 = vld [vmem:[#allocation2 + $0x130] sm:$0xff]
    %v1103 = vld [vmem:[#allocation2 + $0x138] sm:$0xff]
    %v1104 = vld [vmem:[#allocation2 + $0x140] sm:$0xff]
    %v1105 = vld [vmem:[#allocation2 + $0x148] sm:$0xff]
    %v1106 = vld [vmem:[#allocation2 + $0x150] sm:$0xff]
    %v1107 = vld [vmem:[#allocation2 + $0x158] sm:$0xff]
    %v1108 = vld [vmem:[#allocation2 + $0x160] sm:$0xff]
    %v1109 = vld [vmem:[#allocation2 + $0x168] sm:$0xff]
    %v1110 = vld [vmem:[#allocation2 + $0x170] sm:$0xff]
    %v1111 = vld [vmem:[#allocation2 + $0x178] sm:$0xff]
    %v1112 = vld [vmem:[#allocation2 + $0x180] sm:$0xff]
    %v1113 = vld [vmem:[#allocation2 + $0x188] sm:$0xff]
    %v1114 = vld [vmem:[#allocation2 + $0x190] sm:$0xff]
    %v1115 = vld [vmem:[#allocation2 + $0x198] sm:$0xff]
    %v1116 = vld [vmem:[#allocation2 + $0x1a0] sm:$0xff]
    %v1117 = vld [vmem:[#allocation2 + $0x1a8] sm:$0xff]
    %v1118 = vld [vmem:[#allocation2 + $0x1b0] sm:$0xff]
    %v1119 = vld [vmem:[#allocation2 + $0x1b8] sm:$0xff]
    %v1120 = vld [vmem:[#allocation2 + $0x1c0] sm:$0xff]
    %v1121 = vld [vmem:[#allocation2 + $0x1c8] sm:$0xff]
    %v1122 = vld [vmem:[#allocation2 + $0x1d0] sm:$0xff]
    %v1123 = vld [vmem:[#allocation2 + $0x1d8] sm:$0xff]
    %v1124 = vld [vmem:[#allocation2 + $0x1e0] sm:$0xff]
    %v1125 = vld [vmem:[#allocation2 + $0x1e8] sm:$0xff]
    %v1126 = vld [vmem:[#allocation2 + $0x1f0] sm:$0xff]
    %v1127 = vld [vmem:[#allocation2 + $0x1f8] sm:$0xff]
    %v1128 = vld [vmem:[#allocation2 + $0x200] sm:$0xff]
    %v1129 = vld [vmem:[#allocation2 + $0x208] sm:$0xff]
    %v1130 = vld [vmem:[#allocation2 + $0x210] sm:$0xff]
    %v1131 = vld [vmem:[#allocation2 + $0x218] sm:$0xff]
    %v1132 = vld [vmem:[#allocation2 + $0x220] sm:$0xff]
    %v1133 = vld [vmem:[#allocation2 + $0x228] sm:$0xff]
    %v1134 = vld [vmem:[#allocation2 + $0x230] sm:$0xff]
    %v1135 = vld [vmem:[#allocation2 + $0x238] sm:$0xff]
    %v1136 = vld [vmem:[#allocation2 + $0x240] sm:$0xff]
    %v1137 = vld [vmem:[#allocation2 + $0x248] sm:$0xff]
    %v1138 = vld [vmem:[#allocation2 + $0x250] sm:$0xff]
    %v1139 = vld [vmem:[#allocation2 + $0x258] sm:$0xff]
    %v1140 = vld [vmem:[#allocation2 + $0x260] sm:$0xff]
    %v1141 = vld [vmem:[#allocation2 + $0x268] sm:$0xff]
    %v1142 = vld [vmem:[#allocation2 + $0x270] sm:$0xff]
    %v1143 = vld [vmem:[#allocation2 + $0x278] sm:$0xff]
    %v1144 = vld [vmem:[#allocation2 + $0x280] sm:$0xff]
    %v1145 = vld [vmem:[#allocation2 + $0x288] sm:$0xff]
    %v1146 = vld [vmem:[#allocation2 + $0x290] sm:$0xff]
    %v1147 = vld [vmem:[#allocation2 + $0x298] sm:$0xff]
    %v1148 = vld [vmem:[#allocation2 + $0x2a0] sm:$0xff]
    %v1149 = vld [vmem:[#allocation2 + $0x2a8] sm:$0xff]
    %v1150 = vld [vmem:[#allocation2 + $0x2b0] sm:$0xff]
    %v1151 = vld [vmem:[#allocation2 + $0x2b8] sm:$0xff]
    %v1152 = vld [vmem:[#allocation2 + $0x2c0] sm:$0xff]
    %v1153 = vld [vmem:[#allocation2 + $0x2c8] sm:$0xff]
    %v1154 = vld [vmem:[#allocation2 + $0x2d0] sm:$0xff]
    %v1155 = vld [vmem:[#allocation2 + $0x2d8] sm:$0xff]
    %v1156 = vld [vmem:[#allocation2 + $0x2e0] sm:$0xff]
    %v1157 = vld [vmem:[#allocation2 + $0x2e8] sm:$0xff]
    %v1158 = vld [vmem:[#allocation2 + $0x2f0] sm:$0xff]
    %v1159 = vld [vmem:[#allocation2 + $0x2f8] sm:$0xff]
    %v1160 = vld [vmem:[#allocation3] sm:$0xff]
    %v1161 = vld [vmem:[#allocation3 + $0x8] sm:$0xff]
    %v1162 = vld [vmem:[#allocation3 + $0x10] sm:$0xff]
    %v1163 = vld [vmem:[#allocation3 + $0x18] sm:$0xff]
    %v1164 = vld [vmem:[#allocation3 + $0x20] sm:$0xff]
    %v1165 = vld [vmem:[#allocation3 + $0x28] sm:$0xff]
    %v1166 = vld [vmem:[#allocation3 + $0x30] sm:$0xff]
    %v1167 = vld [vmem:[#allocation3 + $0x38] sm:$0xff]
    %v1168 = vld [vmem:[#allocation3 + $0x40] sm:$0xff]
    %v1169 = vld [vmem:[#allocation3 + $0x48] sm:$0xff]
    %v1170 = vld [vmem:[#allocation3 + $0x50] sm:$0xff]
    %v1171 = vld [vmem:[#allocation3 + $0x58] sm:$0xff]
    %v1172 = vld [vmem:[#allocation3 + $0x60] sm:$0xff]
    %v1173 = vld [vmem:[#allocation3 + $0x68] sm:$0xff]
    %v1174 = vld [vmem:[#allocation3 + $0x70] sm:$0xff]
    %v1175 = vld [vmem:[#allocation3 + $0x78] sm:$0xff]
    %v1176 = vld [vmem:[#allocation3 + $0x80] sm:$0xff]
    %v1177 = vld [vmem:[#allocation3 + $0x88] sm:$0xff]
    %v1178 = vld [vmem:[#allocation3 + $0x90] sm:$0xff]
    %v1179 = vld [vmem:[#allocation3 + $0x98] sm:$0xff]
    %v1180 = vld [vmem:[#allocation3 + $0xa0] sm:$0xff]
    %v1181 = vld [vmem:[#allocation3 + $0xa8] sm:$0xff]
    %v1182 = vld [vmem:[#allocation3 + $0xb0] sm:$0xff]
    %v1183 = vld [vmem:[#allocation3 + $0xb8] sm:$0xff]
    %v1184 = vld [vmem:[#allocation3 + $0xc0] sm:$0xff]
    %v1185 = vld [vmem:[#allocation3 + $0xc8] sm:$0xff]
    %v1186 = vld [vmem:[#allocation3 + $0xd0] sm:$0xff]
    %v1187 = vld [vmem:[#allocation3 + $0xd8] sm:$0xff]
    %v1188 = vld [vmem:[#allocation3 + $0xe0] sm:$0xff]
    %v1189 = vld [vmem:[#allocation3 + $0xe8] sm:$0xff]
    %v1190 = vld [vmem:[#allocation3 + $0xf0] sm:$0xff]
    %v1191 = vld [vmem:[#allocation3 + $0xf8] sm:$0xff]
    %v1192 = vld [vmem:[#allocation3 + $0x100] sm:$0xff]
    %v1193 = vld [vmem:[#allocation3 + $0x108] sm:$0xff]
    %v1194 = vld [vmem:[#allocation3 + $0x110] sm:$0xff]
    %v1195 = vld [vmem:[#allocation3 + $0x118] sm:$0xff]
    %v1196 = vld [vmem:[#allocation3 + $0x120] sm:$0xff]
    %v1197 = vld [vmem:[#allocation3 + $0x128] sm:$0xff]
    %v1198 = vld [vmem:[#allocation3 + $0x130] sm:$0xff]
    %v1199 = vld [vmem:[#allocation3 + $0x138] sm:$0xff]
    %v1200 = vld [vmem:[#allocation3 + $0x140] sm:$0xff]
    %v1201 = vld [vmem:[#allocation3 + $0x148] sm:$0xff]
    %v1202 = vld [vmem:[#allocation3 + $0x150] sm:$0xff]
    %v1203 = vld [vmem:[#allocation3 + $0x158] sm:$0xff]
    %v1204 = vld [vmem:[#allocation3 + $0x160] sm:$0xff]
    %v1205 = vld [vmem:[#allocation3 + $0x168] sm:$0xff]
    %v1206 = vld [vmem:[#allocation3 + $0x170] sm:$0xff]
    %v1207 = vld [vmem:[#allocation3 + $0x178] sm:$0xff]
    %v1208 = vld [vmem:[#allocation3 + $0x180] sm:$0xff]
    %v1209 = vld [vmem:[#allocation3 + $0x188] sm:$0xff]
    %v1210 = vld [vmem:[#allocation3 + $0x190] sm:$0xff]
    %v1211 = vld [vmem:[#allocation3 + $0x198] sm:$0xff]
    %v1212 = vld [vmem:[#allocation3 + $0x1a0] sm:$0xff]
    %v1213 = vld [vmem:[#allocation3 + $0x1a8] sm:$0xff]
    %v1214 = vld [vmem:[#allocation3 + $0x1b0] sm:$0xff]
    %v1215 = vld [vmem:[#allocation3 + $0x1b8] sm:$0xff]
    %v1216 = vld [vmem:[#allocation3 + $0x1c0] sm:$0xff]
    %v1217 = vld [vmem:[#allocation3 + $0x1c8] sm:$0xff]
    %v1218 = vld [vmem:[#allocation3 + $0x1d0] sm:$0xff]
    %v1219 = vld [vmem:[#allocation3 + $0x1d8] sm:$0xff]
    %v1220 = vld [vmem:[#allocation3 + $0x1e0] sm:$0xff]
    %v1221 = vld [vmem:[#allocation3 + $0x1e8] sm:$0xff]
    %v1222 = vld [vmem:[#allocation3 + $0x1f0] sm:$0xff]
    %v1223 = vld [vmem:[#allocation3 + $0x1f8] sm:$0xff]
    %v1224 = vld [vmem:[#allocation3 + $0x200] sm:$0xff]
    %v1225 = vld [vmem:[#allocation3 + $0x208] sm:$0xff]
    %v1226 = vld [vmem:[#allocation3 + $0x210] sm:$0xff]
    %v1227 = vld [vmem:[#allocation3 + $0x218] sm:$0xff]
    %v1228 = vld [vmem:[#allocation3 + $0x220] sm:$0xff]
    %v1229 = vld [vmem:[#allocation3 + $0x228] sm:$0xff]
    %v1230 = vld [vmem:[#allocation3 + $0x230] sm:$0xff]
    %v1231 = vld [vmem:[#allocation3 + $0x238] sm:$0xff]
    %v1232 = vld [vmem:[#allocation3 + $0x240] sm:$0xff]
    %v1233 = vld [vmem:[#allocation3 + $0x248] sm:$0xff]
    %v1234 = vld [vmem:[#allocation3 + $0x250] sm:$0xff]
    %v1235 = vld [vmem:[#allocation3 + $0x258] sm:$0xff]
    %v1236 = vld [vmem:[#allocation3 + $0x260] sm:$0xff]
    %v1237 = vld [vmem:[#allocation3 + $0x268] sm:$0xff]
    %v1238 = vld [vmem:[#allocation3 + $0x270] sm:$0xff]
    %v1239 = vld [vmem:[#allocation3 + $0x278] sm:$0xff]
    %v1240 = vld [vmem:[#allocation3 + $0x280] sm:$0xff]
    %v1241 = vld [vmem:[#allocation3 + $0x288] sm:$0xff]
    %v1242 = vld [vmem:[#allocation3 + $0x290] sm:$0xff]
    %v1243 = vld [vmem:[#allocation3 + $0x298] sm:$0xff]
    %v1244 = vld [vmem:[#allocation3 + $0x2a0] sm:$0xff]
    %v1245 = vld [vmem:[#allocation3 + $0x2a8] sm:$0xff]
    %v1246 = vld [vmem:[#allocation3 + $0x2b0] sm:$0xff]
    %v1247 = vld [vmem:[#allocation3 + $0x2b8] sm:$0xff]
    %v1248 = vld [vmem:[#allocation3 + $0x2c0] sm:$0xff]
    %v1249 = vld [vmem:[#allocation3 + $0x2c8] sm:$0xff]
    %v1250 = vld [vmem:[#allocation3 + $0x2d0] sm:$0xff]
    %v1251 = vld [vmem:[#allocation3 + $0x2d8] sm:$0xff]
    %v1252 = vld [vmem:[#allocation3 + $0x2e0] sm:$0xff]
    %v1253 = vld [vmem:[#allocation3 + $0x2e8] sm:$0xff]
    %v1254 = vld [vmem:[#allocation3 + $0x2f0] sm:$0xff]
    %v1255 = vld [vmem:[#allocation3 + $0x2f8] sm:$0xff]
    %v1256 = vld [vmem:[#allocation3 + $0x300] sm:$0xff]
    %v1257 = vld [vmem:[#allocation3 + $0x308] sm:$0xff]
    %v1258 = vld [vmem:[#allocation3 + $0x310] sm:$0xff]
    %v1259 = vld [vmem:[#allocation3 + $0x318] sm:$0xff]
    %v1260 = vld [vmem:[#allocation3 + $0x320] sm:$0xff]
    %v1261 = vld [vmem:[#allocation3 + $0x328] sm:$0xff]
    %v1262 = vld [vmem:[#allocation3 + $0x330] sm:$0xff]
    %v1263 = vld [vmem:[#allocation3 + $0x338] sm:$0xff]
    %v1264 = vld [vmem:[#allocation3 + $0x340] sm:$0xff]
    %v1265 = vld [vmem:[#allocation3 + $0x348] sm:$0xff]
    %v1266 = vld [vmem:[#allocation3 + $0x350] sm:$0xff]
    %v1267 = vld [vmem:[#allocation3 + $0x358] sm:$0xff]
    %v1268 = vld [vmem:[#allocation3 + $0x360] sm:$0xff]
    %v1269 = vld [vmem:[#allocation3 + $0x368] sm:$0xff]
    %v1270 = vld [vmem:[#allocation3 + $0x370] sm:$0xff]
    %v1271 = vld [vmem:[#allocation3 + $0x378] sm:$0xff]
    %v1272 = vld [vmem:[#allocation3 + $0x380] sm:$0xff]
    %v1273 = vld [vmem:[#allocation3 + $0x388] sm:$0xff]
    %v1274 = vld [vmem:[#allocation3 + $0x390] sm:$0xff]
    %v1275 = vld [vmem:[#allocation3 + $0x398] sm:$0xff]
    %v1276 = vld [vmem:[#allocation3 + $0x3a0] sm:$0xff]
    %v1277 = vld [vmem:[#allocation3 + $0x3a8] sm:$0xff]
    %v1278 = vld [vmem:[#allocation3 + $0x3b0] sm:$0xff]
    %v1279 = vld [vmem:[#allocation3 + $0x3b8] sm:$0xff]
    %v1280 = vld [vmem:[#allocation3 + $0x3c0] sm:$0xff]
    %v1281 = vld [vmem:[#allocation3 + $0x3c8] sm:$0xff]
    %v1282 = vld [vmem:[#allocation3 + $0x3d0] sm:$0xff]
    %v1283 = vld [vmem:[#allocation3 + $0x3d8] sm:$0xff]
    %v1284 = vld [vmem:[#allocation3 + $0x3e0] sm:$0xff]
    %v1285 = vld [vmem:[#allocation3 + $0x3e8] sm:$0xff]
    %v1286 = vld [vmem:[#allocation3 + $0x3f0] sm:$0xff]
    %v1287 = vld [vmem:[#allocation3 + $0x3f8] sm:$0xff]
    %v1288 = vld [vmem:[#allocation3 + $0x400] sm:$0xff]
    %v1289 = vld [vmem:[#allocation3 + $0x408] sm:$0xff]
    %v1290 = vld [vmem:[#allocation3 + $0x410] sm:$0xff]
    %v1291 = vld [vmem:[#allocation3 + $0x418] sm:$0xff]
    %v1292 = vld [vmem:[#allocation3 + $0x420] sm:$0xff]
    %v1293 = vld [vmem:[#allocation3 + $0x428] sm:$0xff]
    %v1294 = vld [vmem:[#allocation3 + $0x430] sm:$0xff]
    %v1295 = vld [vmem:[#allocation3 + $0x438] sm:$0xff]
    %v1296 = vld [vmem:[#allocation3 + $0x440] sm:$0xff]
    %v1297 = vld [vmem:[#allocation3 + $0x448] sm:$0xff]
    %v1298 = vld [vmem:[#allocation3 + $0x450] sm:$0xff]
    %v1299 = vld [vmem:[#allocation3 + $0x458] sm:$0xff]
    %v1300 = vld [vmem:[#allocation3 + $0x460] sm:$0xff]
    %v1301 = vld [vmem:[#allocation3 + $0x468] sm:$0xff]
    %v1302 = vld [vmem:[#allocation3 + $0x470] sm:$0xff]
    %v1303 = vld [vmem:[#allocation3 + $0x478] sm:$0xff]
    %v1304 = vld [vmem:[#allocation3 + $0x480] sm:$0xff]
    %v1305 = vld [vmem:[#allocation3 + $0x488] sm:$0xff]
    %v1306 = vld [vmem:[#allocation3 + $0x490] sm:$0xff]
    %v1307 = vld [vmem:[#allocation3 + $0x498] sm:$0xff]
    %v1308 = vld [vmem:[#allocation3 + $0x4a0] sm:$0xff]
    %v1309 = vld [vmem:[#allocation3 + $0x4a8] sm:$0xff]
    %v1310 = vld [vmem:[#allocation3 + $0x4b0] sm:$0xff]
    %v1311 = vld [vmem:[#allocation3 + $0x4b8] sm:$0xff]
    %v1312 = vld [vmem:[#allocation3 + $0x4c0] sm:$0xff]
    %v1313 = vld [vmem:[#allocation3 + $0x4c8] sm:$0xff]
    %v1314 = vld [vmem:[#allocation3 + $0x4d0] sm:$0xff]
    %v1315 = vld [vmem:[#allocation3 + $0x4d8] sm:$0xff]
    %v1316 = vld [vmem:[#allocation3 + $0x4e0] sm:$0xff]
    %v1317 = vld [vmem:[#allocation3 + $0x4e8] sm:$0xff]
    %v1318 = vld [vmem:[#allocation3 + $0x4f0] sm:$0xff]
    %v1319 = vld [vmem:[#allocation3 + $0x4f8] sm:$0xff]
    %v1320 = vld [vmem:[#allocation3 + $0x500] sm:$0xff]
    %v1321 = vld [vmem:[#allocation3 + $0x508] sm:$0xff]
    %v1322 = vld [vmem:[#allocation3 + $0x510] sm:$0xff]
    %v1323 = vld [vmem:[#allocation3 + $0x518] sm:$0xff]
    %v1324 = vld [vmem:[#allocation3 + $0x520] sm:$0xff]
    %v1325 = vld [vmem:[#allocation3 + $0x528] sm:$0xff]
    %v1326 = vld [vmem:[#allocation3 + $0x530] sm:$0xff]
    %v1327 = vld [vmem:[#allocation3 + $0x538] sm:$0xff]
    %v1328 = vld [vmem:[#allocation3 + $0x540] sm:$0xff]
    %v1329 = vld [vmem:[#allocation3 + $0x548] sm:$0xff]
    %v1330 = vld [vmem:[#allocation3 + $0x550] sm:$0xff]
    %v1331 = vld [vmem:[#allocation3 + $0x558] sm:$0xff]
    %v1332 = vld [vmem:[#allocation3 + $0x560] sm:$0xff]
    %v1333 = vld [vmem:[#allocation3 + $0x568] sm:$0xff]
    %v1334 = vld [vmem:[#allocation3 + $0x570] sm:$0xff]
    %v1335 = vld [vmem:[#allocation3 + $0x578] sm:$0xff]
    %v1336 = vld [vmem:[#allocation3 + $0x580] sm:$0xff]
    %v1337 = vld [vmem:[#allocation3 + $0x588] sm:$0xff]
    %v1338 = vld [vmem:[#allocation3 + $0x590] sm:$0xff]
    %v1339 = vld [vmem:[#allocation3 + $0x598] sm:$0xff]
    %v1340 = vld [vmem:[#allocation3 + $0x5a0] sm:$0xff]
    %v1341 = vld [vmem:[#allocation3 + $0x5a8] sm:$0xff]
    %v1342 = vld [vmem:[#allocation3 + $0x5b0] sm:$0xff]
    %v1343 = vld [vmem:[#allocation3 + $0x5b8] sm:$0xff]
    %v1344 = vld [vmem:[#allocation3 + $0x5c0] sm:$0xff]
    %v1345 = vld [vmem:[#allocation3 + $0x5c8] sm:$0xff]
    %v1346 = vld [vmem:[#allocation3 + $0x5d0] sm:$0xff]
    %v1347 = vld [vmem:[#allocation3 + $0x5d8] sm:$0xff]
    %v1348 = vld [vmem:[#allocation3 + $0x5e0] sm:$0xff]
    %v1349 = vld [vmem:[#allocation3 + $0x5e8] sm:$0xff]
    %v1350 = vld [vmem:[#allocation3 + $0x5f0] sm:$0xff]
    %v1351 = vld [vmem:[#allocation3 + $0x5f8] sm:$0xff]
    %v1352 = vld [vmem:[#allocation3 + $0x600] sm:$0xff]
    %v1353 = vld [vmem:[#allocation3 + $0x608] sm:$0xff]
    %v1354 = vld [vmem:[#allocation3 + $0x610] sm:$0xff]
    %v1355 = vld [vmem:[#allocation3 + $0x618] sm:$0xff]
    %v1356 = vld [vmem:[#allocation3 + $0x620] sm:$0xff]
    %v1357 = vld [vmem:[#allocation3 + $0x628] sm:$0xff]
    %v1358 = vld [vmem:[#allocation3 + $0x630] sm:$0xff]
    %v1359 = vld [vmem:[#allocation3 + $0x638] sm:$0xff]
    %v1360 = vld [vmem:[#allocation3 + $0x640] sm:$0xff]
    %v1361 = vld [vmem:[#allocation3 + $0x648] sm:$0xff]
    %v1362 = vld [vmem:[#allocation3 + $0x650] sm:$0xff]
    %v1363 = vld [vmem:[#allocation3 + $0x658] sm:$0xff]
    %v1364 = vld [vmem:[#allocation3 + $0x660] sm:$0xff]
    %v1365 = vld [vmem:[#allocation3 + $0x668] sm:$0xff]
    %v1366 = vld [vmem:[#allocation3 + $0x670] sm:$0xff]
    %v1367 = vld [vmem:[#allocation3 + $0x678] sm:$0xff]
    %v1368 = vld [vmem:[#allocation3 + $0x680] sm:$0xff]
    %v1369 = vld [vmem:[#allocation3 + $0x688] sm:$0xff]
    %v1370 = vld [vmem:[#allocation3 + $0x690] sm:$0xff]
    %v1371 = vld [vmem:[#allocation3 + $0x698] sm:$0xff]
    %v1372 = vld [vmem:[#allocation3 + $0x6a0] sm:$0xff]
    %v1373 = vld [vmem:[#allocation3 + $0x6a8] sm:$0xff]
    %v1374 = vld [vmem:[#allocation3 + $0x6b0] sm:$0xff]
    %v1375 = vld [vmem:[#allocation3 + $0x6b8] sm:$0xff]
    %v1376 = vld [vmem:[#allocation3 + $0x6c0] sm:$0xff]
    %v1377 = vld [vmem:[#allocation3 + $0x6c8] sm:$0xff]
    %v1378 = vld [vmem:[#allocation3 + $0x6d0] sm:$0xff]
    %v1379 = vld [vmem:[#allocation3 + $0x6d8] sm:$0xff]
    %v1380 = vld [vmem:[#allocation3 + $0x6e0] sm:$0xff]
    %v1381 = vld [vmem:[#allocation3 + $0x6e8] sm:$0xff]
    %v1382 = vld [vmem:[#allocation3 + $0x6f0] sm:$0xff]
    %v1383 = vld [vmem:[#allocation3 + $0x6f8] sm:$0xff]
    %v1384 = vld [vmem:[#allocation3 + $0x700] sm:$0xff]
    %v1385 = vld [vmem:[#allocation3 + $0x708] sm:$0xff]
    %v1386 = vld [vmem:[#allocation3 + $0x710] sm:$0xff]
    %v1387 = vld [vmem:[#allocation3 + $0x718] sm:$0xff]
    %v1388 = vld [vmem:[#allocation3 + $0x720] sm:$0xff]
    %v1389 = vld [vmem:[#allocation3 + $0x728] sm:$0xff]
    %v1390 = vld [vmem:[#allocation3 + $0x730] sm:$0xff]
    %v1391 = vld [vmem:[#allocation3 + $0x738] sm:$0xff]
    %v1392 = vld [vmem:[#allocation3 + $0x740] sm:$0xff]
    %v1393 = vld [vmem:[#allocation3 + $0x748] sm:$0xff]
    %v1394 = vld [vmem:[#allocation3 + $0x750] sm:$0xff]
    %v1395 = vld [vmem:[#allocation3 + $0x758] sm:$0xff]
    %v1396 = vld [vmem:[#allocation3 + $0x760] sm:$0xff]
    %v1397 = vld [vmem:[#allocation3 + $0x768] sm:$0xff]
    %v1398 = vld [vmem:[#allocation3 + $0x770] sm:$0xff]
    %v1399 = vld [vmem:[#allocation3 + $0x778] sm:$0xff]
    %v1400 = vld [vmem:[#allocation3 + $0x780] sm:$0xff]
    %v1401 = vld [vmem:[#allocation3 + $0x788] sm:$0xff]
    %v1402 = vld [vmem:[#allocation3 + $0x790] sm:$0xff]
    %v1403 = vld [vmem:[#allocation3 + $0x798] sm:$0xff]
    %v1404 = vld [vmem:[#allocation3 + $0x7a0] sm:$0xff]
    %v1405 = vld [vmem:[#allocation3 + $0x7a8] sm:$0xff]
    %v1406 = vld [vmem:[#allocation3 + $0x7b0] sm:$0xff]
    %v1407 = vld [vmem:[#allocation3 + $0x7b8] sm:$0xff]
    %v1408 = vld [vmem:[#allocation3 + $0x7c0] sm:$0xff]
    %v1409 = vld [vmem:[#allocation3 + $0x7c8] sm:$0xff]
    %v1410 = vld [vmem:[#allocation3 + $0x7d0] sm:$0xff]
    %v1411 = vld [vmem:[#allocation3 + $0x7d8] sm:$0xff]
    %v1412 = vld [vmem:[#allocation3 + $0x7e0] sm:$0xff]
    %v1413 = vld [vmem:[#allocation3 + $0x7e8] sm:$0xff]
    %v1414 = vld [vmem:[#allocation3 + $0x7f0] sm:$0xff]
    %v1415 = vld [vmem:[#allocation3 + $0x7f8] sm:$0xff]
    %v1416 = vld [vmem:[#allocation3 + $0x800] sm:$0xff]
    %v1417 = vld [vmem:[#allocation3 + $0x808] sm:$0xff]
    %v1418 = vld [vmem:[#allocation3 + $0x810] sm:$0xff]
    %v1419 = vld [vmem:[#allocation3 + $0x818] sm:$0xff]
    %v1420 = vld [vmem:[#allocation3 + $0x820] sm:$0xff]
    %v1421 = vld [vmem:[#allocation3 + $0x828] sm:$0xff]
    %v1422 = vld [vmem:[#allocation3 + $0x830] sm:$0xff]
    %v1423 = vld [vmem:[#allocation3 + $0x838] sm:$0xff]
    %v1424 = vld [vmem:[#allocation3 + $0x840] sm:$0xff]
    %v1425 = vld [vmem:[#allocation3 + $0x848] sm:$0xff]
    %v1426 = vld [vmem:[#allocation3 + $0x850] sm:$0xff]
    %v1427 = vld [vmem:[#allocation3 + $0x858] sm:$0xff]
    %v1428 = vld [vmem:[#allocation3 + $0x860] sm:$0xff]
    %v1429 = vld [vmem:[#allocation3 + $0x868] sm:$0xff]
    %v1430 = vld [vmem:[#allocation3 + $0x870] sm:$0xff]
    %v1431 = vld [vmem:[#allocation3 + $0x878] sm:$0xff]
    %v1432 = vld [vmem:[#allocation3 + $0x880] sm:$0xff]
    %v1433 = vld [vmem:[#allocation3 + $0x888] sm:$0xff]
    %v1434 = vld [vmem:[#allocation3 + $0x890] sm:$0xff]
    %v1435 = vld [vmem:[#allocation3 + $0x898] sm:$0xff]
    %v1436 = vld [vmem:[#allocation3 + $0x8a0] sm:$0xff]
    %v1437 = vld [vmem:[#allocation3 + $0x8a8] sm:$0xff]
    %v1438 = vld [vmem:[#allocation3 + $0x8b0] sm:$0xff]
    %v1439 = vld [vmem:[#allocation3 + $0x8b8] sm:$0xff]
    %v1440 = vld [vmem:[#allocation3 + $0x8c0] sm:$0xff]
    %v1441 = vld [vmem:[#allocation3 + $0x8c8] sm:$0xff]
    %v1442 = vld [vmem:[#allocation3 + $0x8d0] sm:$0xff]
    %v1443 = vld [vmem:[#allocation3 + $0x8d8] sm:$0xff]
    %v1444 = vld [vmem:[#allocation3 + $0x8e0] sm:$0xff]
    %v1445 = vld [vmem:[#allocation3 + $0x8e8] sm:$0xff]
    %v1446 = vld [vmem:[#allocation3 + $0x8f0] sm:$0xff]
    %v1447 = vld [vmem:[#allocation3 + $0x8f8] sm:$0xff]
    %v1448 = vpack.c.bf16 %v685, %v682
    %v1449 = vpack.c.bf16 %v693, %v690
    %v1450 = vpack.c.bf16 %v701, %v698
    %v1451 = vpack.c.bf16 %v709, %v706
    %v1452 = vpack.c.bf16 %v717, %v714
    %v1453 = vpack.c.bf16 %v725, %v722
    %v1454 = vpack.c.bf16 %v733, %v730
    %v1455 = vpack.c.bf16 %v741, %v738
    %v1456 = vpack.c.bf16 %v749, %v746
    %v1457 = vpack.c.bf16 %v757, %v754
    %v1458 = vpack.c.bf16 %v765, %v762
    %v1459 = vpack.c.bf16 %v773, %v770
    %v1460 = vpack.c.bf16 %v781, %v778
    %v1461 = vpack.c.bf16 %v789, %v786
    %v1462 = vpack.c.bf16 %v797, %v794
    %v1463 = vpack.c.bf16 %v805, %v802
    %v1464 = vpack.c.bf16 %v813, %v810
    %v1465 = vpack.c.bf16 %v821, %v818
    %v1466 = vpack.c.bf16 %v829, %v826
    %v1467 = vpack.c.bf16 %v837, %v834
    %v1468 = vpack.c.bf16 %v845, %v842
    %v1469 = vpack.c.bf16 %v853, %v850
    %v1470 = vpack.c.bf16 %v861, %v858
    %v1471 = vpack.c.bf16 %v869, %v866
    %v1472 = vpack.c.bf16 %v877, %v874
    %v1473 = vpack.c.bf16 %v885, %v882
    %v1474 = vpack.c.bf16 %v893, %v890
    %v1475 = vpack.c.bf16 %v901, %v898
    %v1476 = vpack.c.bf16 %v909, %v906
    %v1477 = vpack.c.bf16 %v917, %v914
    %v1478 = vpack.c.bf16 %v925, %v922
    %v1479 = vpack.c.bf16 %v933, %v930
    %v1480 = vpack.c.bf16 %v941, %v938
    %v1481 = vpack.c.bf16 %v949, %v946
    %v1482 = vpack.c.bf16 %v957, %v954
    %v1483 = vpack.c.bf16 %v965, %v962
    %v1484 = vpack.c.bf16 %v973, %v970
    %v1485 = vpack.c.bf16 %v981, %v978
    %v1486 = vpack.c.bf16 %v989, %v986
    %v1487 = vpack.c.bf16 %v997, %v994
    %v1488 = vpack.c.bf16 %v1005, %v1002
    %v1489 = vpack.c.bf16 %v1013, %v1010
    %v1490 = vpack.c.bf16 %v1021, %v1018
    %v1491 = vpack.c.bf16 %v1029, %v1026
    %v1492 = vpack.c.bf16 %v1037, %v1034
    %v1493 = vpack.c.bf16 %v1045, %v1042
    %v1494 = vpack.c.bf16 %v1053, %v1050
    %v1495 = vpack.c.bf16 %v1061, %v1058
    %v1784 = vunpack.c.l.b16 %v1160
    %v1785 = vunpack.c.h.b16 %v1160
    %v1786 = vunpack.c.l.b16 %v1161
    %v1787 = vunpack.c.h.b16 %v1161
    %v1788 = vunpack.c.l.b16 %v1162
    %v1789 = vunpack.c.h.b16 %v1162
    %v1790 = vunpack.c.l.b16 %v1163
    %v1791 = vunpack.c.h.b16 %v1163
    %v1792 = vunpack.c.l.b16 %v1164
    %v1793 = vunpack.c.h.b16 %v1164
    %v1794 = vunpack.c.l.b16 %v1165
    %v1795 = vunpack.c.h.b16 %v1165
    %v1796 = vunpack.c.l.b16 %v1166
    %v1797 = vunpack.c.h.b16 %v1166
    %v1798 = vunpack.c.l.b16 %v1167
    %v1799 = vunpack.c.h.b16 %v1167
    %v1800 = vunpack.c.l.b16 %v1168
    %v1801 = vunpack.c.h.b16 %v1168
    %v1802 = vunpack.c.l.b16 %v1169
    %v1803 = vunpack.c.h.b16 %v1169
    %v1804 = vunpack.c.l.b16 %v1170
    %v1805 = vunpack.c.h.b16 %v1170
    %v1806 = vunpack.c.l.b16 %v1171
    %v1807 = vunpack.c.h.b16 %v1171
    %v1808 = vunpack.c.l.b16 %v1172
    %v1809 = vunpack.c.h.b16 %v1172
    %v1810 = vunpack.c.l.b16 %v1173
    %v1811 = vunpack.c.h.b16 %v1173
    %v1812 = vunpack.c.l.b16 %v1174
    %v1813 = vunpack.c.h.b16 %v1174
    %v1814 = vunpack.c.l.b16 %v1175
    %v1815 = vunpack.c.h.b16 %v1175
    %v1816 = vunpack.c.l.b16 %v1176
    %v1817 = vunpack.c.h.b16 %v1176
    %v1818 = vunpack.c.l.b16 %v1177
    %v1819 = vunpack.c.h.b16 %v1177
    %v1820 = vunpack.c.l.b16 %v1178
    %v1821 = vunpack.c.h.b16 %v1178
    %v1822 = vunpack.c.l.b16 %v1179
    %v1823 = vunpack.c.h.b16 %v1179
    %v1824 = vunpack.c.l.b16 %v1180
    %v1825 = vunpack.c.h.b16 %v1180
    %v1826 = vunpack.c.l.b16 %v1181
    %v1827 = vunpack.c.h.b16 %v1181
    %v1828 = vunpack.c.l.b16 %v1182
    %v1829 = vunpack.c.h.b16 %v1182
    %v1830 = vunpack.c.l.b16 %v1183
    %v1831 = vunpack.c.h.b16 %v1183
    %v1832 = vunpack.c.l.b16 %v1184
    %v1833 = vunpack.c.h.b16 %v1184
    %v1834 = vunpack.c.l.b16 %v1185
    %v1835 = vunpack.c.h.b16 %v1185
    %v1836 = vunpack.c.l.b16 %v1186
    %v1837 = vunpack.c.h.b16 %v1186
    %v1838 = vunpack.c.l.b16 %v1187
    %v1839 = vunpack.c.h.b16 %v1187
    %v1840 = vunpack.c.l.b16 %v1188
    %v1841 = vunpack.c.h.b16 %v1188
    %v1842 = vunpack.c.l.b16 %v1189
    %v1843 = vunpack.c.h.b16 %v1189
    %v1844 = vunpack.c.l.b16 %v1190
    %v1845 = vunpack.c.h.b16 %v1190
    %v1846 = vunpack.c.l.b16 %v1191
    %v1847 = vunpack.c.h.b16 %v1191
    %v1848 = vunpack.c.l.b16 %v1192
    %v1849 = vunpack.c.h.b16 %v1192
    %v1850 = vunpack.c.l.b16 %v1193
    %v1851 = vunpack.c.h.b16 %v1193
    %v1852 = vunpack.c.l.b16 %v1194
    %v1853 = vunpack.c.h.b16 %v1194
    %v1854 = vunpack.c.l.b16 %v1195
    %v1855 = vunpack.c.h.b16 %v1195
    %v1856 = vunpack.c.l.b16 %v1196
    %v1857 = vunpack.c.h.b16 %v1196
    %v1858 = vunpack.c.l.b16 %v1197
    %v1859 = vunpack.c.h.b16 %v1197
    %v1860 = vunpack.c.l.b16 %v1198
    %v1861 = vunpack.c.h.b16 %v1198
    %v1862 = vunpack.c.l.b16 %v1199
    %v1863 = vunpack.c.h.b16 %v1199
    %v1864 = vunpack.c.l.b16 %v1200
    %v1865 = vunpack.c.h.b16 %v1200
    %v1866 = vunpack.c.l.b16 %v1201
    %v1867 = vunpack.c.h.b16 %v1201
    %v1868 = vunpack.c.l.b16 %v1202
    %v1869 = vunpack.c.h.b16 %v1202
    %v1870 = vunpack.c.l.b16 %v1203
    %v1871 = vunpack.c.h.b16 %v1203
    %v1872 = vunpack.c.l.b16 %v1204
    %v1873 = vunpack.c.h.b16 %v1204
    %v1874 = vunpack.c.l.b16 %v1205
    %v1875 = vunpack.c.h.b16 %v1205
    %v1876 = vunpack.c.l.b16 %v1206
    %v1877 = vunpack.c.h.b16 %v1206
    %v1878 = vunpack.c.l.b16 %v1207
    %v1879 = vunpack.c.h.b16 %v1207
    %v1880 = vunpack.c.l.b16 %v1208
    %v1881 = vunpack.c.h.b16 %v1208
    %v1882 = vunpack.c.l.b16 %v1209
    %v1883 = vunpack.c.h.b16 %v1209
    %v1884 = vunpack.c.l.b16 %v1210
    %v1885 = vunpack.c.h.b16 %v1210
    %v1886 = vunpack.c.l.b16 %v1211
    %v1887 = vunpack.c.h.b16 %v1211
    %v1888 = vunpack.c.l.b16 %v1212
    %v1889 = vunpack.c.h.b16 %v1212
    %v1890 = vunpack.c.l.b16 %v1213
    %v1891 = vunpack.c.h.b16 %v1213
    %v1892 = vunpack.c.l.b16 %v1214
    %v1893 = vunpack.c.h.b16 %v1214
    %v1894 = vunpack.c.l.b16 %v1215
    %v1895 = vunpack.c.h.b16 %v1215
    %v1896 = vunpack.c.l.b16 %v1216
    %v1897 = vunpack.c.h.b16 %v1216
    %v1898 = vunpack.c.l.b16 %v1217
    %v1899 = vunpack.c.h.b16 %v1217
    %v1900 = vunpack.c.l.b16 %v1218
    %v1901 = vunpack.c.h.b16 %v1218
    %v1902 = vunpack.c.l.b16 %v1219
    %v1903 = vunpack.c.h.b16 %v1219
    %v1904 = vunpack.c.l.b16 %v1220
    %v1905 = vunpack.c.h.b16 %v1220
    %v1906 = vunpack.c.l.b16 %v1221
    %v1907 = vunpack.c.h.b16 %v1221
    %v1908 = vunpack.c.l.b16 %v1222
    %v1909 = vunpack.c.h.b16 %v1222
    %v1910 = vunpack.c.l.b16 %v1223
    %v1911 = vunpack.c.h.b16 %v1223
    %v1912 = vunpack.c.l.b16 %v1224
    %v1913 = vunpack.c.h.b16 %v1224
    %v1914 = vunpack.c.l.b16 %v1225
    %v1915 = vunpack.c.h.b16 %v1225
    %v1916 = vunpack.c.l.b16 %v1226
    %v1917 = vunpack.c.h.b16 %v1226
    %v1918 = vunpack.c.l.b16 %v1227
    %v1919 = vunpack.c.h.b16 %v1227
    %v1920 = vunpack.c.l.b16 %v1228
    %v1921 = vunpack.c.h.b16 %v1228
    %v1922 = vunpack.c.l.b16 %v1229
    %v1923 = vunpack.c.h.b16 %v1229
    %v1924 = vunpack.c.l.b16 %v1230
    %v1925 = vunpack.c.h.b16 %v1230
    %v1926 = vunpack.c.l.b16 %v1231
    %v1927 = vunpack.c.h.b16 %v1231
    %v1928 = vunpack.c.l.b16 %v1232
    %v1929 = vunpack.c.h.b16 %v1232
    %v1930 = vunpack.c.l.b16 %v1233
    %v1931 = vunpack.c.h.b16 %v1233
    %v1932 = vunpack.c.l.b16 %v1234
    %v1933 = vunpack.c.h.b16 %v1234
    %v1934 = vunpack.c.l.b16 %v1235
    %v1935 = vunpack.c.h.b16 %v1235
    %v1936 = vunpack.c.l.b16 %v1236
    %v1937 = vunpack.c.h.b16 %v1236
    %v1938 = vunpack.c.l.b16 %v1237
    %v1939 = vunpack.c.h.b16 %v1237
    %v1940 = vunpack.c.l.b16 %v1238
    %v1941 = vunpack.c.h.b16 %v1238
    %v1942 = vunpack.c.l.b16 %v1239
    %v1943 = vunpack.c.h.b16 %v1239
    %v1944 = vunpack.c.l.b16 %v1240
    %v1945 = vunpack.c.h.b16 %v1240
    %v1946 = vunpack.c.l.b16 %v1241
    %v1947 = vunpack.c.h.b16 %v1241
    %v1948 = vunpack.c.l.b16 %v1242
    %v1949 = vunpack.c.h.b16 %v1242
    %v1950 = vunpack.c.l.b16 %v1243
    %v1951 = vunpack.c.h.b16 %v1243
    %v1952 = vunpack.c.l.b16 %v1244
    %v1953 = vunpack.c.h.b16 %v1244
    %v1954 = vunpack.c.l.b16 %v1245
    %v1955 = vunpack.c.h.b16 %v1245
    %v1956 = vunpack.c.l.b16 %v1246
    %v1957 = vunpack.c.h.b16 %v1246
    %v1958 = vunpack.c.l.b16 %v1247
    %v1959 = vunpack.c.h.b16 %v1247
    %v1960 = vunpack.c.l.b16 %v1248
    %v1961 = vunpack.c.h.b16 %v1248
    %v1962 = vunpack.c.l.b16 %v1249
    %v1963 = vunpack.c.h.b16 %v1249
    %v1964 = vunpack.c.l.b16 %v1250
    %v1965 = vunpack.c.h.b16 %v1250
    %v1966 = vunpack.c.l.b16 %v1251
    %v1967 = vunpack.c.h.b16 %v1251
    %v1968 = vunpack.c.l.b16 %v1252
    %v1969 = vunpack.c.h.b16 %v1252
    %v1970 = vunpack.c.l.b16 %v1253
    %v1971 = vunpack.c.h.b16 %v1253
    %v1972 = vunpack.c.l.b16 %v1254
    %v1973 = vunpack.c.h.b16 %v1254
    %v1974 = vunpack.c.l.b16 %v1255
    %v1975 = vunpack.c.h.b16 %v1255
    %v1976 = vunpack.c.l.b16 %v1256
    %v1977 = vunpack.c.h.b16 %v1256
    %v1978 = vunpack.c.l.b16 %v1257
    %v1979 = vunpack.c.h.b16 %v1257
    %v1980 = vunpack.c.l.b16 %v1258
    %v1981 = vunpack.c.h.b16 %v1258
    %v1982 = vunpack.c.l.b16 %v1259
    %v1983 = vunpack.c.h.b16 %v1259
    %v1984 = vunpack.c.l.b16 %v1260
    %v1985 = vunpack.c.h.b16 %v1260
    %v1986 = vunpack.c.l.b16 %v1261
    %v1987 = vunpack.c.h.b16 %v1261
    %v1988 = vunpack.c.l.b16 %v1262
    %v1989 = vunpack.c.h.b16 %v1262
    %v1990 = vunpack.c.l.b16 %v1263
    %v1991 = vunpack.c.h.b16 %v1263
    %v1992 = vunpack.c.l.b16 %v1264
    %v1993 = vunpack.c.h.b16 %v1264
    %v1994 = vunpack.c.l.b16 %v1265
    %v1995 = vunpack.c.h.b16 %v1265
    %v1996 = vunpack.c.l.b16 %v1266
    %v1997 = vunpack.c.h.b16 %v1266
    %v1998 = vunpack.c.l.b16 %v1267
    %v1999 = vunpack.c.h.b16 %v1267
    %v2000 = vunpack.c.l.b16 %v1268
    %v2001 = vunpack.c.h.b16 %v1268
    %v2002 = vunpack.c.l.b16 %v1269
    %v2003 = vunpack.c.h.b16 %v1269
    %v2004 = vunpack.c.l.b16 %v1270
    %v2005 = vunpack.c.h.b16 %v1270
    %v2006 = vunpack.c.l.b16 %v1271
    %v2007 = vunpack.c.h.b16 %v1271
    %v2008 = vunpack.c.l.b16 %v1272
    %v2009 = vunpack.c.h.b16 %v1272
    %v2010 = vunpack.c.l.b16 %v1273
    %v2011 = vunpack.c.h.b16 %v1273
    %v2012 = vunpack.c.l.b16 %v1274
    %v2013 = vunpack.c.h.b16 %v1274
    %v2014 = vunpack.c.l.b16 %v1275
    %v2015 = vunpack.c.h.b16 %v1275
    %v2016 = vunpack.c.l.b16 %v1276
    %v2017 = vunpack.c.h.b16 %v1276
    %v2018 = vunpack.c.l.b16 %v1277
    %v2019 = vunpack.c.h.b16 %v1277
    %v2020 = vunpack.c.l.b16 %v1278
    %v2021 = vunpack.c.h.b16 %v1278
    %v2022 = vunpack.c.l.b16 %v1279
    %v2023 = vunpack.c.h.b16 %v1279
    %v2024 = vunpack.c.l.b16 %v1280
    %v2025 = vunpack.c.h.b16 %v1280
    %v2026 = vunpack.c.l.b16 %v1281
    %v2027 = vunpack.c.h.b16 %v1281
    %v2028 = vunpack.c.l.b16 %v1282
    %v2029 = vunpack.c.h.b16 %v1282
    %v2030 = vunpack.c.l.b16 %v1283
    %v2031 = vunpack.c.h.b16 %v1283
    %v2032 = vunpack.c.l.b16 %v1284
    %v2033 = vunpack.c.h.b16 %v1284
    %v2034 = vunpack.c.l.b16 %v1285
    %v2035 = vunpack.c.h.b16 %v1285
    %v2036 = vunpack.c.l.b16 %v1286
    %v2037 = vunpack.c.h.b16 %v1286
    %v2038 = vunpack.c.l.b16 %v1287
    %v2039 = vunpack.c.h.b16 %v1287
    %v2040 = vunpack.c.l.b16 %v1288
    %v2041 = vunpack.c.h.b16 %v1288
    %v2042 = vunpack.c.l.b16 %v1289
    %v2043 = vunpack.c.h.b16 %v1289
    %v2044 = vunpack.c.l.b16 %v1290
    %v2045 = vunpack.c.h.b16 %v1290
    %v2046 = vunpack.c.l.b16 %v1291
    %v2047 = vunpack.c.h.b16 %v1291
    %v2048 = vunpack.c.l.b16 %v1292
    %v2049 = vunpack.c.h.b16 %v1292
    %v2050 = vunpack.c.l.b16 %v1293
    %v2051 = vunpack.c.h.b16 %v1293
    %v2052 = vunpack.c.l.b16 %v1294
    %v2053 = vunpack.c.h.b16 %v1294
    %v2054 = vunpack.c.l.b16 %v1295
    %v2055 = vunpack.c.h.b16 %v1295
    %v2056 = vunpack.c.l.b16 %v1296
    %v2057 = vunpack.c.h.b16 %v1296
    %v2058 = vunpack.c.l.b16 %v1297
    %v2059 = vunpack.c.h.b16 %v1297
    %v2060 = vunpack.c.l.b16 %v1298
    %v2061 = vunpack.c.h.b16 %v1298
    %v2062 = vunpack.c.l.b16 %v1299
    %v2063 = vunpack.c.h.b16 %v1299
    %v2064 = vunpack.c.l.b16 %v1300
    %v2065 = vunpack.c.h.b16 %v1300
    %v2066 = vunpack.c.l.b16 %v1301
    %v2067 = vunpack.c.h.b16 %v1301
    %v2068 = vunpack.c.l.b16 %v1302
    %v2069 = vunpack.c.h.b16 %v1302
    %v2070 = vunpack.c.l.b16 %v1303
    %v2071 = vunpack.c.h.b16 %v1303
    %v2072 = vunpack.c.l.b16 %v1304
    %v2073 = vunpack.c.h.b16 %v1304
    %v2074 = vunpack.c.l.b16 %v1305
    %v2075 = vunpack.c.h.b16 %v1305
    %v2076 = vunpack.c.l.b16 %v1306
    %v2077 = vunpack.c.h.b16 %v1306
    %v2078 = vunpack.c.l.b16 %v1307
    %v2079 = vunpack.c.h.b16 %v1307
    %v2080 = vunpack.c.l.b16 %v1308
    %v2081 = vunpack.c.h.b16 %v1308
    %v2082 = vunpack.c.l.b16 %v1309
    %v2083 = vunpack.c.h.b16 %v1309
    %v2084 = vunpack.c.l.b16 %v1310
    %v2085 = vunpack.c.h.b16 %v1310
    %v2086 = vunpack.c.l.b16 %v1311
    %v2087 = vunpack.c.h.b16 %v1311
    %v2088 = vunpack.c.l.b16 %v1312
    %v2089 = vunpack.c.h.b16 %v1312
    %v2090 = vunpack.c.l.b16 %v1313
    %v2091 = vunpack.c.h.b16 %v1313
    %v2092 = vunpack.c.l.b16 %v1314
    %v2093 = vunpack.c.h.b16 %v1314
    %v2094 = vunpack.c.l.b16 %v1315
    %v2095 = vunpack.c.h.b16 %v1315
    %v2096 = vunpack.c.l.b16 %v1316
    %v2097 = vunpack.c.h.b16 %v1316
    %v2098 = vunpack.c.l.b16 %v1317
    %v2099 = vunpack.c.h.b16 %v1317
    %v2100 = vunpack.c.l.b16 %v1318
    %v2101 = vunpack.c.h.b16 %v1318
    %v2102 = vunpack.c.l.b16 %v1319
    %v2103 = vunpack.c.h.b16 %v1319
    %v2104 = vunpack.c.l.b16 %v1320
    %v2105 = vunpack.c.h.b16 %v1320
    %v2106 = vunpack.c.l.b16 %v1321
    %v2107 = vunpack.c.h.b16 %v1321
    %v2108 = vunpack.c.l.b16 %v1322
    %v2109 = vunpack.c.h.b16 %v1322
    %v2110 = vunpack.c.l.b16 %v1323
    %v2111 = vunpack.c.h.b16 %v1323
    %v2112 = vunpack.c.l.b16 %v1324
    %v2113 = vunpack.c.h.b16 %v1324
    %v2114 = vunpack.c.l.b16 %v1325
    %v2115 = vunpack.c.h.b16 %v1325
    %v2116 = vunpack.c.l.b16 %v1326
    %v2117 = vunpack.c.h.b16 %v1326
    %v2118 = vunpack.c.l.b16 %v1327
    %v2119 = vunpack.c.h.b16 %v1327
    %v2120 = vunpack.c.l.b16 %v1328
    %v2121 = vunpack.c.h.b16 %v1328
    %v2122 = vunpack.c.l.b16 %v1329
    %v2123 = vunpack.c.h.b16 %v1329
    %v2124 = vunpack.c.l.b16 %v1330
    %v2125 = vunpack.c.h.b16 %v1330
    %v2126 = vunpack.c.l.b16 %v1331
    %v2127 = vunpack.c.h.b16 %v1331
    %v2128 = vunpack.c.l.b16 %v1332
    %v2129 = vunpack.c.h.b16 %v1332
    %v2130 = vunpack.c.l.b16 %v1333
    %v2131 = vunpack.c.h.b16 %v1333
    %v2132 = vunpack.c.l.b16 %v1334
    %v2133 = vunpack.c.h.b16 %v1334
    %v2134 = vunpack.c.l.b16 %v1335
    %v2135 = vunpack.c.h.b16 %v1335
    %v2136 = vunpack.c.l.b16 %v1336
    %v2137 = vunpack.c.h.b16 %v1336
    %v2138 = vunpack.c.l.b16 %v1337
    %v2139 = vunpack.c.h.b16 %v1337
    %v2140 = vunpack.c.l.b16 %v1338
    %v2141 = vunpack.c.h.b16 %v1338
    %v2142 = vunpack.c.l.b16 %v1339
    %v2143 = vunpack.c.h.b16 %v1339
    %v2144 = vunpack.c.l.b16 %v1340
    %v2145 = vunpack.c.h.b16 %v1340
    %v2146 = vunpack.c.l.b16 %v1341
    %v2147 = vunpack.c.h.b16 %v1341
    %v2148 = vunpack.c.l.b16 %v1342
    %v2149 = vunpack.c.h.b16 %v1342
    %v2150 = vunpack.c.l.b16 %v1343
    %v2151 = vunpack.c.h.b16 %v1343
    %v2152 = vunpack.c.l.b16 %v1344
    %v2153 = vunpack.c.h.b16 %v1344
    %v2154 = vunpack.c.l.b16 %v1345
    %v2155 = vunpack.c.h.b16 %v1345
    %v2156 = vunpack.c.l.b16 %v1346
    %v2157 = vunpack.c.h.b16 %v1346
    %v2158 = vunpack.c.l.b16 %v1347
    %v2159 = vunpack.c.h.b16 %v1347
    %v2160 = vunpack.c.l.b16 %v1348
    %v2161 = vunpack.c.h.b16 %v1348
    %v2162 = vunpack.c.l.b16 %v1349
    %v2163 = vunpack.c.h.b16 %v1349
    %v2164 = vunpack.c.l.b16 %v1350
    %v2165 = vunpack.c.h.b16 %v1350
    %v2166 = vunpack.c.l.b16 %v1351
    %v2167 = vunpack.c.h.b16 %v1351
    %v2168 = vunpack.c.l.b16 %v1352
    %v2169 = vunpack.c.h.b16 %v1352
    %v2170 = vunpack.c.l.b16 %v1353
    %v2171 = vunpack.c.h.b16 %v1353
    %v2172 = vunpack.c.l.b16 %v1354
    %v2173 = vunpack.c.h.b16 %v1354
    %v2174 = vunpack.c.l.b16 %v1355
    %v2175 = vunpack.c.h.b16 %v1355
    %v2176 = vunpack.c.l.b16 %v1356
    %v2177 = vunpack.c.h.b16 %v1356
    %v2178 = vunpack.c.l.b16 %v1357
    %v2179 = vunpack.c.h.b16 %v1357
    %v2180 = vunpack.c.l.b16 %v1358
    %v2181 = vunpack.c.h.b16 %v1358
    %v2182 = vunpack.c.l.b16 %v1359
    %v2183 = vunpack.c.h.b16 %v1359
    %v2184 = vunpack.c.l.b16 %v1360
    %v2185 = vunpack.c.h.b16 %v1360
    %v2186 = vunpack.c.l.b16 %v1361
    %v2187 = vunpack.c.h.b16 %v1361
    %v2188 = vunpack.c.l.b16 %v1362
    %v2189 = vunpack.c.h.b16 %v1362
    %v2190 = vunpack.c.l.b16 %v1363
    %v2191 = vunpack.c.h.b16 %v1363
    %v2192 = vunpack.c.l.b16 %v1364
    %v2193 = vunpack.c.h.b16 %v1364
    %v2194 = vunpack.c.l.b16 %v1365
    %v2195 = vunpack.c.h.b16 %v1365
    %v2196 = vunpack.c.l.b16 %v1366
    %v2197 = vunpack.c.h.b16 %v1366
    %v2198 = vunpack.c.l.b16 %v1367
    %v2199 = vunpack.c.h.b16 %v1367
    %v2200 = vunpack.c.l.b16 %v1368
    %v2201 = vunpack.c.h.b16 %v1368
    %v2202 = vunpack.c.l.b16 %v1369
    %v2203 = vunpack.c.h.b16 %v1369
    %v2204 = vunpack.c.l.b16 %v1370
    %v2205 = vunpack.c.h.b16 %v1370
    %v2206 = vunpack.c.l.b16 %v1371
    %v2207 = vunpack.c.h.b16 %v1371
    %v2208 = vunpack.c.l.b16 %v1372
    %v2209 = vunpack.c.h.b16 %v1372
    %v2210 = vunpack.c.l.b16 %v1373
    %v2211 = vunpack.c.h.b16 %v1373
    %v2212 = vunpack.c.l.b16 %v1374
    %v2213 = vunpack.c.h.b16 %v1374
    %v2214 = vunpack.c.l.b16 %v1375
    %v2215 = vunpack.c.h.b16 %v1375
    %v2216 = vunpack.c.l.b16 %v1376
    %v2217 = vunpack.c.h.b16 %v1376
    %v2218 = vunpack.c.l.b16 %v1377
    %v2219 = vunpack.c.h.b16 %v1377
    %v2220 = vunpack.c.l.b16 %v1378
    %v2221 = vunpack.c.h.b16 %v1378
    %v2222 = vunpack.c.l.b16 %v1379
    %v2223 = vunpack.c.h.b16 %v1379
    %v2224 = vunpack.c.l.b16 %v1380
    %v2225 = vunpack.c.h.b16 %v1380
    %v2226 = vunpack.c.l.b16 %v1381
    %v2227 = vunpack.c.h.b16 %v1381
    %v2228 = vunpack.c.l.b16 %v1382
    %v2229 = vunpack.c.h.b16 %v1382
    %v2230 = vunpack.c.l.b16 %v1383
    %v2231 = vunpack.c.h.b16 %v1383
    %v2232 = vunpack.c.l.b16 %v1384
    %v2233 = vunpack.c.h.b16 %v1384
    %v2234 = vunpack.c.l.b16 %v1385
    %v2235 = vunpack.c.h.b16 %v1385
    %v2236 = vunpack.c.l.b16 %v1386
    %v2237 = vunpack.c.h.b16 %v1386
    %v2238 = vunpack.c.l.b16 %v1387
    %v2239 = vunpack.c.h.b16 %v1387
    %v2240 = vunpack.c.l.b16 %v1388
    %v2241 = vunpack.c.h.b16 %v1388
    %v2242 = vunpack.c.l.b16 %v1389
    %v2243 = vunpack.c.h.b16 %v1389
    %v2244 = vunpack.c.l.b16 %v1390
    %v2245 = vunpack.c.h.b16 %v1390
    %v2246 = vunpack.c.l.b16 %v1391
    %v2247 = vunpack.c.h.b16 %v1391
    %v2248 = vunpack.c.l.b16 %v1392
    %v2249 = vunpack.c.h.b16 %v1392
    %v2250 = vunpack.c.l.b16 %v1393
    %v2251 = vunpack.c.h.b16 %v1393
    %v2252 = vunpack.c.l.b16 %v1394
    %v2253 = vunpack.c.h.b16 %v1394
    %v2254 = vunpack.c.l.b16 %v1395
    %v2255 = vunpack.c.h.b16 %v1395
    %v2256 = vunpack.c.l.b16 %v1396
    %v2257 = vunpack.c.h.b16 %v1396
    %v2258 = vunpack.c.l.b16 %v1397
    %v2259 = vunpack.c.h.b16 %v1397
    %v2260 = vunpack.c.l.b16 %v1398
    %v2261 = vunpack.c.h.b16 %v1398
    %v2262 = vunpack.c.l.b16 %v1399
    %v2263 = vunpack.c.h.b16 %v1399
    %v2264 = vunpack.c.l.b16 %v1400
    %v2265 = vunpack.c.h.b16 %v1400
    %v2266 = vunpack.c.l.b16 %v1401
    %v2267 = vunpack.c.h.b16 %v1401
    %v2268 = vunpack.c.l.b16 %v1402
    %v2269 = vunpack.c.h.b16 %v1402
    %v2270 = vunpack.c.l.b16 %v1403
    %v2271 = vunpack.c.h.b16 %v1403
    %v2272 = vunpack.c.l.b16 %v1404
    %v2273 = vunpack.c.h.b16 %v1404
    %v2274 = vunpack.c.l.b16 %v1405
    %v2275 = vunpack.c.h.b16 %v1405
    %v2276 = vunpack.c.l.b16 %v1406
    %v2277 = vunpack.c.h.b16 %v1406
    %v2278 = vunpack.c.l.b16 %v1407
    %v2279 = vunpack.c.h.b16 %v1407
    %v2280 = vunpack.c.l.b16 %v1408
    %v2281 = vunpack.c.h.b16 %v1408
    %v2282 = vunpack.c.l.b16 %v1409
    %v2283 = vunpack.c.h.b16 %v1409
    %v2284 = vunpack.c.l.b16 %v1410
    %v2285 = vunpack.c.h.b16 %v1410
    %v2286 = vunpack.c.l.b16 %v1411
    %v2287 = vunpack.c.h.b16 %v1411
    %v2288 = vunpack.c.l.b16 %v1412
    %v2289 = vunpack.c.h.b16 %v1412
    %v2290 = vunpack.c.l.b16 %v1413
    %v2291 = vunpack.c.h.b16 %v1413
    %v2292 = vunpack.c.l.b16 %v1414
    %v2293 = vunpack.c.h.b16 %v1414
    %v2294 = vunpack.c.l.b16 %v1415
    %v2295 = vunpack.c.h.b16 %v1415
    %v2296 = vunpack.c.l.b16 %v1416
    %v2297 = vunpack.c.h.b16 %v1416
    %v2298 = vunpack.c.l.b16 %v1417
    %v2299 = vunpack.c.h.b16 %v1417
    %v2300 = vunpack.c.l.b16 %v1418
    %v2301 = vunpack.c.h.b16 %v1418
    %v2302 = vunpack.c.l.b16 %v1419
    %v2303 = vunpack.c.h.b16 %v1419
    %v2304 = vunpack.c.l.b16 %v1420
    %v2305 = vunpack.c.h.b16 %v1420
    %v2306 = vunpack.c.l.b16 %v1421
    %v2307 = vunpack.c.h.b16 %v1421
    %v2308 = vunpack.c.l.b16 %v1422
    %v2309 = vunpack.c.h.b16 %v1422
    %v2310 = vunpack.c.l.b16 %v1423
    %v2311 = vunpack.c.h.b16 %v1423
    %v2312 = vunpack.c.l.b16 %v1424
    %v2313 = vunpack.c.h.b16 %v1424
    %v2314 = vunpack.c.l.b16 %v1425
    %v2315 = vunpack.c.h.b16 %v1425
    %v2316 = vunpack.c.l.b16 %v1426
    %v2317 = vunpack.c.h.b16 %v1426
    %v2318 = vunpack.c.l.b16 %v1427
    %v2319 = vunpack.c.h.b16 %v1427
    %v2320 = vunpack.c.l.b16 %v1428
    %v2321 = vunpack.c.h.b16 %v1428
    %v2322 = vunpack.c.l.b16 %v1429
    %v2323 = vunpack.c.h.b16 %v1429
    %v2324 = vunpack.c.l.b16 %v1430
    %v2325 = vunpack.c.h.b16 %v1430
    %v2326 = vunpack.c.l.b16 %v1431
    %v2327 = vunpack.c.h.b16 %v1431
    %v2328 = vunpack.c.l.b16 %v1432
    %v2329 = vunpack.c.h.b16 %v1432
    %v2330 = vunpack.c.l.b16 %v1433
    %v2331 = vunpack.c.h.b16 %v1433
    %v2332 = vunpack.c.l.b16 %v1434
    %v2333 = vunpack.c.h.b16 %v1434
    %v2334 = vunpack.c.l.b16 %v1435
    %v2335 = vunpack.c.h.b16 %v1435
    %v2336 = vunpack.c.l.b16 %v1436
    %v2337 = vunpack.c.h.b16 %v1436
    %v2338 = vunpack.c.l.b16 %v1437
    %v2339 = vunpack.c.h.b16 %v1437
    %v2340 = vunpack.c.l.b16 %v1438
    %v2341 = vunpack.c.h.b16 %v1438
    %v2342 = vunpack.c.l.b16 %v1439
    %v2343 = vunpack.c.h.b16 %v1439
    %v2344 = vunpack.c.l.b16 %v1440
    %v2345 = vunpack.c.h.b16 %v1440
    %v2346 = vunpack.c.l.b16 %v1441
    %v2347 = vunpack.c.h.b16 %v1441
    %v2348 = vunpack.c.l.b16 %v1442
    %v2349 = vunpack.c.h.b16 %v1442
    %v2350 = vunpack.c.l.b16 %v1443
    %v2351 = vunpack.c.h.b16 %v1443
    %v2352 = vunpack.c.l.b16 %v1444
    %v2353 = vunpack.c.h.b16 %v1444
    %v2354 = vunpack.c.l.b16 %v1445
    %v2355 = vunpack.c.h.b16 %v1445
    %v2356 = vunpack.c.l.b16 %v1446
    %v2357 = vunpack.c.h.b16 %v1446
    %v2358 = vunpack.c.l.b16 %v1447
    %v2359 = vunpack.c.h.b16 %v1447
    %v2360 = vpack.c.b16 %v1790, %v1784
    %v2361 = vpack.c.b16 %v1791, %v1785
    %v2362 = vpack.c.b16 %v1792, %v1786
    %v2363 = vpack.c.b16 %v1793, %v1787
    %v2364 = vpack.c.b16 %v1794, %v1788
    %v2365 = vpack.c.b16 %v1795, %v1789
    %v2366 = vpack.c.b16 %v1802, %v1796
    %v2367 = vpack.c.b16 %v1803, %v1797
    %v2368 = vpack.c.b16 %v1804, %v1798
    %v2369 = vpack.c.b16 %v1805, %v1799
    %v2370 = vpack.c.b16 %v1806, %v1800
    %v2371 = vpack.c.b16 %v1807, %v1801
    %v2372 = vpack.c.b16 %v1814, %v1808
    %v2373 = vpack.c.b16 %v1815, %v1809
    %v2374 = vpack.c.b16 %v1816, %v1810
    %v2375 = vpack.c.b16 %v1817, %v1811
    %v2376 = vpack.c.b16 %v1818, %v1812
    %v2377 = vpack.c.b16 %v1819, %v1813
    %v2378 = vpack.c.b16 %v1826, %v1820
    %v2379 = vpack.c.b16 %v1827, %v1821
    %v2380 = vpack.c.b16 %v1828, %v1822
    %v2381 = vpack.c.b16 %v1829, %v1823
    %v2382 = vpack.c.b16 %v1830, %v1824
    %v2383 = vpack.c.b16 %v1831, %v1825
    %v2384 = vpack.c.b16 %v1838, %v1832
    %v2385 = vpack.c.b16 %v1839, %v1833
    %v2386 = vpack.c.b16 %v1840, %v1834
    %v2387 = vpack.c.b16 %v1841, %v1835
    %v2388 = vpack.c.b16 %v1842, %v1836
    %v2389 = vpack.c.b16 %v1843, %v1837
    %v2390 = vpack.c.b16 %v1850, %v1844
    %v2391 = vpack.c.b16 %v1851, %v1845
    %v2392 = vpack.c.b16 %v1852, %v1846
    %v2393 = vpack.c.b16 %v1853, %v1847
    %v2394 = vpack.c.b16 %v1854, %v1848
    %v2395 = vpack.c.b16 %v1855, %v1849
    %v2396 = vpack.c.b16 %v1862, %v1856
    %v2397 = vpack.c.b16 %v1863, %v1857
    %v2398 = vpack.c.b16 %v1864, %v1858
    %v2399 = vpack.c.b16 %v1865, %v1859
    %v2400 = vpack.c.b16 %v1866, %v1860
    %v2401 = vpack.c.b16 %v1867, %v1861
    %v2402 = vpack.c.b16 %v1874, %v1868
    %v2403 = vpack.c.b16 %v1875, %v1869
    %v2404 = vpack.c.b16 %v1876, %v1870
    %v2405 = vpack.c.b16 %v1877, %v1871
    %v2406 = vpack.c.b16 %v1878, %v1872
    %v2407 = vpack.c.b16 %v1879, %v1873
    %v2408 = vpack.c.b16 %v1886, %v1880
    %v2409 = vpack.c.b16 %v1887, %v1881
    %v2410 = vpack.c.b16 %v1888, %v1882
    %v2411 = vpack.c.b16 %v1889, %v1883
    %v2412 = vpack.c.b16 %v1890, %v1884
    %v2413 = vpack.c.b16 %v1891, %v1885
    %v2414 = vpack.c.b16 %v1898, %v1892
    %v2415 = vpack.c.b16 %v1899, %v1893
    %v2416 = vpack.c.b16 %v1900, %v1894
    %v2417 = vpack.c.b16 %v1901, %v1895
    %v2418 = vpack.c.b16 %v1902, %v1896
    %v2419 = vpack.c.b16 %v1903, %v1897
    %v2420 = vpack.c.b16 %v1910, %v1904
    %v2421 = vpack.c.b16 %v1911, %v1905
    %v2422 = vpack.c.b16 %v1912, %v1906
    %v2423 = vpack.c.b16 %v1913, %v1907
    %v2424 = vpack.c.b16 %v1914, %v1908
    %v2425 = vpack.c.b16 %v1915, %v1909
    %v2426 = vpack.c.b16 %v1922, %v1916
    %v2427 = vpack.c.b16 %v1923, %v1917
    %v2428 = vpack.c.b16 %v1924, %v1918
    %v2429 = vpack.c.b16 %v1925, %v1919
    %v2430 = vpack.c.b16 %v1926, %v1920
    %v2431 = vpack.c.b16 %v1927, %v1921
    %v2432 = vpack.c.b16 %v1934, %v1928
    %v2433 = vpack.c.b16 %v1935, %v1929
    %v2434 = vpack.c.b16 %v1936, %v1930
    %v2435 = vpack.c.b16 %v1937, %v1931
    %v2436 = vpack.c.b16 %v1938, %v1932
    %v2437 = vpack.c.b16 %v1939, %v1933
    %v2438 = vpack.c.b16 %v1946, %v1940
    %v2439 = vpack.c.b16 %v1947, %v1941
    %v2440 = vpack.c.b16 %v1948, %v1942
    %v2441 = vpack.c.b16 %v1949, %v1943
    %v2442 = vpack.c.b16 %v1950, %v1944
    %v2443 = vpack.c.b16 %v1951, %v1945
    %v2444 = vpack.c.b16 %v1958, %v1952
    %v2445 = vpack.c.b16 %v1959, %v1953
    %v2446 = vpack.c.b16 %v1960, %v1954
    %v2447 = vpack.c.b16 %v1961, %v1955
    %v2448 = vpack.c.b16 %v1962, %v1956
    %v2449 = vpack.c.b16 %v1963, %v1957
    %v2450 = vpack.c.b16 %v1970, %v1964
    %v2451 = vpack.c.b16 %v1971, %v1965
    %v2452 = vpack.c.b16 %v1972, %v1966
    %v2453 = vpack.c.b16 %v1973, %v1967
    %v2454 = vpack.c.b16 %v1974, %v1968
    %v2455 = vpack.c.b16 %v1975, %v1969
    %v2456 = vpack.c.b16 %v1982, %v1976
    %v2457 = vpack.c.b16 %v1983, %v1977
    %v2458 = vpack.c.b16 %v1984, %v1978
    %v2459 = vpack.c.b16 %v1985, %v1979
    %v2460 = vpack.c.b16 %v1986, %v1980
    %v2461 = vpack.c.b16 %v1987, %v1981
    %v2462 = vpack.c.b16 %v1994, %v1988
    %v2463 = vpack.c.b16 %v1995, %v1989
    %v2464 = vpack.c.b16 %v1996, %v1990
    %v2465 = vpack.c.b16 %v1997, %v1991
    %v2466 = vpack.c.b16 %v1998, %v1992
    %v2467 = vpack.c.b16 %v1999, %v1993
    %v2468 = vpack.c.b16 %v2006, %v2000
    %v2469 = vpack.c.b16 %v2007, %v2001
    %v2470 = vpack.c.b16 %v2008, %v2002
    %v2471 = vpack.c.b16 %v2009, %v2003
    %v2472 = vpack.c.b16 %v2010, %v2004
    %v2473 = vpack.c.b16 %v2011, %v2005
    %v2474 = vpack.c.b16 %v2018, %v2012
    %v2475 = vpack.c.b16 %v2019, %v2013
    %v2476 = vpack.c.b16 %v2020, %v2014
    %v2477 = vpack.c.b16 %v2021, %v2015
    %v2478 = vpack.c.b16 %v2022, %v2016
    %v2479 = vpack.c.b16 %v2023, %v2017
    %v2480 = vpack.c.b16 %v2030, %v2024
    %v2481 = vpack.c.b16 %v2031, %v2025
    %v2482 = vpack.c.b16 %v2032, %v2026
    %v2483 = vpack.c.b16 %v2033, %v2027
    %v2484 = vpack.c.b16 %v2034, %v2028
    %v2485 = vpack.c.b16 %v2035, %v2029
    %v2486 = vpack.c.b16 %v2042, %v2036
    %v2487 = vpack.c.b16 %v2043, %v2037
    %v2488 = vpack.c.b16 %v2044, %v2038
    %v2489 = vpack.c.b16 %v2045, %v2039
    %v2490 = vpack.c.b16 %v2046, %v2040
    %v2491 = vpack.c.b16 %v2047, %v2041
    %v2492 = vpack.c.b16 %v2054, %v2048
    %v2493 = vpack.c.b16 %v2055, %v2049
    %v2494 = vpack.c.b16 %v2056, %v2050
    %v2495 = vpack.c.b16 %v2057, %v2051
    %v2496 = vpack.c.b16 %v2058, %v2052
    %v2497 = vpack.c.b16 %v2059, %v2053
    %v2498 = vpack.c.b16 %v2066, %v2060
    %v2499 = vpack.c.b16 %v2067, %v2061
    %v2500 = vpack.c.b16 %v2068, %v2062
    %v2501 = vpack.c.b16 %v2069, %v2063
    %v2502 = vpack.c.b16 %v2070, %v2064
    %v2503 = vpack.c.b16 %v2071, %v2065
    %v2504 = vpack.c.b16 %v2078, %v2072
    %v2505 = vpack.c.b16 %v2079, %v2073
    %v2506 = vpack.c.b16 %v2080, %v2074
    %v2507 = vpack.c.b16 %v2081, %v2075
    %v2508 = vpack.c.b16 %v2082, %v2076
    %v2509 = vpack.c.b16 %v2083, %v2077
    %v2510 = vpack.c.b16 %v2090, %v2084
    %v2511 = vpack.c.b16 %v2091, %v2085
    %v2512 = vpack.c.b16 %v2092, %v2086
    %v2513 = vpack.c.b16 %v2093, %v2087
    %v2514 = vpack.c.b16 %v2094, %v2088
    %v2515 = vpack.c.b16 %v2095, %v2089
    %v2516 = vpack.c.b16 %v2102, %v2096
    %v2517 = vpack.c.b16 %v2103, %v2097
    %v2518 = vpack.c.b16 %v2104, %v2098
    %v2519 = vpack.c.b16 %v2105, %v2099
    %v2520 = vpack.c.b16 %v2106, %v2100
    %v2521 = vpack.c.b16 %v2107, %v2101
    %v2522 = vpack.c.b16 %v2114, %v2108
    %v2523 = vpack.c.b16 %v2115, %v2109
    %v2524 = vpack.c.b16 %v2116, %v2110
    %v2525 = vpack.c.b16 %v2117, %v2111
    %v2526 = vpack.c.b16 %v2118, %v2112
    %v2527 = vpack.c.b16 %v2119, %v2113
    %v2528 = vpack.c.b16 %v2126, %v2120
    %v2529 = vpack.c.b16 %v2127, %v2121
    %v2530 = vpack.c.b16 %v2128, %v2122
    %v2531 = vpack.c.b16 %v2129, %v2123
    %v2532 = vpack.c.b16 %v2130, %v2124
    %v2533 = vpack.c.b16 %v2131, %v2125
    %v2534 = vpack.c.b16 %v2138, %v2132
    %v2535 = vpack.c.b16 %v2139, %v2133
    %v2536 = vpack.c.b16 %v2140, %v2134
    %v2537 = vpack.c.b16 %v2141, %v2135
    %v2538 = vpack.c.b16 %v2142, %v2136
    %v2539 = vpack.c.b16 %v2143, %v2137
    %v2540 = vpack.c.b16 %v2150, %v2144
    %v2541 = vpack.c.b16 %v2151, %v2145
    %v2542 = vpack.c.b16 %v2152, %v2146
    %v2543 = vpack.c.b16 %v2153, %v2147
    %v2544 = vpack.c.b16 %v2154, %v2148
    %v2545 = vpack.c.b16 %v2155, %v2149
    %v2546 = vpack.c.b16 %v2162, %v2156
    %v2547 = vpack.c.b16 %v2163, %v2157
    %v2548 = vpack.c.b16 %v2164, %v2158
    %v2549 = vpack.c.b16 %v2165, %v2159
    %v2550 = vpack.c.b16 %v2166, %v2160
    %v2551 = vpack.c.b16 %v2167, %v2161
    %v2552 = vpack.c.b16 %v2174, %v2168
    %v2553 = vpack.c.b16 %v2175, %v2169
    %v2554 = vpack.c.b16 %v2176, %v2170
    %v2555 = vpack.c.b16 %v2177, %v2171
    %v2556 = vpack.c.b16 %v2178, %v2172
    %v2557 = vpack.c.b16 %v2179, %v2173
    %v2558 = vpack.c.b16 %v2186, %v2180
    %v2559 = vpack.c.b16 %v2187, %v2181
    %v2560 = vpack.c.b16 %v2188, %v2182
    %v2561 = vpack.c.b16 %v2189, %v2183
    %v2562 = vpack.c.b16 %v2190, %v2184
    %v2563 = vpack.c.b16 %v2191, %v2185
    %v2564 = vpack.c.b16 %v2198, %v2192
    %v2565 = vpack.c.b16 %v2199, %v2193
    %v2566 = vpack.c.b16 %v2200, %v2194
    %v2567 = vpack.c.b16 %v2201, %v2195
    %v2568 = vpack.c.b16 %v2202, %v2196
    %v2569 = vpack.c.b16 %v2203, %v2197
    %v2570 = vpack.c.b16 %v2210, %v2204
    %v2571 = vpack.c.b16 %v2211, %v2205
    %v2572 = vpack.c.b16 %v2212, %v2206
    %v2573 = vpack.c.b16 %v2213, %v2207
    %v2574 = vpack.c.b16 %v2214, %v2208
    %v2575 = vpack.c.b16 %v2215, %v2209
    %v2576 = vpack.c.b16 %v2222, %v2216
    %v2577 = vpack.c.b16 %v2223, %v2217
    %v2578 = vpack.c.b16 %v2224, %v2218
    %v2579 = vpack.c.b16 %v2225, %v2219
    %v2580 = vpack.c.b16 %v2226, %v2220
    %v2581 = vpack.c.b16 %v2227, %v2221
    %v2582 = vpack.c.b16 %v2234, %v2228
    %v2583 = vpack.c.b16 %v2235, %v2229
    %v2584 = vpack.c.b16 %v2236, %v2230
    %v2585 = vpack.c.b16 %v2237, %v2231
    %v2586 = vpack.c.b16 %v2238, %v2232
    %v2587 = vpack.c.b16 %v2239, %v2233
    %v2588 = vpack.c.b16 %v2246, %v2240
    %v2589 = vpack.c.b16 %v2247, %v2241
    %v2590 = vpack.c.b16 %v2248, %v2242
    %v2591 = vpack.c.b16 %v2249, %v2243
    %v2592 = vpack.c.b16 %v2250, %v2244
    %v2593 = vpack.c.b16 %v2251, %v2245
    %v2594 = vpack.c.b16 %v2258, %v2252
    %v2595 = vpack.c.b16 %v2259, %v2253
    %v2596 = vpack.c.b16 %v2260, %v2254
    %v2597 = vpack.c.b16 %v2261, %v2255
    %v2598 = vpack.c.b16 %v2262, %v2256
    %v2599 = vpack.c.b16 %v2263, %v2257
    %v2600 = vpack.c.b16 %v2270, %v2264
    %v2601 = vpack.c.b16 %v2271, %v2265
    %v2602 = vpack.c.b16 %v2272, %v2266
    %v2603 = vpack.c.b16 %v2273, %v2267
    %v2604 = vpack.c.b16 %v2274, %v2268
    %v2605 = vpack.c.b16 %v2275, %v2269
    %v2606 = vpack.c.b16 %v2282, %v2276
    %v2607 = vpack.c.b16 %v2283, %v2277
    %v2608 = vpack.c.b16 %v2284, %v2278
    %v2609 = vpack.c.b16 %v2285, %v2279
    %v2610 = vpack.c.b16 %v2286, %v2280
    %v2611 = vpack.c.b16 %v2287, %v2281
    %v2612 = vpack.c.b16 %v2294, %v2288
    %v2613 = vpack.c.b16 %v2295, %v2289
    %v2614 = vpack.c.b16 %v2296, %v2290
    %v2615 = vpack.c.b16 %v2297, %v2291
    %v2616 = vpack.c.b16 %v2298, %v2292
    %v2617 = vpack.c.b16 %v2299, %v2293
    %v2618 = vpack.c.b16 %v2306, %v2300
    %v2619 = vpack.c.b16 %v2307, %v2301
    %v2620 = vpack.c.b16 %v2308, %v2302
    %v2621 = vpack.c.b16 %v2309, %v2303
    %v2622 = vpack.c.b16 %v2310, %v2304
    %v2623 = vpack.c.b16 %v2311, %v2305
    %v2624 = vpack.c.b16 %v2318, %v2312
    %v2625 = vpack.c.b16 %v2319, %v2313
    %v2626 = vpack.c.b16 %v2320, %v2314
    %v2627 = vpack.c.b16 %v2321, %v2315
    %v2628 = vpack.c.b16 %v2322, %v2316
    %v2629 = vpack.c.b16 %v2323, %v2317
    %v2630 = vpack.c.b16 %v2330, %v2324
    %v2631 = vpack.c.b16 %v2331, %v2325
    %v2632 = vpack.c.b16 %v2332, %v2326
    %v2633 = vpack.c.b16 %v2333, %v2327
    %v2634 = vpack.c.b16 %v2334, %v2328
    %v2635 = vpack.c.b16 %v2335, %v2329
    %v2636 = vpack.c.b16 %v2342, %v2336
    %v2637 = vpack.c.b16 %v2343, %v2337
    %v2638 = vpack.c.b16 %v2344, %v2338
    %v2639 = vpack.c.b16 %v2345, %v2339
    %v2640 = vpack.c.b16 %v2346, %v2340
    %v2641 = vpack.c.b16 %v2347, %v2341
    %v2642 = vpack.c.b16 %v2354, %v2348
    %v2643 = vpack.c.b16 %v2355, %v2349
    %v2644 = vpack.c.b16 %v2356, %v2350
    %v2645 = vpack.c.b16 %v2357, %v2351
    %v2646 = vpack.c.b16 %v2358, %v2352
    %v2647 = vpack.c.b16 %v2359, %v2353
    %2936 = vmatprep.subr.bf16.mxu0 0
    %2937 = vmatpush1.bf16.msra.mxu0 %v1448
    %2938 = vmatprep.subr.bf16.mxu0 0
    %2939 = vmatpush1.bf16.msra.mxu0 %v1449
    %2940 = vmatprep.subr.bf16.mxu0 0
    %2941 = vmatpush1.bf16.msra.mxu0 %v1450
    %2942 = vmatprep.subr.bf16.mxu0 0
    %2943 = vmatpush1.bf16.msra.mxu0 %v1451
    %2944 = vmatprep.subr.bf16.mxu0 0
    %2945 = vmatpush1.bf16.msra.mxu0 %v1452
    %2946 = vmatprep.subr.bf16.mxu0 0
    %2947 = vmatpush1.bf16.msra.mxu0 %v1453
    %2948 = vmatprep.subr.bf16.mxu0 0
    %2949 = vmatpush1.bf16.msra.mxu0 %v1454
    %2950 = vmatprep.subr.bf16.mxu0 0
    %2951 = vmatpush1.bf16.msra.mxu0 %v1455
    %2952 = vmatprep.subr.bf16.mxu0 0
    %2953 = vmatpush1.bf16.msra.mxu0 %v1456
    %2954 = vmatprep.subr.bf16.mxu0 0
    %2955 = vmatpush1.bf16.msra.mxu0 %v1457
    %2956 = vmatprep.subr.bf16.mxu0 0
    %2957 = vmatpush1.bf16.msra.mxu0 %v1458
    %2958 = vmatprep.subr.bf16.mxu0 0
    %2959 = vmatpush1.bf16.msra.mxu0 %v1459
    %2960 = vmatprep.subr.bf16.mxu0 0
    %2961 = vmatpush1.bf16.msra.mxu0 %v1460
    %2962 = vmatprep.subr.bf16.mxu0 0
    %2963 = vmatpush1.bf16.msra.mxu0 %v1461
    %2964 = vmatprep.subr.bf16.mxu0 0
    %2965 = vmatpush1.bf16.msra.mxu0 %v1462
    %2966 = vmatprep.subr.bf16.mxu0 0
    %2967 = vmatpush1.bf16.msra.mxu0 %v1463
    %2968 = vmatprep.mubr.bf16.mxu0 %v2361
    %2969 = vmatmul.mubr.bf16.gmra.mrb[0].mxu0 %v2360
    %v2970 = vpop.f32.mrb[0].mxu0
    %v2971 = vadd.f32 0.0, %v2970
    %v2972 = vpop.f32.mrb[0].mxu0
    %v2973 = vpop.f32.mrb[0].mxu0
    %v2974 = vadd.f32 0.0, %v2973
    %v2975 = vpop.f32.mrb[0].mxu0
    %2976 = vmatprep.mubr.bf16.mxu0 %v2367
    %2977 = vmatmul.mubr.bf16.gmra.mrb[0].mxu0 %v2366
    %v2978 = vpop.f32.mrb[0].mxu0
    %v2979 = vadd.f32 0.0, %v2978
    %v2980 = vpop.f32.mrb[0].mxu0
    %v2981 = vpop.f32.mrb[0].mxu0
    %v2982 = vadd.f32 0.0, %v2981
    %v2983 = vpop.f32.mrb[0].mxu0
    %2984 = vmatprep.mubr.bf16.mxu0 %v2373
    %2985 = vmatmul.mubr.bf16.gmra.mrb[0].mxu0 %v2372
    %v2986 = vpop.f32.mrb[0].mxu0
    %v2987 = vadd.f32 0.0, %v2986
    %v2988 = vpop.f32.mrb[0].mxu0
    %v2989 = vpop.f32.mrb[0].mxu0
    %v2990 = vadd.f32 0.0, %v2989
    %v2991 = vpop.f32.mrb[0].mxu0
    %2992 = vmatprep.mubr.bf16.mxu0 %v2379
    %2993 = vmatmul.mubr.bf16.gmra.mrb[0].mxu0 %v2378
    %v2994 = vpop.f32.mrb[0].mxu0
    %v2995 = vadd.f32 0.0, %v2994
    %v2996 = vpop.f32.mrb[0].mxu0
    %v2997 = vpop.f32.mrb[0].mxu0
    %v2998 = vadd.f32 0.0, %v2997
    %v2999 = vpop.f32.mrb[0].mxu0
    %3000 = vmatprep.mubr.bf16.mxu0 %v2385
    %3001 = vmatmul.mubr.bf16.gmra.mrb[0].mxu0 %v2384
    %v3002 = vpop.f32.mrb[0].mxu0
    %v3003 = vadd.f32 0.0, %v3002
    %v3004 = vpop.f32.mrb[0].mxu0
    %v3005 = vpop.f32.mrb[0].mxu0
    %v3006 = vadd.f32 0.0, %v3005
    %v3007 = vpop.f32.mrb[0].mxu0
    %3008 = vmatprep.mubr.bf16.mxu0 %v2391
    %3009 = vmatmul.mubr.bf16.gmra.mrb[0].mxu0 %v2390
    %v3010 = vpop.f32.mrb[0].mxu0
    %v3011 = vadd.f32 0.0, %v3010
    %v3012 = vpop.f32.mrb[0].mxu0
    %v3013 = vpop.f32.mrb[0].mxu0
    %v3014 = vadd.f32 0.0, %v3013
    %v3015 = vpop.f32.mrb[0].mxu0
    %3016 = vmatprep.mubr.bf16.mxu0 %v2397
    %3017 = vmatmul.mubr.bf16.gmra.mrb[0].mxu0 %v2396
    %v3018 = vpop.f32.mrb[0].mxu0
    %v3019 = vadd.f32 0.0, %v3018
    %v3020 = vpop.f32.mrb[0].mxu0
    %v3021 = vpop.f32.mrb[0].mxu0
    %v3022 = vadd.f32 0.0, %v3021
    %v3023 = vpop.f32.mrb[0].mxu0
    %3024 = vmatprep.mubr.bf16.mxu0 %v2403
    %3025 = vmatmul.mubr.bf16.gmra.mrb[0].mxu0 %v2402
    %v3026 = vpop.f32.mrb[0].mxu0
    %v3027 = vadd.f32 0.0, %v3026
    %v3028 = vpop.f32.mrb[0].mxu0
    %v3029 = vpop.f32.mrb[0].mxu0
    %v3030 = vadd.f32 0.0, %v3029
    %v3031 = vpop.f32.mrb[0].mxu0
    %3032 = vmatprep.mubr.bf16.mxu0 %v2409
    %3033 = vmatmul.mubr.bf16.gmra.mrb[0].mxu0 %v2408
    %v3034 = vpop.f32.mrb[0].mxu0
    %v3035 = vadd.f32 0.0, %v3034
    %v3036 = vpop.f32.mrb[0].mxu0
    %v3037 = vpop.f32.mrb[0].mxu0
    %v3038 = vadd.f32 0.0, %v3037
    %v3039 = vpop.f32.mrb[0].mxu0
    %3040 = vmatprep.mubr.bf16.mxu0 %v2415
    %3041 = vmatmul.mubr.bf16.gmra.mrb[0].mxu0 %v2414
    %v3042 = vpop.f32.mrb[0].mxu0
    %v3043 = vadd.f32 0.0, %v3042
    %v3044 = vpop.f32.mrb[0].mxu0
    %v3045 = vpop.f32.mrb[0].mxu0
    %v3046 = vadd.f32 0.0, %v3045
    %v3047 = vpop.f32.mrb[0].mxu0
    %3048 = vmatprep.mubr.bf16.mxu0 %v2421
    %3049 = vmatmul.mubr.bf16.gmra.mrb[0].mxu0 %v2420
    %v3050 = vpop.f32.mrb[0].mxu0
    %v3051 = vadd.f32 0.0, %v3050
    %v3052 = vpop.f32.mrb[0].mxu0
    %v3053 = vpop.f32.mrb[0].mxu0
    %v3054 = vadd.f32 0.0, %v3053
    %v3055 = vpop.f32.mrb[0].mxu0
    %3056 = vmatprep.mubr.bf16.mxu0 %v2427
    %3057 = vmatmul.mubr.bf16.gmra.mrb[0].mxu0 %v2426
    %v3058 = vpop.f32.mrb[0].mxu0
    %v3059 = vadd.f32 0.0, %v3058
    %v3060 = vpop.f32.mrb[0].mxu0
    %v3061 = vpop.f32.mrb[0].mxu0
    %v3062 = vadd.f32 0.0, %v3061
    %v3063 = vpop.f32.mrb[0].mxu0
    %3064 = vmatprep.mubr.bf16.mxu0 %v2433
    %3065 = vmatmul.mubr.bf16.gmra.mrb[0].mxu0 %v2432
    %v3066 = vpop.f32.mrb[0].mxu0
    %v3067 = vadd.f32 0.0, %v3066
    %v3068 = vpop.f32.mrb[0].mxu0
    %v3069 = vpop.f32.mrb[0].mxu0
    %v3070 = vadd.f32 0.0, %v3069
    %v3071 = vpop.f32.mrb[0].mxu0
    %3072 = vmatprep.mubr.bf16.mxu0 %v2439
    %3073 = vmatmul.mubr.bf16.gmra.mrb[0].mxu0 %v2438
    %v3074 = vpop.f32.mrb[0].mxu0
    %v3075 = vadd.f32 0.0, %v3074
    %v3076 = vpop.f32.mrb[0].mxu0
    %v3077 = vpop.f32.mrb[0].mxu0
    %v3078 = vadd.f32 0.0, %v3077
    %v3079 = vpop.f32.mrb[0].mxu0
    %3080 = vmatprep.mubr.bf16.mxu0 %v2445
    %3081 = vmatmul.mubr.bf16.gmra.mrb[0].mxu0 %v2444
    %v3082 = vpop.f32.mrb[0].mxu0
    %v3083 = vadd.f32 0.0, %v3082
    %v3084 = vpop.f32.mrb[0].mxu0
    %v3085 = vpop.f32.mrb[0].mxu0
    %v3086 = vadd.f32 0.0, %v3085
    %v3087 = vpop.f32.mrb[0].mxu0
    %3088 = vmatprep.mubr.bf16.mxu0 %v2451
    %3089 = vmatmul.mubr.bf16.gmra.mrb[0].mxu0 %v2450
    %v3090 = vpop.f32.mrb[0].mxu0
    %v3091 = vadd.f32 0.0, %v3090
    %v3092 = vpop.f32.mrb[0].mxu0
    %v3093 = vpop.f32.mrb[0].mxu0
    %v3094 = vadd.f32 0.0, %v3093
    %v3095 = vpop.f32.mrb[0].mxu0
    %3096 = vmatprep.mubr.bf16.mxu0 %v2457
    %3097 = vmatmul.mubr.bf16.gmra.mrb[0].mxu0 %v2456
    %v3098 = vpop.f32.mrb[0].mxu0
    %v3099 = vadd.f32 0.0, %v3098
    %v3100 = vpop.f32.mrb[0].mxu0
    %v3101 = vpop.f32.mrb[0].mxu0
    %v3102 = vadd.f32 0.0, %v3101
    %v3103 = vpop.f32.mrb[0].mxu0
    %3104 = vmatprep.mubr.bf16.mxu0 %v2463
    %3105 = vmatmul.mubr.bf16.gmra.mrb[0].mxu0 %v2462
    %v3106 = vpop.f32.mrb[0].mxu0
    %v3107 = vadd.f32 0.0, %v3106
    %v3108 = vpop.f32.mrb[0].mxu0
    %v3109 = vpop.f32.mrb[0].mxu0
    %v3110 = vadd.f32 0.0, %v3109
    %v3111 = vpop.f32.mrb[0].mxu0
    %3112 = vmatprep.mubr.bf16.mxu0 %v2469
    %3113 = vmatmul.mubr.bf16.gmra.mrb[0].mxu0 %v2468
    %v3114 = vpop.f32.mrb[0].mxu0
    %v3115 = vadd.f32 0.0, %v3114
    %v3116 = vpop.f32.mrb[0].mxu0
    %v3117 = vpop.f32.mrb[0].mxu0
    %v3118 = vadd.f32 0.0, %v3117
    %v3119 = vpop.f32.mrb[0].mxu0
    %3120 = vmatprep.mubr.bf16.mxu0 %v2475
    %3121 = vmatmul.mubr.bf16.gmra.mrb[0].mxu0 %v2474
    %v3122 = vpop.f32.mrb[0].mxu0
    %v3123 = vadd.f32 0.0, %v3122
    %v3124 = vpop.f32.mrb[0].mxu0
    %v3125 = vpop.f32.mrb[0].mxu0
    %v3126 = vadd.f32 0.0, %v3125
    %v3127 = vpop.f32.mrb[0].mxu0
    %3128 = vmatprep.mubr.bf16.mxu0 %v2481
    %3129 = vmatmul.mubr.bf16.gmra.mrb[0].mxu0 %v2480
    %v3130 = vpop.f32.mrb[0].mxu0
    %v3131 = vadd.f32 0.0, %v3130
    %v3132 = vpop.f32.mrb[0].mxu0
    %v3133 = vpop.f32.mrb[0].mxu0
    %v3134 = vadd.f32 0.0, %v3133
    %v3135 = vpop.f32.mrb[0].mxu0
    %3136 = vmatprep.mubr.bf16.mxu0 %v2487
    %3137 = vmatmul.mubr.bf16.gmra.mrb[0].mxu0 %v2486
    %v3138 = vpop.f32.mrb[0].mxu0
    %v3139 = vadd.f32 0.0, %v3138
    %v3140 = vpop.f32.mrb[0].mxu0
    %v3141 = vpop.f32.mrb[0].mxu0
    %v3142 = vadd.f32 0.0, %v3141
    %v3143 = vpop.f32.mrb[0].mxu0
    %3144 = vmatprep.mubr.bf16.mxu0 %v2493
    %3145 = vmatmul.mubr.bf16.gmra.mrb[0].mxu0 %v2492
    %v3146 = vpop.f32.mrb[0].mxu0
    %v3147 = vadd.f32 0.0, %v3146
    %v3148 = vpop.f32.mrb[0].mxu0
    %v3149 = vpop.f32.mrb[0].mxu0
    %v3150 = vadd.f32 0.0, %v3149
    %v3151 = vpop.f32.mrb[0].mxu0
    %3152 = vmatprep.mubr.bf16.mxu0 %v2499
    %3153 = vmatmul.mubr.bf16.gmra.mrb[0].mxu0 %v2498
    %v3154 = vpop.f32.mrb[0].mxu0
    %v3155 = vadd.f32 0.0, %v3154
    %v3156 = vpop.f32.mrb[0].mxu0
    %v3157 = vpop.f32.mrb[0].mxu0
    %v3158 = vadd.f32 0.0, %v3157
    %v3159 = vpop.f32.mrb[0].mxu0
    %3160 = vmatprep.mubr.bf16.mxu0 %v2505
    %3161 = vmatmul.mubr.bf16.gmra.mrb[0].mxu0 %v2504
    %v3162 = vpop.f32.mrb[0].mxu0
    %v3163 = vadd.f32 0.0, %v3162
    %v3164 = vpop.f32.mrb[0].mxu0
    %v3165 = vpop.f32.mrb[0].mxu0
    %v3166 = vadd.f32 0.0, %v3165
    %v3167 = vpop.f32.mrb[0].mxu0
    %3168 = vmatprep.mubr.bf16.mxu0 %v2511
    %3169 = vmatmul.mubr.bf16.gmra.mrb[0].mxu0 %v2510
    %v3170 = vpop.f32.mrb[0].mxu0
    %v3171 = vadd.f32 0.0, %v3170
    %v3172 = vpop.f32.mrb[0].mxu0
    %v3173 = vpop.f32.mrb[0].mxu0
    %v3174 = vadd.f32 0.0, %v3173
    %v3175 = vpop.f32.mrb[0].mxu0
    %3176 = vmatprep.mubr.bf16.mxu0 %v2517
    %3177 = vmatmul.mubr.bf16.gmra.mrb[0].mxu0 %v2516
    %v3178 = vpop.f32.mrb[0].mxu0
    %v3179 = vadd.f32 0.0, %v3178
    %v3180 = vpop.f32.mrb[0].mxu0
    %v3181 = vpop.f32.mrb[0].mxu0
    %v3182 = vadd.f32 0.0, %v3181
    %v3183 = vpop.f32.mrb[0].mxu0
    %3184 = vmatprep.mubr.bf16.mxu0 %v2523
    %3185 = vmatmul.mubr.bf16.gmra.mrb[0].mxu0 %v2522
    %v3186 = vpop.f32.mrb[0].mxu0
    %v3187 = vadd.f32 0.0, %v3186
    %v3188 = vpop.f32.mrb[0].mxu0
    %v3189 = vpop.f32.mrb[0].mxu0
    %v3190 = vadd.f32 0.0, %v3189
    %v3191 = vpop.f32.mrb[0].mxu0
    %3192 = vmatprep.mubr.bf16.mxu0 %v2529
    %3193 = vmatmul.mubr.bf16.gmra.mrb[0].mxu0 %v2528
    %v3194 = vpop.f32.mrb[0].mxu0
    %v3195 = vadd.f32 0.0, %v3194
    %v3196 = vpop.f32.mrb[0].mxu0
    %v3197 = vpop.f32.mrb[0].mxu0
    %v3198 = vadd.f32 0.0, %v3197
    %v3199 = vpop.f32.mrb[0].mxu0
    %3200 = vmatprep.mubr.bf16.mxu0 %v2535
    %3201 = vmatmul.mubr.bf16.gmra.mrb[0].mxu0 %v2534
    %v3202 = vpop.f32.mrb[0].mxu0
    %v3203 = vadd.f32 0.0, %v3202
    %v3204 = vpop.f32.mrb[0].mxu0
    %v3205 = vpop.f32.mrb[0].mxu0
    %v3206 = vadd.f32 0.0, %v3205
    %v3207 = vpop.f32.mrb[0].mxu0
    %3208 = vmatprep.mubr.bf16.mxu0 %v2541
    %3209 = vmatmul.mubr.bf16.gmra.mrb[0].mxu0 %v2540
    %v3210 = vpop.f32.mrb[0].mxu0
    %v3211 = vadd.f32 0.0, %v3210
    %v3212 = vpop.f32.mrb[0].mxu0
    %v3213 = vpop.f32.mrb[0].mxu0
    %v3214 = vadd.f32 0.0, %v3213
    %v3215 = vpop.f32.mrb[0].mxu0
    %3216 = vmatprep.mubr.bf16.mxu0 %v2547
    %3217 = vmatmul.mubr.bf16.gmra.mrb[0].mxu0 %v2546
    %v3218 = vpop.f32.mrb[0].mxu0
    %v3219 = vadd.f32 0.0, %v3218
    %v3220 = vpop.f32.mrb[0].mxu0
    %v3221 = vpop.f32.mrb[0].mxu0
    %v3222 = vadd.f32 0.0, %v3221
    %v3223 = vpop.f32.mrb[0].mxu0
    %3224 = vmatprep.mubr.bf16.mxu0 %v2553
    %3225 = vmatmul.mubr.bf16.gmra.mrb[0].mxu0 %v2552
    %v3226 = vpop.f32.mrb[0].mxu0
    %v3227 = vadd.f32 0.0, %v3226
    %v3228 = vpop.f32.mrb[0].mxu0
    %v3229 = vpop.f32.mrb[0].mxu0
    %v3230 = vadd.f32 0.0, %v3229
    %v3231 = vpop.f32.mrb[0].mxu0
    %3232 = vmatprep.mubr.bf16.mxu0 %v2559
    %3233 = vmatmul.mubr.bf16.gmra.mrb[0].mxu0 %v2558
    %v3234 = vpop.f32.mrb[0].mxu0
    %v3235 = vadd.f32 0.0, %v3234
    %v3236 = vpop.f32.mrb[0].mxu0
    %v3237 = vpop.f32.mrb[0].mxu0
    %v3238 = vadd.f32 0.0, %v3237
    %v3239 = vpop.f32.mrb[0].mxu0
    %3240 = vmatprep.mubr.bf16.mxu0 %v2565
    %3241 = vmatmul.mubr.bf16.gmra.mrb[0].mxu0 %v2564
    %v3242 = vpop.f32.mrb[0].mxu0
    %v3243 = vadd.f32 0.0, %v3242
    %v3244 = vpop.f32.mrb[0].mxu0
    %v3245 = vpop.f32.mrb[0].mxu0
    %v3246 = vadd.f32 0.0, %v3245
    %v3247 = vpop.f32.mrb[0].mxu0
    %3248 = vmatprep.mubr.bf16.mxu0 %v2571
    %3249 = vmatmul.mubr.bf16.gmra.mrb[0].mxu0 %v2570
    %v3250 = vpop.f32.mrb[0].mxu0
    %v3251 = vadd.f32 0.0, %v3250
    %v3252 = vpop.f32.mrb[0].mxu0
    %v3253 = vpop.f32.mrb[0].mxu0
    %v3254 = vadd.f32 0.0, %v3253
    %v3255 = vpop.f32.mrb[0].mxu0
    %3256 = vmatprep.mubr.bf16.mxu0 %v2577
    %3257 = vmatmul.mubr.bf16.gmra.mrb[0].mxu0 %v2576
    %v3258 = vpop.f32.mrb[0].mxu0
    %v3259 = vadd.f32 0.0, %v3258
    %v3260 = vpop.f32.mrb[0].mxu0
    %v3261 = vpop.f32.mrb[0].mxu0
    %v3262 = vadd.f32 0.0, %v3261
    %v3263 = vpop.f32.mrb[0].mxu0
    %3264 = vmatprep.mubr.bf16.mxu0 %v2583
    %3265 = vmatmul.mubr.bf16.gmra.mrb[0].mxu0 %v2582
    %v3266 = vpop.f32.mrb[0].mxu0
    %v3267 = vadd.f32 0.0, %v3266
    %v3268 = vpop.f32.mrb[0].mxu0
    %v3269 = vpop.f32.mrb[0].mxu0
    %v3270 = vadd.f32 0.0, %v3269
    %v3271 = vpop.f32.mrb[0].mxu0
    %3272 = vmatprep.mubr.bf16.mxu0 %v2589
    %3273 = vmatmul.mubr.bf16.gmra.mrb[0].mxu0 %v2588
    %v3274 = vpop.f32.mrb[0].mxu0
    %v3275 = vadd.f32 0.0, %v3274
    %v3276 = vpop.f32.mrb[0].mxu0
    %v3277 = vpop.f32.mrb[0].mxu0
    %v3278 = vadd.f32 0.0, %v3277
    %v3279 = vpop.f32.mrb[0].mxu0
    %3280 = vmatprep.mubr.bf16.mxu0 %v2595
    %3281 = vmatmul.mubr.bf16.gmra.mrb[0].mxu0 %v2594
    %v3282 = vpop.f32.mrb[0].mxu0
    %v3283 = vadd.f32 0.0, %v3282
    %v3284 = vpop.f32.mrb[0].mxu0
    %v3285 = vpop.f32.mrb[0].mxu0
    %v3286 = vadd.f32 0.0, %v3285
    %v3287 = vpop.f32.mrb[0].mxu0
    %3288 = vmatprep.mubr.bf16.mxu0 %v2601
    %3289 = vmatmul.mubr.bf16.gmra.mrb[0].mxu0 %v2600
    %v3290 = vpop.f32.mrb[0].mxu0
    %v3291 = vadd.f32 0.0, %v3290
    %v3292 = vpop.f32.mrb[0].mxu0
    %v3293 = vpop.f32.mrb[0].mxu0
    %v3294 = vadd.f32 0.0, %v3293
    %v3295 = vpop.f32.mrb[0].mxu0
    %3296 = vmatprep.mubr.bf16.mxu0 %v2607
    %3297 = vmatmul.mubr.bf16.gmra.mrb[0].mxu0 %v2606
    %v3298 = vpop.f32.mrb[0].mxu0
    %v3299 = vadd.f32 0.0, %v3298
    %v3300 = vpop.f32.mrb[0].mxu0
    %v3301 = vpop.f32.mrb[0].mxu0
    %v3302 = vadd.f32 0.0, %v3301
    %v3303 = vpop.f32.mrb[0].mxu0
    %3304 = vmatprep.mubr.bf16.mxu0 %v2613
    %3305 = vmatmul.mubr.bf16.gmra.mrb[0].mxu0 %v2612
    %v3306 = vpop.f32.mrb[0].mxu0
    %v3307 = vadd.f32 0.0, %v3306
    %v3308 = vpop.f32.mrb[0].mxu0
    %v3309 = vpop.f32.mrb[0].mxu0
    %v3310 = vadd.f32 0.0, %v3309
    %v3311 = vpop.f32.mrb[0].mxu0
    %3312 = vmatprep.mubr.bf16.mxu0 %v2619
    %3313 = vmatmul.mubr.bf16.gmra.mrb[0].mxu0 %v2618
    %v3314 = vpop.f32.mrb[0].mxu0
    %v3315 = vadd.f32 0.0, %v3314
    %v3316 = vpop.f32.mrb[0].mxu0
    %v3317 = vpop.f32.mrb[0].mxu0
    %v3318 = vadd.f32 0.0, %v3317
    %v3319 = vpop.f32.mrb[0].mxu0
    %3320 = vmatprep.mubr.bf16.mxu0 %v2625
    %3321 = vmatmul.mubr.bf16.gmra.mrb[0].mxu0 %v2624
    %v3322 = vpop.f32.mrb[0].mxu0
    %v3323 = vadd.f32 0.0, %v3322
    %v3324 = vpop.f32.mrb[0].mxu0
    %v3325 = vpop.f32.mrb[0].mxu0
    %v3326 = vadd.f32 0.0, %v3325
    %v3327 = vpop.f32.mrb[0].mxu0
    %3328 = vmatprep.mubr.bf16.mxu0 %v2631
    %3329 = vmatmul.mubr.bf16.gmra.mrb[0].mxu0 %v2630
    %v3330 = vpop.f32.mrb[0].mxu0
    %v3331 = vadd.f32 0.0, %v3330
    %v3332 = vpop.f32.mrb[0].mxu0
    %v3333 = vpop.f32.mrb[0].mxu0
    %v3334 = vadd.f32 0.0, %v3333
    %v3335 = vpop.f32.mrb[0].mxu0
    %3336 = vmatprep.mubr.bf16.mxu0 %v2637
    %3337 = vmatmul.mubr.bf16.gmra.mrb[0].mxu0 %v2636
    %v3338 = vpop.f32.mrb[0].mxu0
    %v3339 = vadd.f32 0.0, %v3338
    %v3340 = vpop.f32.mrb[0].mxu0
    %v3341 = vpop.f32.mrb[0].mxu0
    %v3342 = vadd.f32 0.0, %v3341
    %v3343 = vpop.f32.mrb[0].mxu0
    %3344 = vmatprep.mubr.bf16.mxu0 %v2643
    %3345 = vmatmul.mubr.bf16.gmra.mrb[0].mxu0 %v2642
    %v3346 = vpop.f32.mrb[0].mxu0
    %v3347 = vadd.f32 0.0, %v3346
    %v3348 = vpop.f32.mrb[0].mxu0
    %v3349 = vpop.f32.mrb[0].mxu0
    %v3350 = vadd.f32 0.0, %v3349
    %v3351 = vpop.f32.mrb[0].mxu0
    %3352 = vdwg.mxu0
    %3353 = vmatprep.subr.bf16.mxu0 0
    %3354 = vmatpush1.bf16.msra.mxu0 %v1464
    %3355 = vmatprep.subr.bf16.mxu0 0
    %3356 = vmatpush1.bf16.msra.mxu0 %v1465
    %3357 = vmatprep.subr.bf16.mxu0 0
    %3358 = vmatpush1.bf16.msra.mxu0 %v1466
    %3359 = vmatprep.subr.bf16.mxu0 0
    %3360 = vmatpush1.bf16.msra.mxu0 %v1467
    %3361 = vmatprep.subr.bf16.mxu0 0
    %3362 = vmatpush1.bf16.msra.mxu0 %v1468
    %3363 = vmatprep.subr.bf16.mxu0 0
    %3364 = vmatpush1.bf16.msra.mxu0 %v1469
    %3365 = vmatprep.subr.bf16.mxu0 0
    %3366 = vmatpush1.bf16.msra.mxu0 %v1470
    %3367 = vmatprep.subr.bf16.mxu0 0
    %3368 = vmatpush1.bf16.msra.mxu0 %v1471
    %3369 = vmatprep.subr.bf16.mxu0 0
    %3370 = vmatpush1.bf16.msra.mxu0 %v1472
    %3371 = vmatprep.subr.bf16.mxu0 0
    %3372 = vmatpush1.bf16.msra.mxu0 %v1473
    %3373 = vmatprep.subr.bf16.mxu0 0
    %3374 = vmatpush1.bf16.msra.mxu0 %v1474
    %3375 = vmatprep.subr.bf16.mxu0 0
    %3376 = vmatpush1.bf16.msra.mxu0 %v1475
    %3377 = vmatprep.subr.bf16.mxu0 0
    %3378 = vmatpush1.bf16.msra.mxu0 %v1476
    %3379 = vmatprep.subr.bf16.mxu0 0
    %3380 = vmatpush1.bf16.msra.mxu0 %v1477
    %3381 = vmatprep.subr.bf16.mxu0 0
    %3382 = vmatpush1.bf16.msra.mxu0 %v1478
    %3383 = vmatprep.subr.bf16.mxu0 0
    %3384 = vmatpush1.bf16.msra.mxu0 %v1479
    %3385 = vmatprep.mubr.bf16.mxu0 %v2363
    %3386 = vmatmul.mubr.bf16.gmra.mrb[0].mxu0 %v2362
    %v3387 = vpop.f32.mrb[0].mxu0
    %v3388 = vadd.f32 %v2971, %v3387
    %v3389 = vpop.f32.mrb[0].mxu0
    %v3390 = vpop.f32.mrb[0].mxu0
    %v3391 = vadd.f32 %v2974, %v3390
    %v3392 = vpop.f32.mrb[0].mxu0
    %3393 = vmatprep.mubr.bf16.mxu0 %v2369
    %3394 = vmatmul.mubr.bf16.gmra.mrb[0].mxu0 %v2368
    %v3395 = vpop.f32.mrb[0].mxu0
    %v3396 = vadd.f32 %v2979, %v3395
    %v3397 = vpop.f32.mrb[0].mxu0
    %v3398 = vpop.f32.mrb[0].mxu0
    %v3399 = vadd.f32 %v2982, %v3398
    %v3400 = vpop.f32.mrb[0].mxu0
    %3401 = vmatprep.mubr.bf16.mxu0 %v2375
    %3402 = vmatmul.mubr.bf16.gmra.mrb[0].mxu0 %v2374
    %v3403 = vpop.f32.mrb[0].mxu0
    %v3404 = vadd.f32 %v2987, %v3403
    %v3405 = vpop.f32.mrb[0].mxu0
    %v3406 = vpop.f32.mrb[0].mxu0
    %v3407 = vadd.f32 %v2990, %v3406
    %v3408 = vpop.f32.mrb[0].mxu0
    %3409 = vmatprep.mubr.bf16.mxu0 %v2381
    %3410 = vmatmul.mubr.bf16.gmra.mrb[0].mxu0 %v2380
    %v3411 = vpop.f32.mrb[0].mxu0
    %v3412 = vadd.f32 %v2995, %v3411
    %v3413 = vpop.f32.mrb[0].mxu0
    %v3414 = vpop.f32.mrb[0].mxu0
    %v3415 = vadd.f32 %v2998, %v3414
    %v3416 = vpop.f32.mrb[0].mxu0
    %3417 = vmatprep.mubr.bf16.mxu0 %v2387
    %3418 = vmatmul.mubr.bf16.gmra.mrb[0].mxu0 %v2386
    %v3419 = vpop.f32.mrb[0].mxu0
    %v3420 = vadd.f32 %v3003, %v3419
    %v3421 = vpop.f32.mrb[0].mxu0
    %v3422 = vpop.f32.mrb[0].mxu0
    %v3423 = vadd.f32 %v3006, %v3422
    %v3424 = vpop.f32.mrb[0].mxu0
    %3425 = vmatprep.mubr.bf16.mxu0 %v2393
    %3426 = vmatmul.mubr.bf16.gmra.mrb[0].mxu0 %v2392
    %v3427 = vpop.f32.mrb[0].mxu0
    %v3428 = vadd.f32 %v3011, %v3427
    %v3429 = vpop.f32.mrb[0].mxu0
    %v3430 = vpop.f32.mrb[0].mxu0
    %v3431 = vadd.f32 %v3014, %v3430
    %v3432 = vpop.f32.mrb[0].mxu0
    %3433 = vmatprep.mubr.bf16.mxu0 %v2399
    %3434 = vmatmul.mubr.bf16.gmra.mrb[0].mxu0 %v2398
    %v3435 = vpop.f32.mrb[0].mxu0
    %v3436 = vadd.f32 %v3019, %v3435
    %v3437 = vpop.f32.mrb[0].mxu0
    %v3438 = vpop.f32.mrb[0].mxu0
    %v3439 = vadd.f32 %v3022, %v3438
    %v3440 = vpop.f32.mrb[0].mxu0
    %3441 = vmatprep.mubr.bf16.mxu0 %v2405
    %3442 = vmatmul.mubr.bf16.gmra.mrb[0].mxu0 %v2404
    %v3443 = vpop.f32.mrb[0].mxu0
    %v3444 = vadd.f32 %v3027, %v3443
    %v3445 = vpop.f32.mrb[0].mxu0
    %v3446 = vpop.f32.mrb[0].mxu0
    %v3447 = vadd.f32 %v3030, %v3446
    %v3448 = vpop.f32.mrb[0].mxu0
    %3449 = vmatprep.mubr.bf16.mxu0 %v2411
    %3450 = vmatmul.mubr.bf16.gmra.mrb[0].mxu0 %v2410
    %v3451 = vpop.f32.mrb[0].mxu0
    %v3452 = vadd.f32 %v3035, %v3451
    %v3453 = vpop.f32.mrb[0].mxu0
    %v3454 = vpop.f32.mrb[0].mxu0
    %v3455 = vadd.f32 %v3038, %v3454
    %v3456 = vpop.f32.mrb[0].mxu0
    %3457 = vmatprep.mubr.bf16.mxu0 %v2417
    %3458 = vmatmul.mubr.bf16.gmra.mrb[0].mxu0 %v2416
    %v3459 = vpop.f32.mrb[0].mxu0
    %v3460 = vadd.f32 %v3043, %v3459
    %v3461 = vpop.f32.mrb[0].mxu0
    %v3462 = vpop.f32.mrb[0].mxu0
    %v3463 = vadd.f32 %v3046, %v3462
    %v3464 = vpop.f32.mrb[0].mxu0
    %3465 = vmatprep.mubr.bf16.mxu0 %v2423
    %3466 = vmatmul.mubr.bf16.gmra.mrb[0].mxu0 %v2422
    %v3467 = vpop.f32.mrb[0].mxu0
    %v3468 = vadd.f32 %v3051, %v3467
    %v3469 = vpop.f32.mrb[0].mxu0
    %v3470 = vpop.f32.mrb[0].mxu0
    %v3471 = vadd.f32 %v3054, %v3470
    %v3472 = vpop.f32.mrb[0].mxu0
    %3473 = vmatprep.mubr.bf16.mxu0 %v2429
    %3474 = vmatmul.mubr.bf16.gmra.mrb[0].mxu0 %v2428
    %v3475 = vpop.f32.mrb[0].mxu0
    %v3476 = vadd.f32 %v3059, %v3475
    %v3477 = vpop.f32.mrb[0].mxu0
    %v3478 = vpop.f32.mrb[0].mxu0
    %v3479 = vadd.f32 %v3062, %v3478
    %v3480 = vpop.f32.mrb[0].mxu0
    %3481 = vmatprep.mubr.bf16.mxu0 %v2435
    %3482 = vmatmul.mubr.bf16.gmra.mrb[0].mxu0 %v2434
    %v3483 = vpop.f32.mrb[0].mxu0
    %v3484 = vadd.f32 %v3067, %v3483
    %v3485 = vpop.f32.mrb[0].mxu0
    %v3486 = vpop.f32.mrb[0].mxu0
    %v3487 = vadd.f32 %v3070, %v3486
    %v3488 = vpop.f32.mrb[0].mxu0
    %3489 = vmatprep.mubr.bf16.mxu0 %v2441
    %3490 = vmatmul.mubr.bf16.gmra.mrb[0].mxu0 %v2440
    %v3491 = vpop.f32.mrb[0].mxu0
    %v3492 = vadd.f32 %v3075, %v3491
    %v3493 = vpop.f32.mrb[0].mxu0
    %v3494 = vpop.f32.mrb[0].mxu0
    %v3495 = vadd.f32 %v3078, %v3494
    %v3496 = vpop.f32.mrb[0].mxu0
    %3497 = vmatprep.mubr.bf16.mxu0 %v2447
    %3498 = vmatmul.mubr.bf16.gmra.mrb[0].mxu0 %v2446
    %v3499 = vpop.f32.mrb[0].mxu0
    %v3500 = vadd.f32 %v3083, %v3499
    %v3501 = vpop.f32.mrb[0].mxu0
    %v3502 = vpop.f32.mrb[0].mxu0
    %v3503 = vadd.f32 %v3086, %v3502
    %v3504 = vpop.f32.mrb[0].mxu0
    %3505 = vmatprep.mubr.bf16.mxu0 %v2453
    %3506 = vmatmul.mubr.bf16.gmra.mrb[0].mxu0 %v2452
    %v3507 = vpop.f32.mrb[0].mxu0
    %v3508 = vadd.f32 %v3091, %v3507
    %v3509 = vpop.f32.mrb[0].mxu0
    %v3510 = vpop.f32.mrb[0].mxu0
    %v3511 = vadd.f32 %v3094, %v3510
    %v3512 = vpop.f32.mrb[0].mxu0
    %3513 = vmatprep.mubr.bf16.mxu0 %v2459
    %3514 = vmatmul.mubr.bf16.gmra.mrb[0].mxu0 %v2458
    %v3515 = vpop.f32.mrb[0].mxu0
    %v3516 = vadd.f32 %v3099, %v3515
    %v3517 = vpop.f32.mrb[0].mxu0
    %v3518 = vpop.f32.mrb[0].mxu0
    %v3519 = vadd.f32 %v3102, %v3518
    %v3520 = vpop.f32.mrb[0].mxu0
    %3521 = vmatprep.mubr.bf16.mxu0 %v2465
    %3522 = vmatmul.mubr.bf16.gmra.mrb[0].mxu0 %v2464
    %v3523 = vpop.f32.mrb[0].mxu0
    %v3524 = vadd.f32 %v3107, %v3523
    %v3525 = vpop.f32.mrb[0].mxu0
    %v3526 = vpop.f32.mrb[0].mxu0
    %v3527 = vadd.f32 %v3110, %v3526
    %v3528 = vpop.f32.mrb[0].mxu0
    %3529 = vmatprep.mubr.bf16.mxu0 %v2471
    %3530 = vmatmul.mubr.bf16.gmra.mrb[0].mxu0 %v2470
    %v3531 = vpop.f32.mrb[0].mxu0
    %v3532 = vadd.f32 %v3115, %v3531
    %v3533 = vpop.f32.mrb[0].mxu0
    %v3534 = vpop.f32.mrb[0].mxu0
    %v3535 = vadd.f32 %v3118, %v3534
    %v3536 = vpop.f32.mrb[0].mxu0
    %3537 = vmatprep.mubr.bf16.mxu0 %v2477
    %3538 = vmatmul.mubr.bf16.gmra.mrb[0].mxu0 %v2476
    %v3539 = vpop.f32.mrb[0].mxu0
    %v3540 = vadd.f32 %v3123, %v3539
    %v3541 = vpop.f32.mrb[0].mxu0
    %v3542 = vpop.f32.mrb[0].mxu0
    %v3543 = vadd.f32 %v3126, %v3542
    %v3544 = vpop.f32.mrb[0].mxu0
    %3545 = vmatprep.mubr.bf16.mxu0 %v2483
    %3546 = vmatmul.mubr.bf16.gmra.mrb[0].mxu0 %v2482
    %v3547 = vpop.f32.mrb[0].mxu0
    %v3548 = vadd.f32 %v3131, %v3547
    %v3549 = vpop.f32.mrb[0].mxu0
    %v3550 = vpop.f32.mrb[0].mxu0
    %v3551 = vadd.f32 %v3134, %v3550
    %v3552 = vpop.f32.mrb[0].mxu0
    %3553 = vmatprep.mubr.bf16.mxu0 %v2489
    %3554 = vmatmul.mubr.bf16.gmra.mrb[0].mxu0 %v2488
    %v3555 = vpop.f32.mrb[0].mxu0
    %v3556 = vadd.f32 %v3139, %v3555
    %v3557 = vpop.f32.mrb[0].mxu0
    %v3558 = vpop.f32.mrb[0].mxu0
    %v3559 = vadd.f32 %v3142, %v3558
    %v3560 = vpop.f32.mrb[0].mxu0
    %3561 = vmatprep.mubr.bf16.mxu0 %v2495
    %3562 = vmatmul.mubr.bf16.gmra.mrb[0].mxu0 %v2494
    %v3563 = vpop.f32.mrb[0].mxu0
    %v3564 = vadd.f32 %v3147, %v3563
    %v3565 = vpop.f32.mrb[0].mxu0
    %v3566 = vpop.f32.mrb[0].mxu0
    %v3567 = vadd.f32 %v3150, %v3566
    %v3568 = vpop.f32.mrb[0].mxu0
    %3569 = vmatprep.mubr.bf16.mxu0 %v2501
    %3570 = vmatmul.mubr.bf16.gmra.mrb[0].mxu0 %v2500
    %v3571 = vpop.f32.mrb[0].mxu0
    %v3572 = vadd.f32 %v3155, %v3571
    %v3573 = vpop.f32.mrb[0].mxu0
    %v3574 = vpop.f32.mrb[0].mxu0
    %v3575 = vadd.f32 %v3158, %v3574
    %v3576 = vpop.f32.mrb[0].mxu0
    %3577 = vmatprep.mubr.bf16.mxu0 %v2507
    %3578 = vmatmul.mubr.bf16.gmra.mrb[0].mxu0 %v2506
    %v3579 = vpop.f32.mrb[0].mxu0
    %v3580 = vadd.f32 %v3163, %v3579
    %v3581 = vpop.f32.mrb[0].mxu0
    %v3582 = vpop.f32.mrb[0].mxu0
    %v3583 = vadd.f32 %v3166, %v3582
    %v3584 = vpop.f32.mrb[0].mxu0
    %3585 = vmatprep.mubr.bf16.mxu0 %v2513
    %3586 = vmatmul.mubr.bf16.gmra.mrb[0].mxu0 %v2512
    %v3587 = vpop.f32.mrb[0].mxu0
    %v3588 = vadd.f32 %v3171, %v3587
    %v3589 = vpop.f32.mrb[0].mxu0
    %v3590 = vpop.f32.mrb[0].mxu0
    %v3591 = vadd.f32 %v3174, %v3590
    %v3592 = vpop.f32.mrb[0].mxu0
    %3593 = vmatprep.mubr.bf16.mxu0 %v2519
    %3594 = vmatmul.mubr.bf16.gmra.mrb[0].mxu0 %v2518
    %v3595 = vpop.f32.mrb[0].mxu0
    %v3596 = vadd.f32 %v3179, %v3595
    %v3597 = vpop.f32.mrb[0].mxu0
    %v3598 = vpop.f32.mrb[0].mxu0
    %v3599 = vadd.f32 %v3182, %v3598
    %v3600 = vpop.f32.mrb[0].mxu0
    %3601 = vmatprep.mubr.bf16.mxu0 %v2525
    %3602 = vmatmul.mubr.bf16.gmra.mrb[0].mxu0 %v2524
    %v3603 = vpop.f32.mrb[0].mxu0
    %v3604 = vadd.f32 %v3187, %v3603
    %v3605 = vpop.f32.mrb[0].mxu0
    %v3606 = vpop.f32.mrb[0].mxu0
    %v3607 = vadd.f32 %v3190, %v3606
    %v3608 = vpop.f32.mrb[0].mxu0
    %3609 = vmatprep.mubr.bf16.mxu0 %v2531
    %3610 = vmatmul.mubr.bf16.gmra.mrb[0].mxu0 %v2530
    %v3611 = vpop.f32.mrb[0].mxu0
    %v3612 = vadd.f32 %v3195, %v3611
    %v3613 = vpop.f32.mrb[0].mxu0
    %v3614 = vpop.f32.mrb[0].mxu0
    %v3615 = vadd.f32 %v3198, %v3614
    %v3616 = vpop.f32.mrb[0].mxu0
    %3617 = vmatprep.mubr.bf16.mxu0 %v2537
    %3618 = vmatmul.mubr.bf16.gmra.mrb[0].mxu0 %v2536
    %v3619 = vpop.f32.mrb[0].mxu0
    %v3620 = vadd.f32 %v3203, %v3619
    %v3621 = vpop.f32.mrb[0].mxu0
    %v3622 = vpop.f32.mrb[0].mxu0
    %v3623 = vadd.f32 %v3206, %v3622
    %v3624 = vpop.f32.mrb[0].mxu0
    %3625 = vmatprep.mubr.bf16.mxu0 %v2543
    %3626 = vmatmul.mubr.bf16.gmra.mrb[0].mxu0 %v2542
    %v3627 = vpop.f32.mrb[0].mxu0
    %v3628 = vadd.f32 %v3211, %v3627
    %v3629 = vpop.f32.mrb[0].mxu0
    %v3630 = vpop.f32.mrb[0].mxu0
    %v3631 = vadd.f32 %v3214, %v3630
    %v3632 = vpop.f32.mrb[0].mxu0
    %3633 = vmatprep.mubr.bf16.mxu0 %v2549
    %3634 = vmatmul.mubr.bf16.gmra.mrb[0].mxu0 %v2548
    %v3635 = vpop.f32.mrb[0].mxu0
    %v3636 = vadd.f32 %v3219, %v3635
    %v3637 = vpop.f32.mrb[0].mxu0
    %v3638 = vpop.f32.mrb[0].mxu0
    %v3639 = vadd.f32 %v3222, %v3638
    %v3640 = vpop.f32.mrb[0].mxu0
    %3641 = vmatprep.mubr.bf16.mxu0 %v2555
    %3642 = vmatmul.mubr.bf16.gmra.mrb[0].mxu0 %v2554
    %v3643 = vpop.f32.mrb[0].mxu0
    %v3644 = vadd.f32 %v3227, %v3643
    %v3645 = vpop.f32.mrb[0].mxu0
    %v3646 = vpop.f32.mrb[0].mxu0
    %v3647 = vadd.f32 %v3230, %v3646
    %v3648 = vpop.f32.mrb[0].mxu0
    %3649 = vmatprep.mubr.bf16.mxu0 %v2561
    %3650 = vmatmul.mubr.bf16.gmra.mrb[0].mxu0 %v2560
    %v3651 = vpop.f32.mrb[0].mxu0
    %v3652 = vadd.f32 %v3235, %v3651
    %v3653 = vpop.f32.mrb[0].mxu0
    %v3654 = vpop.f32.mrb[0].mxu0
    %v3655 = vadd.f32 %v3238, %v3654
    %v3656 = vpop.f32.mrb[0].mxu0
    %3657 = vmatprep.mubr.bf16.mxu0 %v2567
    %3658 = vmatmul.mubr.bf16.gmra.mrb[0].mxu0 %v2566
    %v3659 = vpop.f32.mrb[0].mxu0
    %v3660 = vadd.f32 %v3243, %v3659
    %v3661 = vpop.f32.mrb[0].mxu0
    %v3662 = vpop.f32.mrb[0].mxu0
    %v3663 = vadd.f32 %v3246, %v3662
    %v3664 = vpop.f32.mrb[0].mxu0
    %3665 = vmatprep.mubr.bf16.mxu0 %v2573
    %3666 = vmatmul.mubr.bf16.gmra.mrb[0].mxu0 %v2572
    %v3667 = vpop.f32.mrb[0].mxu0
    %v3668 = vadd.f32 %v3251, %v3667
    %v3669 = vpop.f32.mrb[0].mxu0
    %v3670 = vpop.f32.mrb[0].mxu0
    %v3671 = vadd.f32 %v3254, %v3670
    %v3672 = vpop.f32.mrb[0].mxu0
    %3673 = vmatprep.mubr.bf16.mxu0 %v2579
    %3674 = vmatmul.mubr.bf16.gmra.mrb[0].mxu0 %v2578
    %v3675 = vpop.f32.mrb[0].mxu0
    %v3676 = vadd.f32 %v3259, %v3675
    %v3677 = vpop.f32.mrb[0].mxu0
    %v3678 = vpop.f32.mrb[0].mxu0
    %v3679 = vadd.f32 %v3262, %v3678
    %v3680 = vpop.f32.mrb[0].mxu0
    %3681 = vmatprep.mubr.bf16.mxu0 %v2585
    %3682 = vmatmul.mubr.bf16.gmra.mrb[0].mxu0 %v2584
    %v3683 = vpop.f32.mrb[0].mxu0
    %v3684 = vadd.f32 %v3267, %v3683
    %v3685 = vpop.f32.mrb[0].mxu0
    %v3686 = vpop.f32.mrb[0].mxu0
    %v3687 = vadd.f32 %v3270, %v3686
    %v3688 = vpop.f32.mrb[0].mxu0
    %3689 = vmatprep.mubr.bf16.mxu0 %v2591
    %3690 = vmatmul.mubr.bf16.gmra.mrb[0].mxu0 %v2590
    %v3691 = vpop.f32.mrb[0].mxu0
    %v3692 = vadd.f32 %v3275, %v3691
    %v3693 = vpop.f32.mrb[0].mxu0
    %v3694 = vpop.f32.mrb[0].mxu0
    %v3695 = vadd.f32 %v3278, %v3694
    %v3696 = vpop.f32.mrb[0].mxu0
    %3697 = vmatprep.mubr.bf16.mxu0 %v2597
    %3698 = vmatmul.mubr.bf16.gmra.mrb[0].mxu0 %v2596
    %v3699 = vpop.f32.mrb[0].mxu0
    %v3700 = vadd.f32 %v3283, %v3699
    %v3701 = vpop.f32.mrb[0].mxu0
    %v3702 = vpop.f32.mrb[0].mxu0
    %v3703 = vadd.f32 %v3286, %v3702
    %v3704 = vpop.f32.mrb[0].mxu0
    %3705 = vmatprep.mubr.bf16.mxu0 %v2603
    %3706 = vmatmul.mubr.bf16.gmra.mrb[0].mxu0 %v2602
    %v3707 = vpop.f32.mrb[0].mxu0
    %v3708 = vadd.f32 %v3291, %v3707
    %v3709 = vpop.f32.mrb[0].mxu0
    %v3710 = vpop.f32.mrb[0].mxu0
    %v3711 = vadd.f32 %v3294, %v3710
    %v3712 = vpop.f32.mrb[0].mxu0
    %3713 = vmatprep.mubr.bf16.mxu0 %v2609
    %3714 = vmatmul.mubr.bf16.gmra.mrb[0].mxu0 %v2608
    %v3715 = vpop.f32.mrb[0].mxu0
    %v3716 = vadd.f32 %v3299, %v3715
    %v3717 = vpop.f32.mrb[0].mxu0
    %v3718 = vpop.f32.mrb[0].mxu0
    %v3719 = vadd.f32 %v3302, %v3718
    %v3720 = vpop.f32.mrb[0].mxu0
    %3721 = vmatprep.mubr.bf16.mxu0 %v2615
    %3722 = vmatmul.mubr.bf16.gmra.mrb[0].mxu0 %v2614
    %v3723 = vpop.f32.mrb[0].mxu0
    %v3724 = vadd.f32 %v3307, %v3723
    %v3725 = vpop.f32.mrb[0].mxu0
    %v3726 = vpop.f32.mrb[0].mxu0
    %v3727 = vadd.f32 %v3310, %v3726
    %v3728 = vpop.f32.mrb[0].mxu0
    %3729 = vmatprep.mubr.bf16.mxu0 %v2621
    %3730 = vmatmul.mubr.bf16.gmra.mrb[0].mxu0 %v2620
    %v3731 = vpop.f32.mrb[0].mxu0
    %v3732 = vadd.f32 %v3315, %v3731
    %v3733 = vpop.f32.mrb[0].mxu0
    %v3734 = vpop.f32.mrb[0].mxu0
    %v3735 = vadd.f32 %v3318, %v3734
    %v3736 = vpop.f32.mrb[0].mxu0
    %3737 = vmatprep.mubr.bf16.mxu0 %v2627
    %3738 = vmatmul.mubr.bf16.gmra.mrb[0].mxu0 %v2626
    %v3739 = vpop.f32.mrb[0].mxu0
    %v3740 = vadd.f32 %v3323, %v3739
    %v3741 = vpop.f32.mrb[0].mxu0
    %v3742 = vpop.f32.mrb[0].mxu0
    %v3743 = vadd.f32 %v3326, %v3742
    %v3744 = vpop.f32.mrb[0].mxu0
    %3745 = vmatprep.mubr.bf16.mxu0 %v2633
    %3746 = vmatmul.mubr.bf16.gmra.mrb[0].mxu0 %v2632
    %v3747 = vpop.f32.mrb[0].mxu0
    %v3748 = vadd.f32 %v3331, %v3747
    %v3749 = vpop.f32.mrb[0].mxu0
    %v3750 = vpop.f32.mrb[0].mxu0
    %v3751 = vadd.f32 %v3334, %v3750
    %v3752 = vpop.f32.mrb[0].mxu0
    %3753 = vmatprep.mubr.bf16.mxu0 %v2639
    %3754 = vmatmul.mubr.bf16.gmra.mrb[0].mxu0 %v2638
    %v3755 = vpop.f32.mrb[0].mxu0
    %v3756 = vadd.f32 %v3339, %v3755
    %v3757 = vpop.f32.mrb[0].mxu0
    %v3758 = vpop.f32.mrb[0].mxu0
    %v3759 = vadd.f32 %v3342, %v3758
    %v3760 = vpop.f32.mrb[0].mxu0
    %3761 = vmatprep.mubr.bf16.mxu0 %v2645
    %3762 = vmatmul.mubr.bf16.gmra.mrb[0].mxu0 %v2644
    %v3763 = vpop.f32.mrb[0].mxu0
    %v3764 = vadd.f32 %v3347, %v3763
    %v3765 = vpop.f32.mrb[0].mxu0
    %v3766 = vpop.f32.mrb[0].mxu0
    %v3767 = vadd.f32 %v3350, %v3766
    %v3768 = vpop.f32.mrb[0].mxu0
    %3769 = vdwg.mxu0
    %3770 = vmatprep.subr.bf16.mxu0 0
    %3771 = vmatpush1.bf16.msra.mxu0 %v1480
    %3772 = vmatprep.subr.bf16.mxu0 0
    %3773 = vmatpush1.bf16.msra.mxu0 %v1481
    %3774 = vmatprep.subr.bf16.mxu0 0
    %3775 = vmatpush1.bf16.msra.mxu0 %v1482
    %3776 = vmatprep.subr.bf16.mxu0 0
    %3777 = vmatpush1.bf16.msra.mxu0 %v1483
    %3778 = vmatprep.subr.bf16.mxu0 0
    %3779 = vmatpush1.bf16.msra.mxu0 %v1484
    %3780 = vmatprep.subr.bf16.mxu0 0
    %3781 = vmatpush1.bf16.msra.mxu0 %v1485
    %3782 = vmatprep.subr.bf16.mxu0 0
    %3783 = vmatpush1.bf16.msra.mxu0 %v1486
    %3784 = vmatprep.subr.bf16.mxu0 0
    %3785 = vmatpush1.bf16.msra.mxu0 %v1487
    %3786 = vmatprep.subr.bf16.mxu0 0
    %3787 = vmatpush1.bf16.msra.mxu0 %v1488
    %3788 = vmatprep.subr.bf16.mxu0 0
    %3789 = vmatpush1.bf16.msra.mxu0 %v1489
    %3790 = vmatprep.subr.bf16.mxu0 0
    %3791 = vmatpush1.bf16.msra.mxu0 %v1490
    %3792 = vmatprep.subr.bf16.mxu0 0
    %3793 = vmatpush1.bf16.msra.mxu0 %v1491
    %3794 = vmatprep.subr.bf16.mxu0 0
    %3795 = vmatpush1.bf16.msra.mxu0 %v1492
    %3796 = vmatprep.subr.bf16.mxu0 0
    %3797 = vmatpush1.bf16.msra.mxu0 %v1493
    %3798 = vmatprep.subr.bf16.mxu0 0
    %3799 = vmatpush1.bf16.msra.mxu0 %v1494
    %3800 = vmatprep.subr.bf16.mxu0 0
    %3801 = vmatpush1.bf16.msra.mxu0 %v1495
    %3802 = vmatprep.mubr.bf16.mxu0 %v2365
    %3803 = vmatmul.mubr.bf16.gmra.mrb[0].mxu0 %v2364
    %v3804 = vpop.f32.mrb[0].mxu0
    %v3805 = vadd.f32 %v3388, %v3804
    %v3806 = vpop.f32.mrb[0].mxu0
    %v3807 = vpop.f32.mrb[0].mxu0
    %v3808 = vadd.f32 %v3391, %v3807
    %v3809 = vpop.f32.mrb[0].mxu0
    %3810 = vmatprep.mubr.bf16.mxu0 %v2371
    %3811 = vmatmul.mubr.bf16.gmra.mrb[0].mxu0 %v2370
    %v3812 = vpop.f32.mrb[0].mxu0
    %v3813 = vadd.f32 %v3396, %v3812
    %v3814 = vpop.f32.mrb[0].mxu0
    %v3815 = vpop.f32.mrb[0].mxu0
    %v3816 = vadd.f32 %v3399, %v3815
    %v3817 = vpop.f32.mrb[0].mxu0
    %3818 = vmatprep.mubr.bf16.mxu0 %v2377
    %3819 = vmatmul.mubr.bf16.gmra.mrb[0].mxu0 %v2376
    %v3820 = vpop.f32.mrb[0].mxu0
    %v3821 = vadd.f32 %v3404, %v3820
    %v3822 = vpop.f32.mrb[0].mxu0
    %v3823 = vpop.f32.mrb[0].mxu0
    %v3824 = vadd.f32 %v3407, %v3823
    %v3825 = vpop.f32.mrb[0].mxu0
    %3826 = vmatprep.mubr.bf16.mxu0 %v2383
    %3827 = vmatmul.mubr.bf16.gmra.mrb[0].mxu0 %v2382
    %v3828 = vpop.f32.mrb[0].mxu0
    %v3829 = vadd.f32 %v3412, %v3828
    %v3830 = vpop.f32.mrb[0].mxu0
    %v3831 = vpop.f32.mrb[0].mxu0
    %v3832 = vadd.f32 %v3415, %v3831
    %v3833 = vpop.f32.mrb[0].mxu0
    %3834 = vmatprep.mubr.bf16.mxu0 %v2389
    %3835 = vmatmul.mubr.bf16.gmra.mrb[0].mxu0 %v2388
    %v3836 = vpop.f32.mrb[0].mxu0
    %v3837 = vadd.f32 %v3420, %v3836
    %v3838 = vpop.f32.mrb[0].mxu0
    %v3839 = vpop.f32.mrb[0].mxu0
    %v3840 = vadd.f32 %v3423, %v3839
    %v3841 = vpop.f32.mrb[0].mxu0
    %3842 = vmatprep.mubr.bf16.mxu0 %v2395
    %3843 = vmatmul.mubr.bf16.gmra.mrb[0].mxu0 %v2394
    %v3844 = vpop.f32.mrb[0].mxu0
    %v3845 = vadd.f32 %v3428, %v3844
    %v3846 = vpop.f32.mrb[0].mxu0
    %v3847 = vpop.f32.mrb[0].mxu0
    %v3848 = vadd.f32 %v3431, %v3847
    %v3849 = vpop.f32.mrb[0].mxu0
    %3850 = vmatprep.mubr.bf16.mxu0 %v2401
    %3851 = vmatmul.mubr.bf16.gmra.mrb[0].mxu0 %v2400
    %v3852 = vpop.f32.mrb[0].mxu0
    %v3853 = vadd.f32 %v3436, %v3852
    %v3854 = vpop.f32.mrb[0].mxu0
    %v3855 = vpop.f32.mrb[0].mxu0
    %v3856 = vadd.f32 %v3439, %v3855
    %v3857 = vpop.f32.mrb[0].mxu0
    %3858 = vmatprep.mubr.bf16.mxu0 %v2407
    %3859 = vmatmul.mubr.bf16.gmra.mrb[0].mxu0 %v2406
    %v3860 = vpop.f32.mrb[0].mxu0
    %v3861 = vadd.f32 %v3444, %v3860
    %v3862 = vpop.f32.mrb[0].mxu0
    %v3863 = vpop.f32.mrb[0].mxu0
    %v3864 = vadd.f32 %v3447, %v3863
    %v3865 = vpop.f32.mrb[0].mxu0
    %3866 = vmatprep.mubr.bf16.mxu0 %v2413
    %3867 = vmatmul.mubr.bf16.gmra.mrb[0].mxu0 %v2412
    %v3868 = vpop.f32.mrb[0].mxu0
    %v3869 = vadd.f32 %v3452, %v3868
    %v3870 = vpop.f32.mrb[0].mxu0
    %v3871 = vpop.f32.mrb[0].mxu0
    %v3872 = vadd.f32 %v3455, %v3871
    %v3873 = vpop.f32.mrb[0].mxu0
    %3874 = vmatprep.mubr.bf16.mxu0 %v2419
    %3875 = vmatmul.mubr.bf16.gmra.mrb[0].mxu0 %v2418
    %v3876 = vpop.f32.mrb[0].mxu0
    %v3877 = vadd.f32 %v3460, %v3876
    %v3878 = vpop.f32.mrb[0].mxu0
    %v3879 = vpop.f32.mrb[0].mxu0
    %v3880 = vadd.f32 %v3463, %v3879
    %v3881 = vpop.f32.mrb[0].mxu0
    %3882 = vmatprep.mubr.bf16.mxu0 %v2425
    %3883 = vmatmul.mubr.bf16.gmra.mrb[0].mxu0 %v2424
    %v3884 = vpop.f32.mrb[0].mxu0
    %v3885 = vadd.f32 %v3468, %v3884
    %v3886 = vpop.f32.mrb[0].mxu0
    %v3887 = vpop.f32.mrb[0].mxu0
    %v3888 = vadd.f32 %v3471, %v3887
    %v3889 = vpop.f32.mrb[0].mxu0
    %3890 = vmatprep.mubr.bf16.mxu0 %v2431
    %3891 = vmatmul.mubr.bf16.gmra.mrb[0].mxu0 %v2430
    %v3892 = vpop.f32.mrb[0].mxu0
    %v3893 = vadd.f32 %v3476, %v3892
    %v3894 = vpop.f32.mrb[0].mxu0
    %v3895 = vpop.f32.mrb[0].mxu0
    %v3896 = vadd.f32 %v3479, %v3895
    %v3897 = vpop.f32.mrb[0].mxu0
    %3898 = vmatprep.mubr.bf16.mxu0 %v2437
    %3899 = vmatmul.mubr.bf16.gmra.mrb[0].mxu0 %v2436
    %v3900 = vpop.f32.mrb[0].mxu0
    %v3901 = vadd.f32 %v3484, %v3900
    %v3902 = vpop.f32.mrb[0].mxu0
    %v3903 = vpop.f32.mrb[0].mxu0
    %v3904 = vadd.f32 %v3487, %v3903
    %v3905 = vpop.f32.mrb[0].mxu0
    %3906 = vmatprep.mubr.bf16.mxu0 %v2443
    %3907 = vmatmul.mubr.bf16.gmra.mrb[0].mxu0 %v2442
    %v3908 = vpop.f32.mrb[0].mxu0
    %v3909 = vadd.f32 %v3492, %v3908
    %v3910 = vpop.f32.mrb[0].mxu0
    %v3911 = vpop.f32.mrb[0].mxu0
    %v3912 = vadd.f32 %v3495, %v3911
    %v3913 = vpop.f32.mrb[0].mxu0
    %3914 = vmatprep.mubr.bf16.mxu0 %v2449
    %3915 = vmatmul.mubr.bf16.gmra.mrb[0].mxu0 %v2448
    %v3916 = vpop.f32.mrb[0].mxu0
    %v3917 = vadd.f32 %v3500, %v3916
    %v3918 = vpop.f32.mrb[0].mxu0
    %v3919 = vpop.f32.mrb[0].mxu0
    %v3920 = vadd.f32 %v3503, %v3919
    %v3921 = vpop.f32.mrb[0].mxu0
    %3922 = vmatprep.mubr.bf16.mxu0 %v2455
    %3923 = vmatmul.mubr.bf16.gmra.mrb[0].mxu0 %v2454
    %v3924 = vpop.f32.mrb[0].mxu0
    %v3925 = vadd.f32 %v3508, %v3924
    %v3926 = vpop.f32.mrb[0].mxu0
    %v3927 = vpop.f32.mrb[0].mxu0
    %v3928 = vadd.f32 %v3511, %v3927
    %v3929 = vpop.f32.mrb[0].mxu0
    %3930 = vmatprep.mubr.bf16.mxu0 %v2461
    %3931 = vmatmul.mubr.bf16.gmra.mrb[0].mxu0 %v2460
    %v3932 = vpop.f32.mrb[0].mxu0
    %v3933 = vadd.f32 %v3516, %v3932
    %v3934 = vpop.f32.mrb[0].mxu0
    %v3935 = vpop.f32.mrb[0].mxu0
    %v3936 = vadd.f32 %v3519, %v3935
    %v3937 = vpop.f32.mrb[0].mxu0
    %3938 = vmatprep.mubr.bf16.mxu0 %v2467
    %3939 = vmatmul.mubr.bf16.gmra.mrb[0].mxu0 %v2466
    %v3940 = vpop.f32.mrb[0].mxu0
    %v3941 = vadd.f32 %v3524, %v3940
    %v3942 = vpop.f32.mrb[0].mxu0
    %v3943 = vpop.f32.mrb[0].mxu0
    %v3944 = vadd.f32 %v3527, %v3943
    %v3945 = vpop.f32.mrb[0].mxu0
    %3946 = vmatprep.mubr.bf16.mxu0 %v2473
    %3947 = vmatmul.mubr.bf16.gmra.mrb[0].mxu0 %v2472
    %v3948 = vpop.f32.mrb[0].mxu0
    %v3949 = vadd.f32 %v3532, %v3948
    %v3950 = vpop.f32.mrb[0].mxu0
    %v3951 = vpop.f32.mrb[0].mxu0
    %v3952 = vadd.f32 %v3535, %v3951
    %v3953 = vpop.f32.mrb[0].mxu0
    %3954 = vmatprep.mubr.bf16.mxu0 %v2479
    %3955 = vmatmul.mubr.bf16.gmra.mrb[0].mxu0 %v2478
    %v3956 = vpop.f32.mrb[0].mxu0
    %v3957 = vadd.f32 %v3540, %v3956
    %v3958 = vpop.f32.mrb[0].mxu0
    %v3959 = vpop.f32.mrb[0].mxu0
    %v3960 = vadd.f32 %v3543, %v3959
    %v3961 = vpop.f32.mrb[0].mxu0
    %3962 = vmatprep.mubr.bf16.mxu0 %v2485
    %3963 = vmatmul.mubr.bf16.gmra.mrb[0].mxu0 %v2484
    %v3964 = vpop.f32.mrb[0].mxu0
    %v3965 = vadd.f32 %v3548, %v3964
    %v3966 = vpop.f32.mrb[0].mxu0
    %v3967 = vpop.f32.mrb[0].mxu0
    %v3968 = vadd.f32 %v3551, %v3967
    %v3969 = vpop.f32.mrb[0].mxu0
    %3970 = vmatprep.mubr.bf16.mxu0 %v2491
    %3971 = vmatmul.mubr.bf16.gmra.mrb[0].mxu0 %v2490
    %v3972 = vpop.f32.mrb[0].mxu0
    %v3973 = vadd.f32 %v3556, %v3972
    %v3974 = vpop.f32.mrb[0].mxu0
    %v3975 = vpop.f32.mrb[0].mxu0
    %v3976 = vadd.f32 %v3559, %v3975
    %v3977 = vpop.f32.mrb[0].mxu0
    %3978 = vmatprep.mubr.bf16.mxu0 %v2497
    %3979 = vmatmul.mubr.bf16.gmra.mrb[0].mxu0 %v2496
    %v3980 = vpop.f32.mrb[0].mxu0
    %v3981 = vadd.f32 %v3564, %v3980
    %v3982 = vpop.f32.mrb[0].mxu0
    %v3983 = vpop.f32.mrb[0].mxu0
    %v3984 = vadd.f32 %v3567, %v3983
    %v3985 = vpop.f32.mrb[0].mxu0
    %3986 = vmatprep.mubr.bf16.mxu0 %v2503
    %3987 = vmatmul.mubr.bf16.gmra.mrb[0].mxu0 %v2502
    %v3988 = vpop.f32.mrb[0].mxu0
    %v3989 = vadd.f32 %v3572, %v3988
    %v3990 = vpop.f32.mrb[0].mxu0
    %v3991 = vpop.f32.mrb[0].mxu0
    %v3992 = vadd.f32 %v3575, %v3991
    %v3993 = vpop.f32.mrb[0].mxu0
    %3994 = vmatprep.mubr.bf16.mxu0 %v2509
    %3995 = vmatmul.mubr.bf16.gmra.mrb[0].mxu0 %v2508
    %v3996 = vpop.f32.mrb[0].mxu0
    %v3997 = vadd.f32 %v3580, %v3996
    %v3998 = vpop.f32.mrb[0].mxu0
    %v3999 = vpop.f32.mrb[0].mxu0
    %v4000 = vadd.f32 %v3583, %v3999
    %v4001 = vpop.f32.mrb[0].mxu0
    %4002 = vmatprep.mubr.bf16.mxu0 %v2515
    %4003 = vmatmul.mubr.bf16.gmra.mrb[0].mxu0 %v2514
    %v4004 = vpop.f32.mrb[0].mxu0
    %v4005 = vadd.f32 %v3588, %v4004
    %v4006 = vpop.f32.mrb[0].mxu0
    %v4007 = vpop.f32.mrb[0].mxu0
    %v4008 = vadd.f32 %v3591, %v4007
    %v4009 = vpop.f32.mrb[0].mxu0
    %4010 = vmatprep.mubr.bf16.mxu0 %v2521
    %4011 = vmatmul.mubr.bf16.gmra.mrb[0].mxu0 %v2520
    %v4012 = vpop.f32.mrb[0].mxu0
    %v4013 = vadd.f32 %v3596, %v4012
    %v4014 = vpop.f32.mrb[0].mxu0
    %v4015 = vpop.f32.mrb[0].mxu0
    %v4016 = vadd.f32 %v3599, %v4015
    %v4017 = vpop.f32.mrb[0].mxu0
    %4018 = vmatprep.mubr.bf16.mxu0 %v2527
    %4019 = vmatmul.mubr.bf16.gmra.mrb[0].mxu0 %v2526
    %v4020 = vpop.f32.mrb[0].mxu0
    %v4021 = vadd.f32 %v3604, %v4020
    %v4022 = vpop.f32.mrb[0].mxu0
    %v4023 = vpop.f32.mrb[0].mxu0
    %v4024 = vadd.f32 %v3607, %v4023
    %v4025 = vpop.f32.mrb[0].mxu0
    %4026 = vmatprep.mubr.bf16.mxu0 %v2533
    %4027 = vmatmul.mubr.bf16.gmra.mrb[0].mxu0 %v2532
    %v4028 = vpop.f32.mrb[0].mxu0
    %v4029 = vadd.f32 %v3612, %v4028
    %v4030 = vpop.f32.mrb[0].mxu0
    %v4031 = vpop.f32.mrb[0].mxu0
    %v4032 = vadd.f32 %v3615, %v4031
    %v4033 = vpop.f32.mrb[0].mxu0
    %4034 = vmatprep.mubr.bf16.mxu0 %v2539
    %4035 = vmatmul.mubr.bf16.gmra.mrb[0].mxu0 %v2538
    %v4036 = vpop.f32.mrb[0].mxu0
    %v4037 = vadd.f32 %v3620, %v4036
    %v4038 = vpop.f32.mrb[0].mxu0
    %v4039 = vpop.f32.mrb[0].mxu0
    %v4040 = vadd.f32 %v3623, %v4039
    %v4041 = vpop.f32.mrb[0].mxu0
    %4042 = vmatprep.mubr.bf16.mxu0 %v2545
    %4043 = vmatmul.mubr.bf16.gmra.mrb[0].mxu0 %v2544
    %v4044 = vpop.f32.mrb[0].mxu0
    %v4045 = vadd.f32 %v3628, %v4044
    %v4046 = vpop.f32.mrb[0].mxu0
    %v4047 = vpop.f32.mrb[0].mxu0
    %v4048 = vadd.f32 %v3631, %v4047
    %v4049 = vpop.f32.mrb[0].mxu0
    %4050 = vmatprep.mubr.bf16.mxu0 %v2551
    %4051 = vmatmul.mubr.bf16.gmra.mrb[0].mxu0 %v2550
    %v4052 = vpop.f32.mrb[0].mxu0
    %v4053 = vadd.f32 %v3636, %v4052
    %v4054 = vpop.f32.mrb[0].mxu0
    %v4055 = vpop.f32.mrb[0].mxu0
    %v4056 = vadd.f32 %v3639, %v4055
    %v4057 = vpop.f32.mrb[0].mxu0
    %4058 = vmatprep.mubr.bf16.mxu0 %v2557
    %4059 = vmatmul.mubr.bf16.gmra.mrb[0].mxu0 %v2556
    %v4060 = vpop.f32.mrb[0].mxu0
    %v4061 = vadd.f32 %v3644, %v4060
    %v4062 = vpop.f32.mrb[0].mxu0
    %v4063 = vpop.f32.mrb[0].mxu0
    %v4064 = vadd.f32 %v3647, %v4063
    %v4065 = vpop.f32.mrb[0].mxu0
    %4066 = vmatprep.mubr.bf16.mxu0 %v2563
    %4067 = vmatmul.mubr.bf16.gmra.mrb[0].mxu0 %v2562
    %v4068 = vpop.f32.mrb[0].mxu0
    %v4069 = vadd.f32 %v3652, %v4068
    %v4070 = vpop.f32.mrb[0].mxu0
    %v4071 = vpop.f32.mrb[0].mxu0
    %v4072 = vadd.f32 %v3655, %v4071
    %v4073 = vpop.f32.mrb[0].mxu0
    %4074 = vmatprep.mubr.bf16.mxu0 %v2569
    %4075 = vmatmul.mubr.bf16.gmra.mrb[0].mxu0 %v2568
    %v4076 = vpop.f32.mrb[0].mxu0
    %v4077 = vadd.f32 %v3660, %v4076
    %v4078 = vpop.f32.mrb[0].mxu0
    %v4079 = vpop.f32.mrb[0].mxu0
    %v4080 = vadd.f32 %v3663, %v4079
    %v4081 = vpop.f32.mrb[0].mxu0
    %4082 = vmatprep.mubr.bf16.mxu0 %v2575
    %4083 = vmatmul.mubr.bf16.gmra.mrb[0].mxu0 %v2574
    %v4084 = vpop.f32.mrb[0].mxu0
    %v4085 = vadd.f32 %v3668, %v4084
    %v4086 = vpop.f32.mrb[0].mxu0
    %v4087 = vpop.f32.mrb[0].mxu0
    %v4088 = vadd.f32 %v3671, %v4087
    %v4089 = vpop.f32.mrb[0].mxu0
    %4090 = vmatprep.mubr.bf16.mxu0 %v2581
    %4091 = vmatmul.mubr.bf16.gmra.mrb[0].mxu0 %v2580
    %v4092 = vpop.f32.mrb[0].mxu0
    %v4093 = vadd.f32 %v3676, %v4092
    %v4094 = vpop.f32.mrb[0].mxu0
    %v4095 = vpop.f32.mrb[0].mxu0
    %v4096 = vadd.f32 %v3679, %v4095
    %v4097 = vpop.f32.mrb[0].mxu0
    %4098 = vmatprep.mubr.bf16.mxu0 %v2587
    %4099 = vmatmul.mubr.bf16.gmra.mrb[0].mxu0 %v2586
    %v4100 = vpop.f32.mrb[0].mxu0
    %v4101 = vadd.f32 %v3684, %v4100
    %v4102 = vpop.f32.mrb[0].mxu0
    %v4103 = vpop.f32.mrb[0].mxu0
    %v4104 = vadd.f32 %v3687, %v4103
    %v4105 = vpop.f32.mrb[0].mxu0
    %4106 = vmatprep.mubr.bf16.mxu0 %v2593
    %4107 = vmatmul.mubr.bf16.gmra.mrb[0].mxu0 %v2592
    %v4108 = vpop.f32.mrb[0].mxu0
    %v4109 = vadd.f32 %v3692, %v4108
    %v4110 = vpop.f32.mrb[0].mxu0
    %v4111 = vpop.f32.mrb[0].mxu0
    %v4112 = vadd.f32 %v3695, %v4111
    %v4113 = vpop.f32.mrb[0].mxu0
    %4114 = vmatprep.mubr.bf16.mxu0 %v2599
    %4115 = vmatmul.mubr.bf16.gmra.mrb[0].mxu0 %v2598
    %v4116 = vpop.f32.mrb[0].mxu0
    %v4117 = vadd.f32 %v3700, %v4116
    %v4118 = vpop.f32.mrb[0].mxu0
    %v4119 = vpop.f32.mrb[0].mxu0
    %v4120 = vadd.f32 %v3703, %v4119
    %v4121 = vpop.f32.mrb[0].mxu0
    %4122 = vmatprep.mubr.bf16.mxu0 %v2605
    %4123 = vmatmul.mubr.bf16.gmra.mrb[0].mxu0 %v2604
    %v4124 = vpop.f32.mrb[0].mxu0
    %v4125 = vadd.f32 %v3708, %v4124
    %v4126 = vpop.f32.mrb[0].mxu0
    %v4127 = vpop.f32.mrb[0].mxu0
    %v4128 = vadd.f32 %v3711, %v4127
    %v4129 = vpop.f32.mrb[0].mxu0
    %4130 = vmatprep.mubr.bf16.mxu0 %v2611
    %4131 = vmatmul.mubr.bf16.gmra.mrb[0].mxu0 %v2610
    %v4132 = vpop.f32.mrb[0].mxu0
    %v4133 = vadd.f32 %v3716, %v4132
    %v4134 = vpop.f32.mrb[0].mxu0
    %v4135 = vpop.f32.mrb[0].mxu0
    %v4136 = vadd.f32 %v3719, %v4135
    %v4137 = vpop.f32.mrb[0].mxu0
    %4138 = vmatprep.mubr.bf16.mxu0 %v2617
    %4139 = vmatmul.mubr.bf16.gmra.mrb[0].mxu0 %v2616
    %v4140 = vpop.f32.mrb[0].mxu0
    %v4141 = vadd.f32 %v3724, %v4140
    %v4142 = vpop.f32.mrb[0].mxu0
    %v4143 = vpop.f32.mrb[0].mxu0
    %v4144 = vadd.f32 %v3727, %v4143
    %v4145 = vpop.f32.mrb[0].mxu0
    %4146 = vmatprep.mubr.bf16.mxu0 %v2623
    %4147 = vmatmul.mubr.bf16.gmra.mrb[0].mxu0 %v2622
    %v4148 = vpop.f32.mrb[0].mxu0
    %v4149 = vadd.f32 %v3732, %v4148
    %v4150 = vpop.f32.mrb[0].mxu0
    %v4151 = vpop.f32.mrb[0].mxu0
    %v4152 = vadd.f32 %v3735, %v4151
    %v4153 = vpop.f32.mrb[0].mxu0
    %4154 = vmatprep.mubr.bf16.mxu0 %v2629
    %4155 = vmatmul.mubr.bf16.gmra.mrb[0].mxu0 %v2628
    %v4156 = vpop.f32.mrb[0].mxu0
    %v4157 = vadd.f32 %v3740, %v4156
    %v4158 = vpop.f32.mrb[0].mxu0
    %v4159 = vpop.f32.mrb[0].mxu0
    %v4160 = vadd.f32 %v3743, %v4159
    %v4161 = vpop.f32.mrb[0].mxu0
    %4162 = vmatprep.mubr.bf16.mxu0 %v2635
    %4163 = vmatmul.mubr.bf16.gmra.mrb[0].mxu0 %v2634
    %v4164 = vpop.f32.mrb[0].mxu0
    %v4165 = vadd.f32 %v3748, %v4164
    %v4166 = vpop.f32.mrb[0].mxu0
    %v4167 = vpop.f32.mrb[0].mxu0
    %v4168 = vadd.f32 %v3751, %v4167
    %v4169 = vpop.f32.mrb[0].mxu0
    %4170 = vmatprep.mubr.bf16.mxu0 %v2641
    %4171 = vmatmul.mubr.bf16.gmra.mrb[0].mxu0 %v2640
    %v4172 = vpop.f32.mrb[0].mxu0
    %v4173 = vadd.f32 %v3756, %v4172
    %v4174 = vpop.f32.mrb[0].mxu0
    %v4175 = vpop.f32.mrb[0].mxu0
    %v4176 = vadd.f32 %v3759, %v4175
    %v4177 = vpop.f32.mrb[0].mxu0
    %4178 = vmatprep.mubr.bf16.mxu0 %v2647
    %4179 = vmatmul.mubr.bf16.gmra.mrb[0].mxu0 %v2646
    %v4180 = vpop.f32.mrb[0].mxu0
    %v4181 = vadd.f32 %v3764, %v4180
    %v4182 = vpop.f32.mrb[0].mxu0
    %v4183 = vpop.f32.mrb[0].mxu0
    %v4184 = vadd.f32 %v3767, %v4183
    %v4185 = vpop.f32.mrb[0].mxu0
    %4186 = vdwg.mxu0
    %v4187 = vadd.f32 %v1064, %v3805
    %v4188 = vadd.f32 %v1065, %v3808
    %v4189 = vadd.f32 %v1066, %v3813
    %v4190 = vadd.f32 %v1067, %v3816
    %v4191 = vadd.f32 %v1068, %v3821
    %v4192 = vadd.f32 %v1069, %v3824
    %v4193 = vadd.f32 %v1070, %v3829
    %v4194 = vadd.f32 %v1071, %v3832
    %v4195 = vadd.f32 %v1072, %v3837
    %v4196 = vadd.f32 %v1073, %v3840
    %v4197 = vadd.f32 %v1074, %v3845
    %v4198 = vadd.f32 %v1075, %v3848
    %v4199 = vadd.f32 %v1076, %v3853
    %v4200 = vadd.f32 %v1077, %v3856
    %v4201 = vadd.f32 %v1078, %v3861
    %v4202 = vadd.f32 %v1079, %v3864
    %v4203 = vadd.f32 %v1080, %v3869
    %v4204 = vadd.f32 %v1081, %v3872
    %v4205 = vadd.f32 %v1082, %v3877
    %v4206 = vadd.f32 %v1083, %v3880
    %v4207 = vadd.f32 %v1084, %v3885
    %v4208 = vadd.f32 %v1085, %v3888
    %v4209 = vadd.f32 %v1086, %v3893
    %v4210 = vadd.f32 %v1087, %v3896
    %v4211 = vadd.f32 %v1088, %v3901
    %v4212 = vadd.f32 %v1089, %v3904
    %v4213 = vadd.f32 %v1090, %v3909
    %v4214 = vadd.f32 %v1091, %v3912
    %v4215 = vadd.f32 %v1092, %v3917
    %v4216 = vadd.f32 %v1093, %v3920
    %v4217 = vadd.f32 %v1094, %v3925
    %v4218 = vadd.f32 %v1095, %v3928
    %v4219 = vadd.f32 %v1096, %v3933
    %v4220 = vadd.f32 %v1097, %v3936
    %v4221 = vadd.f32 %v1098, %v3941
    %v4222 = vadd.f32 %v1099, %v3944
    %v4223 = vadd.f32 %v1100, %v3949
    %v4224 = vadd.f32 %v1101, %v3952
    %v4225 = vadd.f32 %v1102, %v3957
    %v4226 = vadd.f32 %v1103, %v3960
    %v4227 = vadd.f32 %v1104, %v3965
    %v4228 = vadd.f32 %v1105, %v3968
    %v4229 = vadd.f32 %v1106, %v3973
    %v4230 = vadd.f32 %v1107, %v3976
    %v4231 = vadd.f32 %v1108, %v3981
    %v4232 = vadd.f32 %v1109, %v3984
    %v4233 = vadd.f32 %v1110, %v3989
    %v4234 = vadd.f32 %v1111, %v3992
    %v4235 = vadd.f32 %v1112, %v3997
    %v4236 = vadd.f32 %v1113, %v4000
    %v4237 = vadd.f32 %v1114, %v4005
    %v4238 = vadd.f32 %v1115, %v4008
    %v4239 = vadd.f32 %v1116, %v4013
    %v4240 = vadd.f32 %v1117, %v4016
    %v4241 = vadd.f32 %v1118, %v4021
    %v4242 = vadd.f32 %v1119, %v4024
    %v4243 = vadd.f32 %v1120, %v4029
    %v4244 = vadd.f32 %v1121, %v4032
    %v4245 = vadd.f32 %v1122, %v4037
    %v4246 = vadd.f32 %v1123, %v4040
    %v4247 = vadd.f32 %v1124, %v4045
    %v4248 = vadd.f32 %v1125, %v4048
    %v4249 = vadd.f32 %v1126, %v4053
    %v4250 = vadd.f32 %v1127, %v4056
    %v4251 = vadd.f32 %v1128, %v4061
    %v4252 = vadd.f32 %v1129, %v4064
    %v4253 = vadd.f32 %v1130, %v4069
    %v4254 = vadd.f32 %v1131, %v4072
    %v4255 = vadd.f32 %v1132, %v4077
    %v4256 = vadd.f32 %v1133, %v4080
    %v4257 = vadd.f32 %v1134, %v4085
    %v4258 = vadd.f32 %v1135, %v4088
    %v4259 = vadd.f32 %v1136, %v4093
    %v4260 = vadd.f32 %v1137, %v4096
    %v4261 = vadd.f32 %v1138, %v4101
    %v4262 = vadd.f32 %v1139, %v4104
    %v4263 = vadd.f32 %v1140, %v4109
    %v4264 = vadd.f32 %v1141, %v4112
    %v4265 = vadd.f32 %v1142, %v4117
    %v4266 = vadd.f32 %v1143, %v4120
    %v4267 = vadd.f32 %v1144, %v4125
    %v4268 = vadd.f32 %v1145, %v4128
    %v4269 = vadd.f32 %v1146, %v4133
    %v4270 = vadd.f32 %v1147, %v4136
    %v4271 = vadd.f32 %v1148, %v4141
    %v4272 = vadd.f32 %v1149, %v4144
    %v4273 = vadd.f32 %v1150, %v4149
    %v4274 = vadd.f32 %v1151, %v4152
    %v4275 = vadd.f32 %v1152, %v4157
    %v4276 = vadd.f32 %v1153, %v4160
    %v4277 = vadd.f32 %v1154, %v4165
    %v4278 = vadd.f32 %v1155, %v4168
    %v4279 = vadd.f32 %v1156, %v4173
    %v4280 = vadd.f32 %v1157, %v4176
    %v4281 = vadd.f32 %v1158, %v4181
    %v4282 = vadd.f32 %v1159, %v4184
    %4283 = vst [vmem:[#allocation2] sm:$0xff] %v4187
    %4284 = vst [vmem:[#allocation2 + $0x8] sm:$0xff] %v4188
    %4285 = vst [vmem:[#allocation2 + $0x10] sm:$0xff] %v4189
    %4286 = vst [vmem:[#allocation2 + $0x18] sm:$0xff] %v4190
    %4287 = vst [vmem:[#allocation2 + $0x20] sm:$0xff] %v4191
    %4288 = vst [vmem:[#allocation2 + $0x28] sm:$0xff] %v4192
    %4289 = vst [vmem:[#allocation2 + $0x30] sm:$0xff] %v4193
    %4290 = vst [vmem:[#allocation2 + $0x38] sm:$0xff] %v4194
    %4291 = vst [vmem:[#allocation2 + $0x40] sm:$0xff] %v4195
    %4292 = vst [vmem:[#allocation2 + $0x48] sm:$0xff] %v4196
    %4293 = vst [vmem:[#allocation2 + $0x50] sm:$0xff] %v4197
    %4294 = vst [vmem:[#allocation2 + $0x58] sm:$0xff] %v4198
    %4295 = vst [vmem:[#allocation2 + $0x60] sm:$0xff] %v4199
    %4296 = vst [vmem:[#allocation2 + $0x68] sm:$0xff] %v4200
    %4297 = vst [vmem:[#allocation2 + $0x70] sm:$0xff] %v4201
    %4298 = vst [vmem:[#allocation2 + $0x78] sm:$0xff] %v4202
    %4299 = vst [vmem:[#allocation2 + $0x80] sm:$0xff] %v4203
    %4300 = vst [vmem:[#allocation2 + $0x88] sm:$0xff] %v4204
    %4301 = vst [vmem:[#allocation2 + $0x90] sm:$0xff] %v4205
    %4302 = vst [vmem:[#allocation2 + $0x98] sm:$0xff] %v4206
    %4303 = vst [vmem:[#allocation2 + $0xa0] sm:$0xff] %v4207
    %4304 = vst [vmem:[#allocation2 + $0xa8] sm:$0xff] %v4208
    %4305 = vst [vmem:[#allocation2 + $0xb0] sm:$0xff] %v4209
    %4306 = vst [vmem:[#allocation2 + $0xb8] sm:$0xff] %v4210
    %4307 = vst [vmem:[#allocation2 + $0xc0] sm:$0xff] %v4211
    %4308 = vst [vmem:[#allocation2 + $0xc8] sm:$0xff] %v4212
    %4309 = vst [vmem:[#allocation2 + $0xd0] sm:$0xff] %v4213
    %4310 = vst [vmem:[#allocation2 + $0xd8] sm:$0xff] %v4214
    %4311 = vst [vmem:[#allocation2 + $0xe0] sm:$0xff] %v4215
    %4312 = vst [vmem:[#allocation2 + $0xe8] sm:$0xff] %v4216
    %4313 = vst [vmem:[#allocation2 + $0xf0] sm:$0xff] %v4217
    %4314 = vst [vmem:[#allocation2 + $0xf8] sm:$0xff] %v4218
    %4315 = vst [vmem:[#allocation2 + $0x100] sm:$0xff] %v4219
    %4316 = vst [vmem:[#allocation2 + $0x108] sm:$0xff] %v4220
    %4317 = vst [vmem:[#allocation2 + $0x110] sm:$0xff] %v4221
    %4318 = vst [vmem:[#allocation2 + $0x118] sm:$0xff] %v4222
    %4319 = vst [vmem:[#allocation2 + $0x120] sm:$0xff] %v4223
    %4320 = vst [vmem:[#allocation2 + $0x128] sm:$0xff] %v4224
    %4321 = vst [vmem:[#allocation2 + $0x130] sm:$0xff] %v4225
    %4322 = vst [vmem:[#allocation2 + $0x138] sm:$0xff] %v4226
    %4323 = vst [vmem:[#allocation2 + $0x140] sm:$0xff] %v4227
    %4324 = vst [vmem:[#allocation2 + $0x148] sm:$0xff] %v4228
    %4325 = vst [vmem:[#allocation2 + $0x150] sm:$0xff] %v4229
    %4326 = vst [vmem:[#allocation2 + $0x158] sm:$0xff] %v4230
    %4327 = vst [vmem:[#allocation2 + $0x160] sm:$0xff] %v4231
    %4328 = vst [vmem:[#allocation2 + $0x168] sm:$0xff] %v4232
    %4329 = vst [vmem:[#allocation2 + $0x170] sm:$0xff] %v4233
    %4330 = vst [vmem:[#allocation2 + $0x178] sm:$0xff] %v4234
    %4331 = vst [vmem:[#allocation2 + $0x180] sm:$0xff] %v4235
    %4332 = vst [vmem:[#allocation2 + $0x188] sm:$0xff] %v4236
    %4333 = vst [vmem:[#allocation2 + $0x190] sm:$0xff] %v4237
    %4334 = vst [vmem:[#allocation2 + $0x198] sm:$0xff] %v4238
    %4335 = vst [vmem:[#allocation2 + $0x1a0] sm:$0xff] %v4239
    %4336 = vst [vmem:[#allocation2 + $0x1a8] sm:$0xff] %v4240
    %4337 = vst [vmem:[#allocation2 + $0x1b0] sm:$0xff] %v4241
    %4338 = vst [vmem:[#allocation2 + $0x1b8] sm:$0xff] %v4242
    %4339 = vst [vmem:[#allocation2 + $0x1c0] sm:$0xff] %v4243
    %4340 = vst [vmem:[#allocation2 + $0x1c8] sm:$0xff] %v4244
    %4341 = vst [vmem:[#allocation2 + $0x1d0] sm:$0xff] %v4245
    %4342 = vst [vmem:[#allocation2 + $0x1d8] sm:$0xff] %v4246
    %4343 = vst [vmem:[#allocation2 + $0x1e0] sm:$0xff] %v4247
    %4344 = vst [vmem:[#allocation2 + $0x1e8] sm:$0xff] %v4248
    %4345 = vst [vmem:[#allocation2 + $0x1f0] sm:$0xff] %v4249
    %4346 = vst [vmem:[#allocation2 + $0x1f8] sm:$0xff] %v4250
    %4347 = vst [vmem:[#allocation2 + $0x200] sm:$0xff] %v4251
    %4348 = vst [vmem:[#allocation2 + $0x208] sm:$0xff] %v4252
    %4349 = vst [vmem:[#allocation2 + $0x210] sm:$0xff] %v4253
    %4350 = vst [vmem:[#allocation2 + $0x218] sm:$0xff] %v4254
    %4351 = vst [vmem:[#allocation2 + $0x220] sm:$0xff] %v4255
    %4352 = vst [vmem:[#allocation2 + $0x228] sm:$0xff] %v4256
    %4353 = vst [vmem:[#allocation2 + $0x230] sm:$0xff] %v4257
    %4354 = vst [vmem:[#allocation2 + $0x238] sm:$0xff] %v4258
    %4355 = vst [vmem:[#allocation2 + $0x240] sm:$0xff] %v4259
    %4356 = vst [vmem:[#allocation2 + $0x248] sm:$0xff] %v4260
    %4357 = vst [vmem:[#allocation2 + $0x250] sm:$0xff] %v4261
    %4358 = vst [vmem:[#allocation2 + $0x258] sm:$0xff] %v4262
    %4359 = vst [vmem:[#allocation2 + $0x260] sm:$0xff] %v4263
    %4360 = vst [vmem:[#allocation2 + $0x268] sm:$0xff] %v4264
    %4361 = vst [vmem:[#allocation2 + $0x270] sm:$0xff] %v4265
    %4362 = vst [vmem:[#allocation2 + $0x278] sm:$0xff] %v4266
    %4363 = vst [vmem:[#allocation2 + $0x280] sm:$0xff] %v4267
    %4364 = vst [vmem:[#allocation2 + $0x288] sm:$0xff] %v4268
    %4365 = vst [vmem:[#allocation2 + $0x290] sm:$0xff] %v4269
    %4366 = vst [vmem:[#allocation2 + $0x298] sm:$0xff] %v4270
    %4367 = vst [vmem:[#allocation2 + $0x2a0] sm:$0xff] %v4271
    %4368 = vst [vmem:[#allocation2 + $0x2a8] sm:$0xff] %v4272
    %4369 = vst [vmem:[#allocation2 + $0x2b0] sm:$0xff] %v4273
    %4370 = vst [vmem:[#allocation2 + $0x2b8] sm:$0xff] %v4274
    %4371 = vst [vmem:[#allocation2 + $0x2c0] sm:$0xff] %v4275
    %4372 = vst [vmem:[#allocation2 + $0x2c8] sm:$0xff] %v4276
    %4373 = vst [vmem:[#allocation2 + $0x2d0] sm:$0xff] %v4277
    %4374 = vst [vmem:[#allocation2 + $0x2d8] sm:$0xff] %v4278
    %4375 = vst [vmem:[#allocation2 + $0x2e0] sm:$0xff] %v4279
    %4376 = vst [vmem:[#allocation2 + $0x2e8] sm:$0xff] %v4280
    %4377 = vst [vmem:[#allocation2 + $0x2f0] sm:$0xff] %v4281
    %4378 = vst [vmem:[#allocation2 + $0x2f8] sm:$0xff] %v4282
    // Predicated region
    $region34: #{tpu_custom_call.1} parent=1 // pred_check
      %p4379 = pneg %p58
    $region35: #{tpu_custom_call.1} parent=1 // pred_check_branch
      %4381 = sbr.rel (%p4379) target = $region37
    $region36: #{tpu_custom_call.1} parent=1 // pred_region
      %v4382 = vld [vmem:[#allocation2] sm:$0xff]
      %v4383 = vld [vmem:[#allocation2 + $0x8] sm:$0xff]
      %v4384 = vld [vmem:[#allocation2 + $0x10] sm:$0xff]
      %v4385 = vld [vmem:[#allocation2 + $0x18] sm:$0xff]
      %v4386 = vld [vmem:[#allocation2 + $0x20] sm:$0xff]
      %v4387 = vld [vmem:[#allocation2 + $0x28] sm:$0xff]
      %v4388 = vld [vmem:[#allocation2 + $0x30] sm:$0xff]
      %v4389 = vld [vmem:[#allocation2 + $0x38] sm:$0xff]
      %v4390 = vld [vmem:[#allocation2 + $0x40] sm:$0xff]
      %v4391 = vld [vmem:[#allocation2 + $0x48] sm:$0xff]
      %v4392 = vld [vmem:[#allocation2 + $0x50] sm:$0xff]
      %v4393 = vld [vmem:[#allocation2 + $0x58] sm:$0xff]
      %v4394 = vld [vmem:[#allocation2 + $0x60] sm:$0xff]
      %v4395 = vld [vmem:[#allocation2 + $0x68] sm:$0xff]
      %v4396 = vld [vmem:[#allocation2 + $0x70] sm:$0xff]
      %v4397 = vld [vmem:[#allocation2 + $0x78] sm:$0xff]
      %v4398 = vld [vmem:[#allocation2 + $0x80] sm:$0xff]
      %v4399 = vld [vmem:[#allocation2 + $0x88] sm:$0xff]
      %v4400 = vld [vmem:[#allocation2 + $0x90] sm:$0xff]
      %v4401 = vld [vmem:[#allocation2 + $0x98] sm:$0xff]
      %v4402 = vld [vmem:[#allocation2 + $0xa0] sm:$0xff]
      %v4403 = vld [vmem:[#allocation2 + $0xa8] sm:$0xff]
      %v4404 = vld [vmem:[#allocation2 + $0xb0] sm:$0xff]
      %v4405 = vld [vmem:[#allocation2 + $0xb8] sm:$0xff]
      %v4406 = vld [vmem:[#allocation2 + $0xc0] sm:$0xff]
      %v4407 = vld [vmem:[#allocation2 + $0xc8] sm:$0xff]
      %v4408 = vld [vmem:[#allocation2 + $0xd0] sm:$0xff]
      %v4409 = vld [vmem:[#allocation2 + $0xd8] sm:$0xff]
      %v4410 = vld [vmem:[#allocation2 + $0xe0] sm:$0xff]
      %v4411 = vld [vmem:[#allocation2 + $0xe8] sm:$0xff]
      %v4412 = vld [vmem:[#allocation2 + $0xf0] sm:$0xff]
      %v4413 = vld [vmem:[#allocation2 + $0xf8] sm:$0xff]
      %v4414 = vld [vmem:[#allocation2 + $0x100] sm:$0xff]
      %v4415 = vld [vmem:[#allocation2 + $0x108] sm:$0xff]
      %v4416 = vld [vmem:[#allocation2 + $0x110] sm:$0xff]
      %v4417 = vld [vmem:[#allocation2 + $0x118] sm:$0xff]
      %v4418 = vld [vmem:[#allocation2 + $0x120] sm:$0xff]
      %v4419 = vld [vmem:[#allocation2 + $0x128] sm:$0xff]
      %v4420 = vld [vmem:[#allocation2 + $0x130] sm:$0xff]
      %v4421 = vld [vmem:[#allocation2 + $0x138] sm:$0xff]
      %v4422 = vld [vmem:[#allocation2 + $0x140] sm:$0xff]
      %v4423 = vld [vmem:[#allocation2 + $0x148] sm:$0xff]
      %v4424 = vld [vmem:[#allocation2 + $0x150] sm:$0xff]
      %v4425 = vld [vmem:[#allocation2 + $0x158] sm:$0xff]
      %v4426 = vld [vmem:[#allocation2 + $0x160] sm:$0xff]
      %v4427 = vld [vmem:[#allocation2 + $0x168] sm:$0xff]
      %v4428 = vld [vmem:[#allocation2 + $0x170] sm:$0xff]
      %v4429 = vld [vmem:[#allocation2 + $0x178] sm:$0xff]
      %v4430 = vld [vmem:[#allocation2 + $0x180] sm:$0xff]
      %v4431 = vld [vmem:[#allocation2 + $0x188] sm:$0xff]
      %v4432 = vld [vmem:[#allocation2 + $0x190] sm:$0xff]
      %v4433 = vld [vmem:[#allocation2 + $0x198] sm:$0xff]
      %v4434 = vld [vmem:[#allocation2 + $0x1a0] sm:$0xff]
      %v4435 = vld [vmem:[#allocation2 + $0x1a8] sm:$0xff]
      %v4436 = vld [vmem:[#allocation2 + $0x1b0] sm:$0xff]
      %v4437 = vld [vmem:[#allocation2 + $0x1b8] sm:$0xff]
      %v4438 = vld [vmem:[#allocation2 + $0x1c0] sm:$0xff]
      %v4439 = vld [vmem:[#allocation2 + $0x1c8] sm:$0xff]
      %v4440 = vld [vmem:[#allocation2 + $0x1d0] sm:$0xff]
      %v4441 = vld [vmem:[#allocation2 + $0x1d8] sm:$0xff]
      %v4442 = vld [vmem:[#allocation2 + $0x1e0] sm:$0xff]
      %v4443 = vld [vmem:[#allocation2 + $0x1e8] sm:$0xff]
      %v4444 = vld [vmem:[#allocation2 + $0x1f0] sm:$0xff]
      %v4445 = vld [vmem:[#allocation2 + $0x1f8] sm:$0xff]
      %v4446 = vld [vmem:[#allocation2 + $0x200] sm:$0xff]
      %v4447 = vld [vmem:[#allocation2 + $0x208] sm:$0xff]
      %v4448 = vld [vmem:[#allocation2 + $0x210] sm:$0xff]
      %v4449 = vld [vmem:[#allocation2 + $0x218] sm:$0xff]
      %v4450 = vld [vmem:[#allocation2 + $0x220] sm:$0xff]
      %v4451 = vld [vmem:[#allocation2 + $0x228] sm:$0xff]
      %v4452 = vld [vmem:[#allocation2 + $0x230] sm:$0xff]
      %v4453 = vld [vmem:[#allocation2 + $0x238] sm:$0xff]
      %v4454 = vld [vmem:[#allocation2 + $0x240] sm:$0xff]
      %v4455 = vld [vmem:[#allocation2 + $0x248] sm:$0xff]
      %v4456 = vld [vmem:[#allocation2 + $0x250] sm:$0xff]
      %v4457 = vld [vmem:[#allocation2 + $0x258] sm:$0xff]
      %v4458 = vld [vmem:[#allocation2 + $0x260] sm:$0xff]
      %v4459 = vld [vmem:[#allocation2 + $0x268] sm:$0xff]
      %v4460 = vld [vmem:[#allocation2 + $0x270] sm:$0xff]
      %v4461 = vld [vmem:[#allocation2 + $0x278] sm:$0xff]
      %v4462 = vld [vmem:[#allocation2 + $0x280] sm:$0xff]
      %v4463 = vld [vmem:[#allocation2 + $0x288] sm:$0xff]
      %v4464 = vld [vmem:[#allocation2 + $0x290] sm:$0xff]
      %v4465 = vld [vmem:[#allocation2 + $0x298] sm:$0xff]
      %v4466 = vld [vmem:[#allocation2 + $0x2a0] sm:$0xff]
      %v4467 = vld [vmem:[#allocation2 + $0x2a8] sm:$0xff]
      %v4468 = vld [vmem:[#allocation2 + $0x2b0] sm:$0xff]
      %v4469 = vld [vmem:[#allocation2 + $0x2b8] sm:$0xff]
      %v4470 = vld [vmem:[#allocation2 + $0x2c0] sm:$0xff]
      %v4471 = vld [vmem:[#allocation2 + $0x2c8] sm:$0xff]
      %v4472 = vld [vmem:[#allocation2 + $0x2d0] sm:$0xff]
      %v4473 = vld [vmem:[#allocation2 + $0x2d8] sm:$0xff]
      %v4474 = vld [vmem:[#allocation2 + $0x2e0] sm:$0xff]
      %v4475 = vld [vmem:[#allocation2 + $0x2e8] sm:$0xff]
      %v4476 = vld [vmem:[#allocation2 + $0x2f0] sm:$0xff]
      %v4477 = vld [vmem:[#allocation2 + $0x2f8] sm:$0xff]
      %v4478 = vld [vmem:[#allocation8] sm:$0x1]
      %v4480 = vlaneseq
      %v4481 = vshrl.u32 %v4480, 7
      %v4482 = vsub.s32 0, %v4481
      %v4483 = vrot.slane %v4478, %v4482
      %v4485 = vadd.f32 %v4382, %v4483
      %v4486 = vadd.f32 %v4383, %v4483
      %v4487 = vadd.f32 %v4384, %v4483
      %v4488 = vadd.f32 %v4385, %v4483
      %v4489 = vadd.f32 %v4386, %v4483
      %v4490 = vadd.f32 %v4387, %v4483
      %v4491 = vadd.f32 %v4388, %v4483
      %v4492 = vadd.f32 %v4389, %v4483
      %v4493 = vadd.f32 %v4390, %v4483
      %v4494 = vadd.f32 %v4391, %v4483
      %v4495 = vadd.f32 %v4392, %v4483
      %v4496 = vadd.f32 %v4393, %v4483
      %v4497 = vadd.f32 %v4394, %v4483
      %v4498 = vadd.f32 %v4395, %v4483
      %v4499 = vadd.f32 %v4396, %v4483
      %v4500 = vadd.f32 %v4397, %v4483
      %v4501 = vadd.f32 %v4398, %v4483
      %v4502 = vadd.f32 %v4399, %v4483
      %v4503 = vadd.f32 %v4400, %v4483
      %v4504 = vadd.f32 %v4401, %v4483
      %v4505 = vadd.f32 %v4402, %v4483
      %v4506 = vadd.f32 %v4403, %v4483
      %v4507 = vadd.f32 %v4404, %v4483
      %v4508 = vadd.f32 %v4405, %v4483
      %v4509 = vadd.f32 %v4406, %v4483
      %v4510 = vadd.f32 %v4407, %v4483
      %v4511 = vadd.f32 %v4408, %v4483
      %v4512 = vadd.f32 %v4409, %v4483
      %v4513 = vadd.f32 %v4410, %v4483
      %v4514 = vadd.f32 %v4411, %v4483
      %v4515 = vadd.f32 %v4412, %v4483
      %v4516 = vadd.f32 %v4413, %v4483
      %v4517 = vadd.f32 %v4414, %v4483
      %v4518 = vadd.f32 %v4415, %v4483
      %v4519 = vadd.f32 %v4416, %v4483
      %v4520 = vadd.f32 %v4417, %v4483
      %v4521 = vadd.f32 %v4418, %v4483
      %v4522 = vadd.f32 %v4419, %v4483
      %v4523 = vadd.f32 %v4420, %v4483
      %v4524 = vadd.f32 %v4421, %v4483
      %v4525 = vadd.f32 %v4422, %v4483
      %v4526 = vadd.f32 %v4423, %v4483
      %v4527 = vadd.f32 %v4424, %v4483
      %v4528 = vadd.f32 %v4425, %v4483
      %v4529 = vadd.f32 %v4426, %v4483
      %v4530 = vadd.f32 %v4427, %v4483
      %v4531 = vadd.f32 %v4428, %v4483
      %v4532 = vadd.f32 %v4429, %v4483
      %v4533 = vadd.f32 %v4430, %v4483
      %v4534 = vadd.f32 %v4431, %v4483
      %v4535 = vadd.f32 %v4432, %v4483
      %v4536 = vadd.f32 %v4433, %v4483
      %v4537 = vadd.f32 %v4434, %v4483
      %v4538 = vadd.f32 %v4435, %v4483
      %v4539 = vadd.f32 %v4436, %v4483
      %v4540 = vadd.f32 %v4437, %v4483
      %v4541 = vadd.f32 %v4438, %v4483
      %v4542 = vadd.f32 %v4439, %v4483
      %v4543 = vadd.f32 %v4440, %v4483
      %v4544 = vadd.f32 %v4441, %v4483
      %v4545 = vadd.f32 %v4442, %v4483
      %v4546 = vadd.f32 %v4443, %v4483
      %v4547 = vadd.f32 %v4444, %v4483
      %v4548 = vadd.f32 %v4445, %v4483
      %v4549 = vadd.f32 %v4446, %v4483
      %v4550 = vadd.f32 %v4447, %v4483
      %v4551 = vadd.f32 %v4448, %v4483
      %v4552 = vadd.f32 %v4449, %v4483
      %v4553 = vadd.f32 %v4450, %v4483
      %v4554 = vadd.f32 %v4451, %v4483
      %v4555 = vadd.f32 %v4452, %v4483
      %v4556 = vadd.f32 %v4453, %v4483
      %v4557 = vadd.f32 %v4454, %v4483
      %v4558 = vadd.f32 %v4455, %v4483
      %v4559 = vadd.f32 %v4456, %v4483
      %v4560 = vadd.f32 %v4457, %v4483
      %v4561 = vadd.f32 %v4458, %v4483
      %v4562 = vadd.f32 %v4459, %v4483
      %v4563 = vadd.f32 %v4460, %v4483
      %v4564 = vadd.f32 %v4461, %v4483
      %v4565 = vadd.f32 %v4462, %v4483
      %v4566 = vadd.f32 %v4463, %v4483
      %v4567 = vadd.f32 %v4464, %v4483
      %v4568 = vadd.f32 %v4465, %v4483
      %v4569 = vadd.f32 %v4466, %v4483
      %v4570 = vadd.f32 %v4467, %v4483
      %v4571 = vadd.f32 %v4468, %v4483
      %v4572 = vadd.f32 %v4469, %v4483
      %v4573 = vadd.f32 %v4470, %v4483
      %v4574 = vadd.f32 %v4471, %v4483
      %v4575 = vadd.f32 %v4472, %v4483
      %v4576 = vadd.f32 %v4473, %v4483
      %v4577 = vadd.f32 %v4474, %v4483
      %v4578 = vadd.f32 %v4475, %v4483
      %v4579 = vadd.f32 %v4476, %v4483
      %v4580 = vadd.f32 %v4477, %v4483
      %v4581 = vmax.f32 %v4485, 0.0
      %v4582 = vmax.f32 %v4486, 0.0
      %v4583 = vmax.f32 %v4487, 0.0
      %v4584 = vmax.f32 %v4488, 0.0
      %v4585 = vmax.f32 %v4489, 0.0
      %v4586 = vmax.f32 %v4490, 0.0
      %v4587 = vmax.f32 %v4491, 0.0
      %v4588 = vmax.f32 %v4492, 0.0
      %v4589 = vmax.f32 %v4493, 0.0
      %v4590 = vmax.f32 %v4494, 0.0
      %v4591 = vmax.f32 %v4495, 0.0
      %v4592 = vmax.f32 %v4496, 0.0
      %v4593 = vmax.f32 %v4497, 0.0
      %v4594 = vmax.f32 %v4498, 0.0
      %v4595 = vmax.f32 %v4499, 0.0
      %v4596 = vmax.f32 %v4500, 0.0
      %v4597 = vmax.f32 %v4501, 0.0
      %v4598 = vmax.f32 %v4502, 0.0
      %v4599 = vmax.f32 %v4503, 0.0
      %v4600 = vmax.f32 %v4504, 0.0
      %v4601 = vmax.f32 %v4505, 0.0
      %v4602 = vmax.f32 %v4506, 0.0
      %v4603 = vmax.f32 %v4507, 0.0
      %v4604 = vmax.f32 %v4508, 0.0
      %v4605 = vmax.f32 %v4509, 0.0
      %v4606 = vmax.f32 %v4510, 0.0
      %v4607 = vmax.f32 %v4511, 0.0
      %v4608 = vmax.f32 %v4512, 0.0
      %v4609 = vmax.f32 %v4513, 0.0
      %v4610 = vmax.f32 %v4514, 0.0
      %v4611 = vmax.f32 %v4515, 0.0
      %v4612 = vmax.f32 %v4516, 0.0
      %v4613 = vmax.f32 %v4517, 0.0
      %v4614 = vmax.f32 %v4518, 0.0
      %v4615 = vmax.f32 %v4519, 0.0
      %v4616 = vmax.f32 %v4520, 0.0
      %v4617 = vmax.f32 %v4521, 0.0
      %v4618 = vmax.f32 %v4522, 0.0
      %v4619 = vmax.f32 %v4523, 0.0
      %v4620 = vmax.f32 %v4524, 0.0
      %v4621 = vmax.f32 %v4525, 0.0
      %v4622 = vmax.f32 %v4526, 0.0
      %v4623 = vmax.f32 %v4527, 0.0
      %v4624 = vmax.f32 %v4528, 0.0
      %v4625 = vmax.f32 %v4529, 0.0
      %v4626 = vmax.f32 %v4530, 0.0
      %v4627 = vmax.f32 %v4531, 0.0
      %v4628 = vmax.f32 %v4532, 0.0
      %v4629 = vmax.f32 %v4533, 0.0
      %v4630 = vmax.f32 %v4534, 0.0
      %v4631 = vmax.f32 %v4535, 0.0
      %v4632 = vmax.f32 %v4536, 0.0
      %v4633 = vmax.f32 %v4537, 0.0
      %v4634 = vmax.f32 %v4538, 0.0
      %v4635 = vmax.f32 %v4539, 0.0
      %v4636 = vmax.f32 %v4540, 0.0
      %v4637 = vmax.f32 %v4541, 0.0
      %v4638 = vmax.f32 %v4542, 0.0
      %v4639 = vmax.f32 %v4543, 0.0
      %v4640 = vmax.f32 %v4544, 0.0
      %v4641 = vmax.f32 %v4545, 0.0
      %v4642 = vmax.f32 %v4546, 0.0
      %v4643 = vmax.f32 %v4547, 0.0
      %v4644 = vmax.f32 %v4548, 0.0
      %v4645 = vmax.f32 %v4549, 0.0
      %v4646 = vmax.f32 %v4550, 0.0
      %v4647 = vmax.f32 %v4551, 0.0
      %v4648 = vmax.f32 %v4552, 0.0
      %v4649 = vmax.f32 %v4553, 0.0
      %v4650 = vmax.f32 %v4554, 0.0
      %v4651 = vmax.f32 %v4555, 0.0
      %v4652 = vmax.f32 %v4556, 0.0
      %v4653 = vmax.f32 %v4557, 0.0
      %v4654 = vmax.f32 %v4558, 0.0
      %v4655 = vmax.f32 %v4559, 0.0
      %v4656 = vmax.f32 %v4560, 0.0
      %v4657 = vmax.f32 %v4561, 0.0
      %v4658 = vmax.f32 %v4562, 0.0
      %v4659 = vmax.f32 %v4563, 0.0
      %v4660 = vmax.f32 %v4564, 0.0
      %v4661 = vmax.f32 %v4565, 0.0
      %v4662 = vmax.f32 %v4566, 0.0
      %v4663 = vmax.f32 %v4567, 0.0
      %v4664 = vmax.f32 %v4568, 0.0
      %v4665 = vmax.f32 %v4569, 0.0
      %v4666 = vmax.f32 %v4570, 0.0
      %v4667 = vmax.f32 %v4571, 0.0
      %v4668 = vmax.f32 %v4572, 0.0
      %v4669 = vmax.f32 %v4573, 0.0
      %v4670 = vmax.f32 %v4574, 0.0
      %v4671 = vmax.f32 %v4575, 0.0
      %v4672 = vmax.f32 %v4576, 0.0
      %v4673 = vmax.f32 %v4577, 0.0
      %v4674 = vmax.f32 %v4578, 0.0
      %v4675 = vmax.f32 %v4579, 0.0
      %v4676 = vmax.f32 %v4580, 0.0
      %v4677 = vpack.c.bf16 %v4582, %v4581
      %v4678 = vpack.c.bf16 %v4584, %v4583
      %v4679 = vpack.c.bf16 %v4586, %v4585
      %v4680 = vpack.c.bf16 %v4588, %v4587
      %v4681 = vpack.c.bf16 %v4590, %v4589
      %v4682 = vpack.c.bf16 %v4592, %v4591
      %v4683 = vpack.c.bf16 %v4594, %v4593
      %v4684 = vpack.c.bf16 %v4596, %v4595
      %v4685 = vpack.c.bf16 %v4598, %v4597
      %v4686 = vpack.c.bf16 %v4600, %v4599
      %v4687 = vpack.c.bf16 %v4602, %v4601
      %v4688 = vpack.c.bf16 %v4604, %v4603
      %v4689 = vpack.c.bf16 %v4606, %v4605
      %v4690 = vpack.c.bf16 %v4608, %v4607
      %v4691 = vpack.c.bf16 %v4610, %v4609
      %v4692 = vpack.c.bf16 %v4612, %v4611
      %v4693 = vpack.c.bf16 %v4614, %v4613
      %v4694 = vpack.c.bf16 %v4616, %v4615
      %v4695 = vpack.c.bf16 %v4618, %v4617
      %v4696 = vpack.c.bf16 %v4620, %v4619
      %v4697 = vpack.c.bf16 %v4622, %v4621
      %v4698 = vpack.c.bf16 %v4624, %v4623
      %v4699 = vpack.c.bf16 %v4626, %v4625
      %v4700 = vpack.c.bf16 %v4628, %v4627
      %v4701 = vpack.c.bf16 %v4630, %v4629
      %v4702 = vpack.c.bf16 %v4632, %v4631
      %v4703 = vpack.c.bf16 %v4634, %v4633
      %v4704 = vpack.c.bf16 %v4636, %v4635
      %v4705 = vpack.c.bf16 %v4638, %v4637
      %v4706 = vpack.c.bf16 %v4640, %v4639
      %v4707 = vpack.c.bf16 %v4642, %v4641
      %v4708 = vpack.c.bf16 %v4644, %v4643
      %v4709 = vpack.c.bf16 %v4646, %v4645
      %v4710 = vpack.c.bf16 %v4648, %v4647
      %v4711 = vpack.c.bf16 %v4650, %v4649
      %v4712 = vpack.c.bf16 %v4652, %v4651
      %v4713 = vpack.c.bf16 %v4654, %v4653
      %v4714 = vpack.c.bf16 %v4656, %v4655
      %v4715 = vpack.c.bf16 %v4658, %v4657
      %v4716 = vpack.c.bf16 %v4660, %v4659
      %v4717 = vpack.c.bf16 %v4662, %v4661
      %v4718 = vpack.c.bf16 %v4664, %v4663
      %v4719 = vpack.c.bf16 %v4666, %v4665
      %v4720 = vpack.c.bf16 %v4668, %v4667
      %v4721 = vpack.c.bf16 %v4670, %v4669
      %v4722 = vpack.c.bf16 %v4672, %v4671
      %v4723 = vpack.c.bf16 %v4674, %v4673
      %v4724 = vpack.c.bf16 %v4676, %v4675
      %v4773 = vunpack.c.l.b16 %v4677
      %v4774 = vunpack.c.h.b16 %v4677
      %v4775 = vunpack.c.l.b16 %v4678
      %v4776 = vunpack.c.h.b16 %v4678
      %v4777 = vunpack.c.l.b16 %v4679
      %v4778 = vunpack.c.h.b16 %v4679
      %v4779 = vunpack.c.l.b16 %v4680
      %v4780 = vunpack.c.h.b16 %v4680
      %v4781 = vunpack.c.l.b16 %v4681
      %v4782 = vunpack.c.h.b16 %v4681
      %v4783 = vunpack.c.l.b16 %v4682
      %v4784 = vunpack.c.h.b16 %v4682
      %v4785 = vunpack.c.l.b16 %v4683
      %v4786 = vunpack.c.h.b16 %v4683
      %v4787 = vunpack.c.l.b16 %v4684
      %v4788 = vunpack.c.h.b16 %v4684
      %v4789 = vunpack.c.l.b16 %v4685
      %v4790 = vunpack.c.h.b16 %v4685
      %v4791 = vunpack.c.l.b16 %v4686
      %v4792 = vunpack.c.h.b16 %v4686
      %v4793 = vunpack.c.l.b16 %v4687
      %v4794 = vunpack.c.h.b16 %v4687
      %v4795 = vunpack.c.l.b16 %v4688
      %v4796 = vunpack.c.h.b16 %v4688
      %v4797 = vunpack.c.l.b16 %v4689
      %v4798 = vunpack.c.h.b16 %v4689
      %v4799 = vunpack.c.l.b16 %v4690
      %v4800 = vunpack.c.h.b16 %v4690
      %v4801 = vunpack.c.l.b16 %v4691
      %v4802 = vunpack.c.h.b16 %v4691
      %v4803 = vunpack.c.l.b16 %v4692
      %v4804 = vunpack.c.h.b16 %v4692
      %v4805 = vunpack.c.l.b16 %v4693
      %v4806 = vunpack.c.h.b16 %v4693
      %v4807 = vunpack.c.l.b16 %v4694
      %v4808 = vunpack.c.h.b16 %v4694
      %v4809 = vunpack.c.l.b16 %v4695
      %v4810 = vunpack.c.h.b16 %v4695
      %v4811 = vunpack.c.l.b16 %v4696
      %v4812 = vunpack.c.h.b16 %v4696
      %v4813 = vunpack.c.l.b16 %v4697
      %v4814 = vunpack.c.h.b16 %v4697
      %v4815 = vunpack.c.l.b16 %v4698
      %v4816 = vunpack.c.h.b16 %v4698
      %v4817 = vunpack.c.l.b16 %v4699
      %v4818 = vunpack.c.h.b16 %v4699
      %v4819 = vunpack.c.l.b16 %v4700
      %v4820 = vunpack.c.h.b16 %v4700
      %v4821 = vunpack.c.l.b16 %v4701
      %v4822 = vunpack.c.h.b16 %v4701
      %v4823 = vunpack.c.l.b16 %v4702
      %v4824 = vunpack.c.h.b16 %v4702
      %v4825 = vunpack.c.l.b16 %v4703
      %v4826 = vunpack.c.h.b16 %v4703
      %v4827 = vunpack.c.l.b16 %v4704
      %v4828 = vunpack.c.h.b16 %v4704
      %v4829 = vunpack.c.l.b16 %v4705
      %v4830 = vunpack.c.h.b16 %v4705
      %v4831 = vunpack.c.l.b16 %v4706
      %v4832 = vunpack.c.h.b16 %v4706
      %v4833 = vunpack.c.l.b16 %v4707
      %v4834 = vunpack.c.h.b16 %v4707
      %v4835 = vunpack.c.l.b16 %v4708
      %v4836 = vunpack.c.h.b16 %v4708
      %v4837 = vunpack.c.l.b16 %v4709
      %v4838 = vunpack.c.h.b16 %v4709
      %v4839 = vunpack.c.l.b16 %v4710
      %v4840 = vunpack.c.h.b16 %v4710
      %v4841 = vunpack.c.l.b16 %v4711
      %v4842 = vunpack.c.h.b16 %v4711
      %v4843 = vunpack.c.l.b16 %v4712
      %v4844 = vunpack.c.h.b16 %v4712
      %v4845 = vunpack.c.l.b16 %v4713
      %v4846 = vunpack.c.h.b16 %v4713
      %v4847 = vunpack.c.l.b16 %v4714
      %v4848 = vunpack.c.h.b16 %v4714
      %v4849 = vunpack.c.l.b16 %v4715
      %v4850 = vunpack.c.h.b16 %v4715
      %v4851 = vunpack.c.l.b16 %v4716
      %v4852 = vunpack.c.h.b16 %v4716
      %v4853 = vunpack.c.l.b16 %v4717
      %v4854 = vunpack.c.h.b16 %v4717
      %v4855 = vunpack.c.l.b16 %v4718
      %v4856 = vunpack.c.h.b16 %v4718
      %v4857 = vunpack.c.l.b16 %v4719
      %v4858 = vunpack.c.h.b16 %v4719
      %v4859 = vunpack.c.l.b16 %v4720
      %v4860 = vunpack.c.h.b16 %v4720
      %v4861 = vunpack.c.l.b16 %v4721
      %v4862 = vunpack.c.h.b16 %v4721
      %v4863 = vunpack.c.l.b16 %v4722
      %v4864 = vunpack.c.h.b16 %v4722
      %v4865 = vunpack.c.l.b16 %v4723
      %v4866 = vunpack.c.h.b16 %v4723
      %v4867 = vunpack.c.l.b16 %v4724
      %v4868 = vunpack.c.h.b16 %v4724
      %v4869 = vpack.c.b16 %v4773, %v4773
      %v4870 = vpack.c.b16 %v4774, %v4774
      %v4871 = vpack.c.b16 %v4775, %v4775
      %v4872 = vpack.c.b16 %v4776, %v4776
      %v4873 = vpack.c.b16 %v4777, %v4777
      %v4874 = vpack.c.b16 %v4778, %v4778
      %v4875 = vpack.c.b16 %v4779, %v4779
      %v4876 = vpack.c.b16 %v4780, %v4780
      %v4877 = vpack.c.b16 %v4781, %v4781
      %v4878 = vpack.c.b16 %v4782, %v4782
      %v4879 = vpack.c.b16 %v4783, %v4783
      %v4880 = vpack.c.b16 %v4784, %v4784
      %v4881 = vpack.c.b16 %v4785, %v4785
      %v4882 = vpack.c.b16 %v4786, %v4786
      %v4883 = vpack.c.b16 %v4787, %v4787
      %v4884 = vpack.c.b16 %v4788, %v4788
      %v4885 = vpack.c.b16 %v4789, %v4789
      %v4886 = vpack.c.b16 %v4790, %v4790
      %v4887 = vpack.c.b16 %v4791, %v4791
      %v4888 = vpack.c.b16 %v4792, %v4792
      %v4889 = vpack.c.b16 %v4793, %v4793
      %v4890 = vpack.c.b16 %v4794, %v4794
      %v4891 = vpack.c.b16 %v4795, %v4795
      %v4892 = vpack.c.b16 %v4796, %v4796
      %v4893 = vpack.c.b16 %v4797, %v4797
      %v4894 = vpack.c.b16 %v4798, %v4798
      %v4895 = vpack.c.b16 %v4799, %v4799
      %v4896 = vpack.c.b16 %v4800, %v4800
      %v4897 = vpack.c.b16 %v4801, %v4801
      %v4898 = vpack.c.b16 %v4802, %v4802
      %v4899 = vpack.c.b16 %v4803, %v4803
      %v4900 = vpack.c.b16 %v4804, %v4804
      %v4901 = vpack.c.b16 %v4805, %v4805
      %v4902 = vpack.c.b16 %v4806, %v4806
      %v4903 = vpack.c.b16 %v4807, %v4807
      %v4904 = vpack.c.b16 %v4808, %v4808
      %v4905 = vpack.c.b16 %v4809, %v4809
      %v4906 = vpack.c.b16 %v4810, %v4810
      %v4907 = vpack.c.b16 %v4811, %v4811
      %v4908 = vpack.c.b16 %v4812, %v4812
      %v4909 = vpack.c.b16 %v4813, %v4813
      %v4910 = vpack.c.b16 %v4814, %v4814
      %v4911 = vpack.c.b16 %v4815, %v4815
      %v4912 = vpack.c.b16 %v4816, %v4816
      %v4913 = vpack.c.b16 %v4817, %v4817
      %v4914 = vpack.c.b16 %v4818, %v4818
      %v4915 = vpack.c.b16 %v4819, %v4819
      %v4916 = vpack.c.b16 %v4820, %v4820
      %v4917 = vpack.c.b16 %v4821, %v4821
      %v4918 = vpack.c.b16 %v4822, %v4822
      %v4919 = vpack.c.b16 %v4823, %v4823
      %v4920 = vpack.c.b16 %v4824, %v4824
      %v4921 = vpack.c.b16 %v4825, %v4825
      %v4922 = vpack.c.b16 %v4826, %v4826
      %v4923 = vpack.c.b16 %v4827, %v4827
      %v4924 = vpack.c.b16 %v4828, %v4828
      %v4925 = vpack.c.b16 %v4829, %v4829
      %v4926 = vpack.c.b16 %v4830, %v4830
      %v4927 = vpack.c.b16 %v4831, %v4831
      %v4928 = vpack.c.b16 %v4832, %v4832
      %v4929 = vpack.c.b16 %v4833, %v4833
      %v4930 = vpack.c.b16 %v4834, %v4834
      %v4931 = vpack.c.b16 %v4835, %v4835
      %v4932 = vpack.c.b16 %v4836, %v4836
      %v4933 = vpack.c.b16 %v4837, %v4837
      %v4934 = vpack.c.b16 %v4838, %v4838
      %v4935 = vpack.c.b16 %v4839, %v4839
      %v4936 = vpack.c.b16 %v4840, %v4840
      %v4937 = vpack.c.b16 %v4841, %v4841
      %v4938 = vpack.c.b16 %v4842, %v4842
      %v4939 = vpack.c.b16 %v4843, %v4843
      %v4940 = vpack.c.b16 %v4844, %v4844
      %v4941 = vpack.c.b16 %v4845, %v4845
      %v4942 = vpack.c.b16 %v4846, %v4846
      %v4943 = vpack.c.b16 %v4847, %v4847
      %v4944 = vpack.c.b16 %v4848, %v4848
      %v4945 = vpack.c.b16 %v4849, %v4849
      %v4946 = vpack.c.b16 %v4850, %v4850
      %v4947 = vpack.c.b16 %v4851, %v4851
      %v4948 = vpack.c.b16 %v4852, %v4852
      %v4949 = vpack.c.b16 %v4853, %v4853
      %v4950 = vpack.c.b16 %v4854, %v4854
      %v4951 = vpack.c.b16 %v4855, %v4855
      %v4952 = vpack.c.b16 %v4856, %v4856
      %v4953 = vpack.c.b16 %v4857, %v4857
      %v4954 = vpack.c.b16 %v4858, %v4858
      %v4955 = vpack.c.b16 %v4859, %v4859
      %v4956 = vpack.c.b16 %v4860, %v4860
      %v4957 = vpack.c.b16 %v4861, %v4861
      %v4958 = vpack.c.b16 %v4862, %v4862
      %v4959 = vpack.c.b16 %v4863, %v4863
      %v4960 = vpack.c.b16 %v4864, %v4864
      %v4961 = vpack.c.b16 %v4865, %v4865
      %v4962 = vpack.c.b16 %v4866, %v4866
      %v4963 = vpack.c.b16 %v4867, %v4867
      %v4964 = vpack.c.b16 %v4868, %v4868
      %5061 = vst [vmem:[#allocation9] sm:$0xf] %v4869
      %5062 = vst [vmem:[#allocation9 + $0x4] sm:$0xf] %v4870
      %5063 = vst [vmem:[#allocation9 + $0x8] sm:$0xf] %v4871
      %5064 = vst [vmem:[#allocation9 + $0xc] sm:$0xf] %v4872
      %5065 = vst [vmem:[#allocation9 + $0x10] sm:$0xf] %v4873
      %5066 = vst [vmem:[#allocation9 + $0x14] sm:$0xf] %v4874
      %5067 = vst [vmem:[#allocation9 + $0x18] sm:$0xf] %v4875
      %5068 = vst [vmem:[#allocation9 + $0x1c] sm:$0xf] %v4876
      %5069 = vst [vmem:[#allocation9 + $0x20] sm:$0xf] %v4877
      %5070 = vst [vmem:[#allocation9 + $0x24] sm:$0xf] %v4878
      %5071 = vst [vmem:[#allocation9 + $0x28] sm:$0xf] %v4879
      %5072 = vst [vmem:[#allocation9 + $0x2c] sm:$0xf] %v4880
      %5073 = vst [vmem:[#allocation9 + $0x30] sm:$0xf] %v4881
      %5074 = vst [vmem:[#allocation9 + $0x34] sm:$0xf] %v4882
      %5075 = vst [vmem:[#allocation9 + $0x38] sm:$0xf] %v4883
      %5076 = vst [vmem:[#allocation9 + $0x3c] sm:$0xf] %v4884
      %5077 = vst [vmem:[#allocation9 + $0x40] sm:$0xf] %v4885
      %5078 = vst [vmem:[#allocation9 + $0x44] sm:$0xf] %v4886
      %5079 = vst [vmem:[#allocation9 + $0x48] sm:$0xf] %v4887
      %5080 = vst [vmem:[#allocation9 + $0x4c] sm:$0xf] %v4888
      %5081 = vst [vmem:[#allocation9 + $0x50] sm:$0xf] %v4889
      %5082 = vst [vmem:[#allocation9 + $0x54] sm:$0xf] %v4890
      %5083 = vst [vmem:[#allocation9 + $0x58] sm:$0xf] %v4891
      %5084 = vst [vmem:[#allocation9 + $0x5c] sm:$0xf] %v4892
      %5085 = vst [vmem:[#allocation9 + $0x60] sm:$0xf] %v4893
      %5086 = vst [vmem:[#allocation9 + $0x64] sm:$0xf] %v4894
      %5087 = vst [vmem:[#allocation9 + $0x68] sm:$0xf] %v4895
      %5088 = vst [vmem:[#allocation9 + $0x6c] sm:$0xf] %v4896
      %5089 = vst [vmem:[#allocation9 + $0x70] sm:$0xf] %v4897
      %5090 = vst [vmem:[#allocation9 + $0x74] sm:$0xf] %v4898
      %5091 = vst [vmem:[#allocation9 + $0x78] sm:$0xf] %v4899
      %5092 = vst [vmem:[#allocation9 + $0x7c] sm:$0xf] %v4900
      %5093 = vst [vmem:[#allocation9 + $0x80] sm:$0xf] %v4901
      %5094 = vst [vmem:[#allocation9 + $0x84] sm:$0xf] %v4902
      %5095 = vst [vmem:[#allocation9 + $0x88] sm:$0xf] %v4903
      %5096 = vst [vmem:[#allocation9 + $0x8c] sm:$0xf] %v4904
      %5097 = vst [vmem:[#allocation9 + $0x90] sm:$0xf] %v4905
      %5098 = vst [vmem:[#allocation9 + $0x94] sm:$0xf] %v4906
      %5099 = vst [vmem:[#allocation9 + $0x98] sm:$0xf] %v4907
      %5100 = vst [vmem:[#allocation9 + $0x9c] sm:$0xf] %v4908
      %5101 = vst [vmem:[#allocation9 + $0xa0] sm:$0xf] %v4909
      %5102 = vst [vmem:[#allocation9 + $0xa4] sm:$0xf] %v4910
      %5103 = vst [vmem:[#allocation9 + $0xa8] sm:$0xf] %v4911
      %5104 = vst [vmem:[#allocation9 + $0xac] sm:$0xf] %v4912
      %5105 = vst [vmem:[#allocation9 + $0xb0] sm:$0xf] %v4913
      %5106 = vst [vmem:[#allocation9 + $0xb4] sm:$0xf] %v4914
      %5107 = vst [vmem:[#allocation9 + $0xb8] sm:$0xf] %v4915
      %5108 = vst [vmem:[#allocation9 + $0xbc] sm:$0xf] %v4916
      %5109 = vst [vmem:[#allocation9 + $0xc0] sm:$0xf] %v4917
      %5110 = vst [vmem:[#allocation9 + $0xc4] sm:$0xf] %v4918
      %5111 = vst [vmem:[#allocation9 + $0xc8] sm:$0xf] %v4919
      %5112 = vst [vmem:[#allocation9 + $0xcc] sm:$0xf] %v4920
      %5113 = vst [vmem:[#allocation9 + $0xd0] sm:$0xf] %v4921
      %5114 = vst [vmem:[#allocation9 + $0xd4] sm:$0xf] %v4922
      %5115 = vst [vmem:[#allocation9 + $0xd8] sm:$0xf] %v4923
      %5116 = vst [vmem:[#allocation9 + $0xdc] sm:$0xf] %v4924
      %5117 = vst [vmem:[#allocation9 + $0xe0] sm:$0xf] %v4925
      %5118 = vst [vmem:[#allocation9 + $0xe4] sm:$0xf] %v4926
      %5119 = vst [vmem:[#allocation9 + $0xe8] sm:$0xf] %v4927
      %5120 = vst [vmem:[#allocation9 + $0xec] sm:$0xf] %v4928
      %5121 = vst [vmem:[#allocation9 + $0xf0] sm:$0xf] %v4929
      %5122 = vst [vmem:[#allocation9 + $0xf4] sm:$0xf] %v4930
      %5123 = vst [vmem:[#allocation9 + $0xf8] sm:$0xf] %v4931
      %5124 = vst [vmem:[#allocation9 + $0xfc] sm:$0xf] %v4932
      %5125 = vst [vmem:[#allocation9 + $0x100] sm:$0xf] %v4933
      %5126 = vst [vmem:[#allocation9 + $0x104] sm:$0xf] %v4934
      %5127 = vst [vmem:[#allocation9 + $0x108] sm:$0xf] %v4935
      %5128 = vst [vmem:[#allocation9 + $0x10c] sm:$0xf] %v4936
      %5129 = vst [vmem:[#allocation9 + $0x110] sm:$0xf] %v4937
      %5130 = vst [vmem:[#allocation9 + $0x114] sm:$0xf] %v4938
      %5131 = vst [vmem:[#allocation9 + $0x118] sm:$0xf] %v4939
      %5132 = vst [vmem:[#allocation9 + $0x11c] sm:$0xf] %v4940
      %5133 = vst [vmem:[#allocation9 + $0x120] sm:$0xf] %v4941
      %5134 = vst [vmem:[#allocation9 + $0x124] sm:$0xf] %v4942
      %5135 = vst [vmem:[#allocation9 + $0x128] sm:$0xf] %v4943
      %5136 = vst [vmem:[#allocation9 + $0x12c] sm:$0xf] %v4944
      %5137 = vst [vmem:[#allocation9 + $0x130] sm:$0xf] %v4945
      %5138 = vst [vmem:[#allocation9 + $0x134] sm:$0xf] %v4946
      %5139 = vst [vmem:[#allocation9 + $0x138] sm:$0xf] %v4947
      %5140 = vst [vmem:[#allocation9 + $0x13c] sm:$0xf] %v4948
      %5141 = vst [vmem:[#allocation9 + $0x140] sm:$0xf] %v4949
      %5142 = vst [vmem:[#allocation9 + $0x144] sm:$0xf] %v4950
      %5143 = vst [vmem:[#allocation9 + $0x148] sm:$0xf] %v4951
      %5144 = vst [vmem:[#allocation9 + $0x14c] sm:$0xf] %v4952
      %5145 = vst [vmem:[#allocation9 + $0x150] sm:$0xf] %v4953
      %5146 = vst [vmem:[#allocation9 + $0x154] sm:$0xf] %v4954
      %5147 = vst [vmem:[#allocation9 + $0x158] sm:$0xf] %v4955
      %5148 = vst [vmem:[#allocation9 + $0x15c] sm:$0xf] %v4956
      %5149 = vst [vmem:[#allocation9 + $0x160] sm:$0xf] %v4957
      %5150 = vst [vmem:[#allocation9 + $0x164] sm:$0xf] %v4958
      %5151 = vst [vmem:[#allocation9 + $0x168] sm:$0xf] %v4959
      %5152 = vst [vmem:[#allocation9 + $0x16c] sm:$0xf] %v4960
      %5153 = vst [vmem:[#allocation9 + $0x170] sm:$0xf] %v4961
      %5154 = vst [vmem:[#allocation9 + $0x174] sm:$0xf] %v4962
      %5155 = vst [vmem:[#allocation9 + $0x178] sm:$0xf] %v4963
      %5156 = vst [vmem:[#allocation9 + $0x17c] sm:$0xf] %v4964
    $region37: #{tpu_custom_call.1} parent=1 // pred_fallthru
      _
    // Predicated region
    $region38: #{tpu_custom_call.1} parent=1 // pred_check
      _
    $region39: #{tpu_custom_call.1} parent=1 // pred_check_branch
      %5158 = sbr.rel (0) target = $region41
    $region40: #{tpu_custom_call.1} parent=1 // pred_region
      %s5160 = ssub.s32 6144, 6144
      %5161 = vsyncadd [#allocation5], %s5160
      %s5162 = sshll.u32 [#allocation9], 4
      %s5163 = int_to_ptr.vmem [resolvable:$true] %s5162
      %5168 = dma.vmem_to_hbm [thread:$0]  %s5163, 6144, %s4, [#allocation5], 64, 64, 4
    $region41: #{tpu_custom_call.1} parent=1 // pred_fallthru
      _
    // Predicated region
    $region42: #{tpu_custom_call.1} parent=1 // pred_check
      _
    $region43: #{tpu_custom_call.1} parent=1 // pred_check_branch
      %5170 = sbr.rel (0) target = $region45
    $region44: #{tpu_custom_call.1} parent=1 // pred_region
      %5171 = dma.done [#allocation5], 6144
    $region45: #{tpu_custom_call.1} parent=1 // pred_fallthru
      _
    %5172 = vsyncpa [#allocation4], 1
    %5173 = vsyncpa [#allocation7], 1
    %5174 = vsyncpa [#allocation5], 1

</llo_original>
